<compile_context>
chip_gen: v5e
topology: v5e:2x2
jax: 0.10.0
libtpu: 0.0.40
codegen_flags: <defaults>
</compile_context>

<pallas_src>
import functools

import numpy as np
import jax
import jax.numpy as jnp
from jax.experimental import pallas as pl
from jax.experimental.pallas import tpu as pltpu


# ---------------------------------------------------------------------------
# Single fused kernel: encoder_hist MLP -> quantile over set -> encoder_combined
#                      MLP -> tanh * margin
# ---------------------------------------------------------------------------
def _fused_new_forward_kernel(x_ref, w1_ref, b1_ref, w2_ref, b2_ref,
                              w3_ref, b3_ref, w4_ref, b4_ref, o_ref,
                              *, batch, set_size, lo_idx, hi_idx, frac, margin):
    # ---- encoder_hist: 2-layer MLP over all B*N set elements --------------
    # x: (B*N, Dp) bf16, w1: (Dp, nh) bf16 -> f32 accumulation on the MXU.
    h = jnp.dot(x_ref[...], w1_ref[...], preferred_element_type=jnp.float32)
    h = jnp.maximum(h + b1_ref[...], 0.0)
    h = jnp.dot(h, w2_ref[...], preferred_element_type=jnp.float32) + b2_ref[...]
    # h: (B*N, nh) f32 -- stays on-chip, never written to HBM.

    # ---- torch.quantile over the set dimension, per batch element ---------
    # Odd-even transposition sort network: per-feature sort across the N set
    # elements using only elementwise min/max on (1, nh) rows (VPU), then
    # linear interpolation at static quantile positions (lo/hi/frac baked in).
    # TODO(synk): for large B, vectorize the sort network across the batch dim.
    hq_rows = []
    for b in range(batch):
        base = b * set_size
        rows = [h[base + i:base + i + 1, :] for i in range(set_size)]   # (1, nh) each
        for r in range(set_size):
            for i in range(r % 2, set_size - 1, 2):
                lo_v = jnp.minimum(rows[i], rows[i + 1])
                hi_v = jnp.maximum(rows[i], rows[i + 1])
                rows[i], rows[i + 1] = lo_v, hi_v
        qrows = []
        for lo, hi, fr in zip(lo_idx, hi_idx, frac):
            if fr == 0.0:
                qrows.append(rows[lo])
            else:
                qrows.append(rows[lo] * (1.0 - fr) + rows[hi] * fr)
        hq_rows.append(jnp.concatenate(qrows, axis=1))                   # (1, Q*nh)
    hq = jnp.concatenate(hq_rows, axis=0)                                # (B, Q*nh)

    # ---- encoder_combined + tanh * margin ----------------------------------
    g = jnp.dot(hq, w3_ref[...], preferred_element_type=jnp.float32)
    g = jnp.maximum(g + b3_ref[...], 0.0)
    g = jnp.dot(g, w4_ref[...], preferred_element_type=jnp.float32) + b4_ref[...]
    o_ref[...] = (jnp.tanh(g) * jnp.float32(margin)).astype(o_ref.dtype)


# ---------------------------------------------------------------------------
# Wrapper: pad/cast the heavy input once, then one pallas_call for everything.
# ---------------------------------------------------------------------------
def new_forward(fvs, params, q_vals, margin):
    B, N, D = fvs.shape
    Dp = params["w1"].shape[0]              # w1 is stored pre-padded (Dp x nh), bf16

    # Pad D to the 128-aligned Dp (zero fill -> matmul result unchanged) and cast
    # to bf16: x + w1 are ~all the HBM bytes, bf16 halves the traffic; f32 accum.
    x = fvs.reshape(B * N, D).astype(jnp.float32)
    x = jnp.pad(x, ((0, 0), (0, Dp - D))).astype(jnp.bfloat16)

    # Static quantile interpolation indices (same rule as torch.quantile 'linear').
    pos = np.asarray(q_vals, dtype=np.float64) * (N - 1)
    lo = np.floor(pos).astype(np.int64)
    hi = np.ceil(pos).astype(np.int64)
    fr = pos - lo

    kern = functools.partial(
        _fused_new_forward_kernel,
        batch=int(B), set_size=int(N),
        lo_idx=tuple(int(v) for v in lo),
        hi_idx=tuple(int(v) for v in hi),
        frac=tuple(float(v) for v in fr),
        margin=float(margin),
    )

    vmem = pl.BlockSpec(memory_space=pltpu.MemorySpace.VMEM)
    return pl.pallas_call(
        kern,
        out_shape=jax.ShapeDtypeStruct((B, 2), jnp.float32),
        in_specs=[vmem] * 9,
        out_specs=vmem,
    )(x, params["w1"], params["b1"], params["w2"], params["b2"],
      params["w3"], params["b3"], params["w4"], params["b4"])


# ---------------------------------------------------------------------------
# Parameter init (w1 stored padded to a multiple of 128 and cast to bf16)
# ---------------------------------------------------------------------------
def init_params(key, d_in, nh, nh3, q_len):
    ks = jax.random.split(key, 8)

    def lin(kw, kb, fan_in, fan_out):
        s = 1.0 / np.sqrt(fan_in)
        w = jax.random.normal(kw, (fan_in, fan_out), dtype=jnp.float32) * s
        b = jax.random.normal(kb, (1, fan_out), dtype=jnp.float32) * s
        return w, b

    w1, b1 = lin(ks[0], ks[1], d_in, nh)           # encoder_hist layer 0
    w2, b2 = lin(ks[2], ks[3], nh, nh)             # encoder_hist layer 1
    w3, b3 = lin(ks[4], ks[5], q_len * nh, nh3)    # encoder_combined layer 0
    w4, b4 = lin(ks[6], ks[7], nh3, 2)             # encoder_combined layer 1

    d_pad = ((d_in + 127) // 128) * 128            # 8372 -> 8448
    w1 = jnp.pad(w1, ((0, d_pad - d_in), (0, 0))).astype(jnp.bfloat16)
    return dict(w1=w1, b1=b1, w2=w2, b2=b2, w3=w3, b3=b3, w4=w4, b4=b4)


# ---------------------------------------------------------------------------
# Pure-JAX reference (same bf16 first-matmul inputs) for a correctness check
# ---------------------------------------------------------------------------
def new_forward_ref(fvs, params, q_vals, margin):
    B, N, D = fvs.shape
    Dp = params["w1"].shape[0]
    x = fvs.reshape(B * N, D).astype(jnp.float32)
    x = jnp.pad(x, ((0, 0), (0, Dp - D))).astype(jnp.bfloat16)
    h = jnp.dot(x, params["w1"], preferred_element_type=jnp.float32) + params["b1"]
    h = jax.nn.relu(h)
    h = jnp.dot(h, params["w2"]) + params["b2"]
    h = h.reshape(B, N, -1)
    q = jnp.asarray(np.asarray(q_vals), dtype=jnp.float32)
    hq = jnp.quantile(jnp.transpose(h, (1, 0, 2)), q, axis=0)   # (Q, B, nh)
    hq = jnp.transpose(hq, (1, 0, 2)).reshape(B, -1)
    g = jax.nn.relu(jnp.dot(hq, params["w3"]) + params["b3"])
    g = jnp.dot(g, params["w4"]) + params["b4"]
    return jnp.tanh(g) * margin


if __name__ == "__main__":
    # Module hyper-params (small but consistent with __init__):
    #   nlayers = nlayers2 = 2, nh = nh3 = 32, nh2 = 32 -> q = int(sqrt(16)) = 4
    #   self.q = arange(0, 1+1e-8, 1/4) = [0, .25, .5, .75, 1.] (len 5), margin = 8
    nh, nh2, nh3 = 32, 32, 32
    margin = 8.0
    qbase = int((nh2 // 2) ** 0.5)
    q_vals = np.arange(0.0, 1.0 + 1e-8, 1.0 / qbase)   # 5 quantile points (as in torch)

    B, N, D = 2, 8, 8372   # batch of 2, sets of 8 feature vectors of dim 8372

    key = jax.random.PRNGKey(0)
    k_data, k_param = jax.random.split(key)
    fvs = jax.random.normal(k_data, (B, N, D), dtype=jnp.float32)
    params = init_params(k_param, D, nh, nh3, len(q_vals))

    fwd = jax.jit(lambda f, p: new_forward(f, p, q_vals, margin))
    out = jax.block_until_ready(fwd(fvs, params))

    assert out.shape == (B, 2), out.shape
    assert bool(jnp.all(jnp.isfinite(out)))
    assert bool(jnp.all(jnp.abs(out) <= margin + 1e-5))

    ref = jax.block_until_ready(new_forward_ref(fvs, params, q_vals, margin))
    np.testing.assert_allclose(np.asarray(out), np.asarray(ref), rtol=2e-2, atol=2e-2)

    print("KERNEL_OK")
</pallas_src>

<mosaic_0001>
module attributes {stable_mosaic.version = 11 : i64} {
  func.func @_fused_new_forward_kernel(%arg0: memref<16x8448xbf16, #tpu.memory_space<vmem>>, %arg1: memref<8448x32xbf16, #tpu.memory_space<vmem>>, %arg2: memref<1x32xf32, #tpu.memory_space<vmem>>, %arg3: memref<32x32xf32, #tpu.memory_space<vmem>>, %arg4: memref<1x32xf32, #tpu.memory_space<vmem>>, %arg5: memref<160x32xf32, #tpu.memory_space<vmem>>, %arg6: memref<1x32xf32, #tpu.memory_space<vmem>>, %arg7: memref<32x2xf32, #tpu.memory_space<vmem>>, %arg8: memref<1x2xf32, #tpu.memory_space<vmem>>, %arg9: memref<2x2xf32, #tpu.memory_space<vmem>>) attributes {dimension_semantics = [], scalar_prefetch = 0 : i64, scratch_operands = 0 : i64, tpu.core_type = #tpu.core_type<tc>} {
    %c0 = arith.constant 0 : index
    %c0_0 = arith.constant 0 : index
    %0 = vector.load %arg0[%c0, %c0_0] : memref<16x8448xbf16, #tpu.memory_space<vmem>>, vector<16x8448xbf16>
    %c0_1 = arith.constant 0 : index
    %c0_2 = arith.constant 0 : index
    %1 = vector.load %arg1[%c0_1, %c0_2] : memref<8448x32xbf16, #tpu.memory_space<vmem>>, vector<8448x32xbf16>
    %cst = arith.constant dense<0.000000e+00> : vector<16x32xf32>
    %2 = tpu.matmul %0, %1, %cst {dimension_numbers = #tpu.dot_dimension_numbers<[1], [0], [0], [1], [0, 0, 1, 1], [], []>} : vector<16x8448xbf16>, vector<8448x32xbf16>, vector<16x32xf32> -> vector<16x32xf32>
    %c0_3 = arith.constant 0 : index
    %c0_4 = arith.constant 0 : index
    %3 = vector.load %arg2[%c0_3, %c0_4] : memref<1x32xf32, #tpu.memory_space<vmem>>, vector<1x32xf32>
    %4 = vector.broadcast %3 : vector<1x32xf32> to vector<16x32xf32>
    %5 = arith.addf %2, %4 : vector<16x32xf32>
    %cst_5 = arith.constant 0.000000e+00 : f32
    %6 = vector.broadcast %cst_5 : f32 to vector<16x32xf32>
    %7 = arith.maximumf %5, %6 : vector<16x32xf32>
    %c0_6 = arith.constant 0 : index
    %c0_7 = arith.constant 0 : index
    %8 = vector.load %arg3[%c0_6, %c0_7] : memref<32x32xf32, #tpu.memory_space<vmem>>, vector<32x32xf32>
    %cst_8 = arith.constant dense<0.000000e+00> : vector<16x32xf32>
    %9 = tpu.matmul %7, %8, %cst_8 {dimension_numbers = #tpu.dot_dimension_numbers<[1], [0], [0], [1], [0, 0, 1, 1], [], []>} : vector<16x32xf32>, vector<32x32xf32>, vector<16x32xf32> -> vector<16x32xf32>
    %c0_9 = arith.constant 0 : index
    %c0_10 = arith.constant 0 : index
    %10 = vector.load %arg4[%c0_9, %c0_10] : memref<1x32xf32, #tpu.memory_space<vmem>>, vector<1x32xf32>
    %11 = vector.broadcast %10 : vector<1x32xf32> to vector<16x32xf32>
    %12 = arith.addf %9, %11 : vector<16x32xf32>
    %13 = vector.extract_strided_slice %12 {offsets = [0, 0], sizes = [1, 32], strides = [1, 1]} : vector<16x32xf32> to vector<1x32xf32>
    %14 = vector.extract_strided_slice %12 {offsets = [1, 0], sizes = [1, 32], strides = [1, 1]} : vector<16x32xf32> to vector<1x32xf32>
    %15 = vector.extract_strided_slice %12 {offsets = [2, 0], sizes = [1, 32], strides = [1, 1]} : vector<16x32xf32> to vector<1x32xf32>
    %16 = vector.extract_strided_slice %12 {offsets = [3, 0], sizes = [1, 32], strides = [1, 1]} : vector<16x32xf32> to vector<1x32xf32>
    %17 = vector.extract_strided_slice %12 {offsets = [4, 0], sizes = [1, 32], strides = [1, 1]} : vector<16x32xf32> to vector<1x32xf32>
    %18 = vector.extract_strided_slice %12 {offsets = [5, 0], sizes = [1, 32], strides = [1, 1]} : vector<16x32xf32> to vector<1x32xf32>
    %19 = vector.extract_strided_slice %12 {offsets = [6, 0], sizes = [1, 32], strides = [1, 1]} : vector<16x32xf32> to vector<1x32xf32>
    %20 = vector.extract_strided_slice %12 {offsets = [7, 0], sizes = [1, 32], strides = [1, 1]} : vector<16x32xf32> to vector<1x32xf32>
    %21 = arith.minimumf %13, %14 : vector<1x32xf32>
    %22 = arith.maximumf %13, %14 : vector<1x32xf32>
    %23 = arith.minimumf %15, %16 : vector<1x32xf32>
    %24 = arith.maximumf %15, %16 : vector<1x32xf32>
    %25 = arith.minimumf %17, %18 : vector<1x32xf32>
    %26 = arith.maximumf %17, %18 : vector<1x32xf32>
    %27 = arith.minimumf %19, %20 : vector<1x32xf32>
    %28 = arith.maximumf %19, %20 : vector<1x32xf32>
    %29 = arith.minimumf %22, %23 : vector<1x32xf32>
    %30 = arith.maximumf %22, %23 : vector<1x32xf32>
    %31 = arith.minimumf %24, %25 : vector<1x32xf32>
    %32 = arith.maximumf %24, %25 : vector<1x32xf32>
    %33 = arith.minimumf %26, %27 : vector<1x32xf32>
    %34 = arith.maximumf %26, %27 : vector<1x32xf32>
    %35 = arith.minimumf %21, %29 : vector<1x32xf32>
    %36 = arith.maximumf %21, %29 : vector<1x32xf32>
    %37 = arith.minimumf %30, %31 : vector<1x32xf32>
    %38 = arith.maximumf %30, %31 : vector<1x32xf32>
    %39 = arith.minimumf %32, %33 : vector<1x32xf32>
    %40 = arith.maximumf %32, %33 : vector<1x32xf32>
    %41 = arith.minimumf %34, %28 : vector<1x32xf32>
    %42 = arith.maximumf %34, %28 : vector<1x32xf32>
    %43 = arith.minimumf %36, %37 : vector<1x32xf32>
    %44 = arith.maximumf %36, %37 : vector<1x32xf32>
    %45 = arith.minimumf %38, %39 : vector<1x32xf32>
    %46 = arith.maximumf %38, %39 : vector<1x32xf32>
    %47 = arith.minimumf %40, %41 : vector<1x32xf32>
    %48 = arith.maximumf %40, %41 : vector<1x32xf32>
    %49 = arith.minimumf %35, %43 : vector<1x32xf32>
    %50 = arith.maximumf %35, %43 : vector<1x32xf32>
    %51 = arith.minimumf %44, %45 : vector<1x32xf32>
    %52 = arith.maximumf %44, %45 : vector<1x32xf32>
    %53 = arith.minimumf %46, %47 : vector<1x32xf32>
    %54 = arith.maximumf %46, %47 : vector<1x32xf32>
    %55 = arith.minimumf %48, %42 : vector<1x32xf32>
    %56 = arith.maximumf %48, %42 : vector<1x32xf32>
    %57 = arith.minimumf %50, %51 : vector<1x32xf32>
    %58 = arith.maximumf %50, %51 : vector<1x32xf32>
    %59 = arith.minimumf %52, %53 : vector<1x32xf32>
    %60 = arith.maximumf %52, %53 : vector<1x32xf32>
    %61 = arith.minimumf %54, %55 : vector<1x32xf32>
    %62 = arith.maximumf %54, %55 : vector<1x32xf32>
    %63 = arith.minimumf %49, %57 : vector<1x32xf32>
    %64 = arith.maximumf %49, %57 : vector<1x32xf32>
    %65 = arith.minimumf %58, %59 : vector<1x32xf32>
    %66 = arith.maximumf %58, %59 : vector<1x32xf32>
    %67 = arith.minimumf %60, %61 : vector<1x32xf32>
    %68 = arith.maximumf %60, %61 : vector<1x32xf32>
    %69 = arith.minimumf %62, %56 : vector<1x32xf32>
    %70 = arith.maximumf %62, %56 : vector<1x32xf32>
    %71 = arith.minimumf %64, %65 : vector<1x32xf32>
    %72 = arith.maximumf %64, %65 : vector<1x32xf32>
    %73 = arith.minimumf %66, %67 : vector<1x32xf32>
    %74 = arith.maximumf %66, %67 : vector<1x32xf32>
    %75 = arith.minimumf %68, %69 : vector<1x32xf32>
    %76 = arith.maximumf %68, %69 : vector<1x32xf32>
    %cst_11 = arith.constant 2.500000e-01 : f32
    %77 = vector.broadcast %cst_11 : f32 to vector<1x32xf32>
    %78 = arith.mulf %71, %77 : vector<1x32xf32>
    %cst_12 = arith.constant 7.500000e-01 : f32
    %79 = vector.broadcast %cst_12 : f32 to vector<1x32xf32>
    %80 = arith.mulf %72, %79 : vector<1x32xf32>
    %81 = arith.addf %78, %80 : vector<1x32xf32>
    %cst_13 = arith.constant 5.000000e-01 : f32
    %82 = vector.broadcast %cst_13 : f32 to vector<1x32xf32>
    %83 = arith.mulf %73, %82 : vector<1x32xf32>
    %cst_14 = arith.constant 5.000000e-01 : f32
    %84 = vector.broadcast %cst_14 : f32 to vector<1x32xf32>
    %85 = arith.mulf %74, %84 : vector<1x32xf32>
    %86 = arith.addf %83, %85 : vector<1x32xf32>
    %cst_15 = arith.constant 7.500000e-01 : f32
    %87 = vector.broadcast %cst_15 : f32 to vector<1x32xf32>
    %88 = arith.mulf %75, %87 : vector<1x32xf32>
    %cst_16 = arith.constant 2.500000e-01 : f32
    %89 = vector.broadcast %cst_16 : f32 to vector<1x32xf32>
    %90 = arith.mulf %76, %89 : vector<1x32xf32>
    %91 = arith.addf %88, %90 : vector<1x32xf32>
    %92 = tpu.concatenate %63, %81, %86, %91, %70 in 1 : vector<1x32xf32>, vector<1x32xf32>, vector<1x32xf32>, vector<1x32xf32>, vector<1x32xf32> -> vector<1x160xf32>
    %93 = vector.extract_strided_slice %12 {offsets = [8, 0], sizes = [1, 32], strides = [1, 1]} : vector<16x32xf32> to vector<1x32xf32>
    %94 = vector.extract_strided_slice %12 {offsets = [9, 0], sizes = [1, 32], strides = [1, 1]} : vector<16x32xf32> to vector<1x32xf32>
    %95 = vector.extract_strided_slice %12 {offsets = [10, 0], sizes = [1, 32], strides = [1, 1]} : vector<16x32xf32> to vector<1x32xf32>
    %96 = vector.extract_strided_slice %12 {offsets = [11, 0], sizes = [1, 32], strides = [1, 1]} : vector<16x32xf32> to vector<1x32xf32>
    %97 = vector.extract_strided_slice %12 {offsets = [12, 0], sizes = [1, 32], strides = [1, 1]} : vector<16x32xf32> to vector<1x32xf32>
    %98 = vector.extract_strided_slice %12 {offsets = [13, 0], sizes = [1, 32], strides = [1, 1]} : vector<16x32xf32> to vector<1x32xf32>
    %99 = vector.extract_strided_slice %12 {offsets = [14, 0], sizes = [1, 32], strides = [1, 1]} : vector<16x32xf32> to vector<1x32xf32>
    %100 = vector.extract_strided_slice %12 {offsets = [15, 0], sizes = [1, 32], strides = [1, 1]} : vector<16x32xf32> to vector<1x32xf32>
    %101 = arith.minimumf %93, %94 : vector<1x32xf32>
    %102 = arith.maximumf %93, %94 : vector<1x32xf32>
    %103 = arith.minimumf %95, %96 : vector<1x32xf32>
    %104 = arith.maximumf %95, %96 : vector<1x32xf32>
    %105 = arith.minimumf %97, %98 : vector<1x32xf32>
    %106 = arith.maximumf %97, %98 : vector<1x32xf32>
    %107 = arith.minimumf %99, %100 : vector<1x32xf32>
    %108 = arith.maximumf %99, %100 : vector<1x32xf32>
    %109 = arith.minimumf %102, %103 : vector<1x32xf32>
    %110 = arith.maximumf %102, %103 : vector<1x32xf32>
    %111 = arith.minimumf %104, %105 : vector<1x32xf32>
    %112 = arith.maximumf %104, %105 : vector<1x32xf32>
    %113 = arith.minimumf %106, %107 : vector<1x32xf32>
    %114 = arith.maximumf %106, %107 : vector<1x32xf32>
    %115 = arith.minimumf %101, %109 : vector<1x32xf32>
    %116 = arith.maximumf %101, %109 : vector<1x32xf32>
    %117 = arith.minimumf %110, %111 : vector<1x32xf32>
    %118 = arith.maximumf %110, %111 : vector<1x32xf32>
    %119 = arith.minimumf %112, %113 : vector<1x32xf32>
    %120 = arith.maximumf %112, %113 : vector<1x32xf32>
    %121 = arith.minimumf %114, %108 : vector<1x32xf32>
    %122 = arith.maximumf %114, %108 : vector<1x32xf32>
    %123 = arith.minimumf %116, %117 : vector<1x32xf32>
    %124 = arith.maximumf %116, %117 : vector<1x32xf32>
    %125 = arith.minimumf %118, %119 : vector<1x32xf32>
    %126 = arith.maximumf %118, %119 : vector<1x32xf32>
    %127 = arith.minimumf %120, %121 : vector<1x32xf32>
    %128 = arith.maximumf %120, %121 : vector<1x32xf32>
    %129 = arith.minimumf %115, %123 : vector<1x32xf32>
    %130 = arith.maximumf %115, %123 : vector<1x32xf32>
    %131 = arith.minimumf %124, %125 : vector<1x32xf32>
    %132 = arith.maximumf %124, %125 : vector<1x32xf32>
    %133 = arith.minimumf %126, %127 : vector<1x32xf32>
    %134 = arith.maximumf %126, %127 : vector<1x32xf32>
    %135 = arith.minimumf %128, %122 : vector<1x32xf32>
    %136 = arith.maximumf %128, %122 : vector<1x32xf32>
    %137 = arith.minimumf %130, %131 : vector<1x32xf32>
    %138 = arith.maximumf %130, %131 : vector<1x32xf32>
    %139 = arith.minimumf %132, %133 : vector<1x32xf32>
    %140 = arith.maximumf %132, %133 : vector<1x32xf32>
    %141 = arith.minimumf %134, %135 : vector<1x32xf32>
    %142 = arith.maximumf %134, %135 : vector<1x32xf32>
    %143 = arith.minimumf %129, %137 : vector<1x32xf32>
    %144 = arith.maximumf %129, %137 : vector<1x32xf32>
    %145 = arith.minimumf %138, %139 : vector<1x32xf32>
    %146 = arith.maximumf %138, %139 : vector<1x32xf32>
    %147 = arith.minimumf %140, %141 : vector<1x32xf32>
    %148 = arith.maximumf %140, %141 : vector<1x32xf32>
    %149 = arith.minimumf %142, %136 : vector<1x32xf32>
    %150 = arith.maximumf %142, %136 : vector<1x32xf32>
    %151 = arith.minimumf %144, %145 : vector<1x32xf32>
    %152 = arith.maximumf %144, %145 : vector<1x32xf32>
    %153 = arith.minimumf %146, %147 : vector<1x32xf32>
    %154 = arith.maximumf %146, %147 : vector<1x32xf32>
    %155 = arith.minimumf %148, %149 : vector<1x32xf32>
    %156 = arith.maximumf %148, %149 : vector<1x32xf32>
    %cst_17 = arith.constant 2.500000e-01 : f32
    %157 = vector.broadcast %cst_17 : f32 to vector<1x32xf32>
    %158 = arith.mulf %151, %157 : vector<1x32xf32>
    %cst_18 = arith.constant 7.500000e-01 : f32
    %159 = vector.broadcast %cst_18 : f32 to vector<1x32xf32>
    %160 = arith.mulf %152, %159 : vector<1x32xf32>
    %161 = arith.addf %158, %160 : vector<1x32xf32>
    %cst_19 = arith.constant 5.000000e-01 : f32
    %162 = vector.broadcast %cst_19 : f32 to vector<1x32xf32>
    %163 = arith.mulf %153, %162 : vector<1x32xf32>
    %cst_20 = arith.constant 5.000000e-01 : f32
    %164 = vector.broadcast %cst_20 : f32 to vector<1x32xf32>
    %165 = arith.mulf %154, %164 : vector<1x32xf32>
    %166 = arith.addf %163, %165 : vector<1x32xf32>
    %cst_21 = arith.constant 7.500000e-01 : f32
    %167 = vector.broadcast %cst_21 : f32 to vector<1x32xf32>
    %168 = arith.mulf %155, %167 : vector<1x32xf32>
    %cst_22 = arith.constant 2.500000e-01 : f32
    %169 = vector.broadcast %cst_22 : f32 to vector<1x32xf32>
    %170 = arith.mulf %156, %169 : vector<1x32xf32>
    %171 = arith.addf %168, %170 : vector<1x32xf32>
    %172 = tpu.concatenate %143, %161, %166, %171, %150 in 1 : vector<1x32xf32>, vector<1x32xf32>, vector<1x32xf32>, vector<1x32xf32>, vector<1x32xf32> -> vector<1x160xf32>
    %173 = tpu.concatenate %92, %172 in 0 : vector<1x160xf32>, vector<1x160xf32> -> vector<2x160xf32>
    %c0_23 = arith.constant 0 : index
    %c0_24 = arith.constant 0 : index
    %174 = vector.load %arg5[%c0_23, %c0_24] : memref<160x32xf32, #tpu.memory_space<vmem>>, vector<160x32xf32>
    %cst_25 = arith.constant dense<0.000000e+00> : vector<2x32xf32>
    %175 = tpu.matmul %173, %174, %cst_25 {dimension_numbers = #tpu.dot_dimension_numbers<[1], [0], [0], [1], [0, 0, 1, 1], [], []>} : vector<2x160xf32>, vector<160x32xf32>, vector<2x32xf32> -> vector<2x32xf32>
    %c0_26 = arith.constant 0 : index
    %c0_27 = arith.constant 0 : index
    %176 = vector.load %arg6[%c0_26, %c0_27] : memref<1x32xf32, #tpu.memory_space<vmem>>, vector<1x32xf32>
    %177 = vector.broadcast %176 : vector<1x32xf32> to vector<2x32xf32>
    %178 = arith.addf %175, %177 : vector<2x32xf32>
    %cst_28 = arith.constant 0.000000e+00 : f32
    %179 = vector.broadcast %cst_28 : f32 to vector<2x32xf32>
    %180 = arith.maximumf %178, %179 : vector<2x32xf32>
    %c0_29 = arith.constant 0 : index
    %c0_30 = arith.constant 0 : index
    %181 = vector.load %arg7[%c0_29, %c0_30] : memref<32x2xf32, #tpu.memory_space<vmem>>, vector<32x2xf32>
    %cst_31 = arith.constant dense<0.000000e+00> : vector<2x2xf32>
    %182 = tpu.matmul %180, %181, %cst_31 {dimension_numbers = #tpu.dot_dimension_numbers<[1], [0], [0], [1], [0, 0, 1, 1], [], []>} : vector<2x32xf32>, vector<32x2xf32>, vector<2x2xf32> -> vector<2x2xf32>
    %c0_32 = arith.constant 0 : index
    %c0_33 = arith.constant 0 : index
    %183 = vector.load %arg8[%c0_32, %c0_33] : memref<1x2xf32, #tpu.memory_space<vmem>>, vector<1x2xf32>
    %184 = vector.broadcast %183 : vector<1x2xf32> to vector<2x2xf32>
    %185 = arith.addf %182, %184 : vector<2x2xf32>
    %186 = math.tanh %185 : vector<2x2xf32>
    %cst_34 = arith.constant 8.000000e+00 : f32
    %187 = vector.broadcast %cst_34 : f32 to vector<2x2xf32>
    %188 = arith.mulf %186, %187 : vector<2x2xf32>
    %c0_35 = arith.constant 0 : index
    %c0_36 = arith.constant 0 : index
    %189 = vector.load %arg9[%c0_35, %c0_36] : memref<2x2xf32, #tpu.memory_space<vmem>>, vector<2x2xf32>
    tpu.vector_store %arg9[%c0_35, %c0_36], %188 {strides = array<i32>} : memref<2x2xf32, #tpu.memory_space<vmem>>, vector<2x2xf32>,
    return
  }
}

</mosaic_0001>

<llo_original>
// kernel: _lambda_.1
$region0: #{_lambda_.1}
  #allocation0 [shape = 'u32[]', space=smem, size = 0x4, offset = 0x4, fixed_abs, tag = 'smem constant byte address 0x4 - core index']
  #allocation1 [shape = 'u32[72,128]{1,0:T(1,128)}', space=vmem, size = 0x9000, scoped, tag = 'internal scratch']
  %s0 = inlined_call_operand.vmem [shape: bf16[16,8448], index: 0, kind: input, shape index: {}]
  %s1 = inlined_call_operand.vmem [shape: bf16[8448,32], index: 1, kind: input, shape index: {}]
  %s2 = inlined_call_operand.vmem [shape: f32[1,32], index: 2, kind: input, shape index: {}]
  %s3 = inlined_call_operand.vmem [shape: f32[32,32], index: 3, kind: input, shape index: {}]
  %s4 = inlined_call_operand.vmem [shape: f32[1,32], index: 4, kind: input, shape index: {}]
  %s5 = inlined_call_operand.vmem [shape: f32[160,32], index: 5, kind: input, shape index: {}]
  %s6 = inlined_call_operand.vmem [shape: f32[1,32], index: 6, kind: input, shape index: {}]
  %s7 = inlined_call_operand.vmem [shape: f32[32,2], index: 7, kind: input, shape index: {}]
  %s8 = inlined_call_operand.vmem [shape: f32[1,2], index: 8, kind: input, shape index: {}]
  %s9 = inlined_call_operand.hbm [shape: f32[2,2], index: 9, kind: output, shape index: {}]
  %s10 = sld [smem:[#allocation0]]
  $region46: #{_lambda_.1} parent=0
    _
  %s12 = ssub.s32 1, %s10
  %s13 = scalar_select 0, %s12, %s10
  $region1: #{_lambda_.1} parent=0
    #allocation2 [shape = 'u8[1024]{0}', space=vmem, size = 0x400, scoped, tag = 'output window, operand 0, single buffered']
    #allocation3 [shape = 's32[1]{0}', space=sflag, size = 0x4, scoped, tag = 'scoped memory for _lambda_.1']
    %14 = vsyncpa [#allocation3], 0
    // Predicated region
    $region2: #{_lambda_.1} parent=1 // pred_check
      _
    $region3: #{_lambda_.1} parent=1 // pred_check_branch
      %16 = sbr.rel (0) target = $region5
    $region4: #{_lambda_.1} parent=1 // pred_region
      _
    $region5: #{_lambda_.1} parent=1 // pred_fallthru
      _
    // Predicated region
    $region6: #{_lambda_.1} parent=1 // pred_check
      _
    $region7: #{_lambda_.1} parent=1 // pred_check_branch
      %18 = sbr.rel (0) target = $region9
    $region8: #{_lambda_.1} parent=1 // pred_region
      _
    $region9: #{_lambda_.1} parent=1 // pred_fallthru
      _
    // Predicated region
    $region10: #{_lambda_.1} parent=1 // pred_check
      _
    $region11: #{_lambda_.1} parent=1 // pred_check_branch
      %20 = sbr.rel (0) target = $region13
    $region12: #{_lambda_.1} parent=1 // pred_region
      _
    $region13: #{_lambda_.1} parent=1 // pred_fallthru
      _
    // Predicated region
    $region14: #{_lambda_.1} parent=1 // pred_check
      _
    $region15: #{_lambda_.1} parent=1 // pred_check_branch
      %22 = sbr.rel (0) target = $region17
    $region16: #{_lambda_.1} parent=1 // pred_region
      _
    $region17: #{_lambda_.1} parent=1 // pred_fallthru
      _
    // Predicated region
    $region18: #{_lambda_.1} parent=1 // pred_check
      _
    $region19: #{_lambda_.1} parent=1 // pred_check_branch
      %24 = sbr.rel (0) target = $region21
    $region20: #{_lambda_.1} parent=1 // pred_region
      _
    $region21: #{_lambda_.1} parent=1 // pred_fallthru
      _
    // Predicated region
    $region22: #{_lambda_.1} parent=1 // pred_check
      _
    $region23: #{_lambda_.1} parent=1 // pred_check_branch
      %26 = sbr.rel (0) target = $region25
    $region24: #{_lambda_.1} parent=1 // pred_region
      _
    $region25: #{_lambda_.1} parent=1 // pred_fallthru
      _
    // Predicated region
    $region26: #{_lambda_.1} parent=1 // pred_check
      _
    $region27: #{_lambda_.1} parent=1 // pred_check_branch
      %28 = sbr.rel (0) target = $region29
    $region28: #{_lambda_.1} parent=1 // pred_region
      _
    $region29: #{_lambda_.1} parent=1 // pred_fallthru
      _
    // Predicated region
    $region30: #{_lambda_.1} parent=1 // pred_check
      _
    $region31: #{_lambda_.1} parent=1 // pred_check_branch
      %30 = sbr.rel (0) target = $region33
    $region32: #{_lambda_.1} parent=1 // pred_region
      _
    $region33: #{_lambda_.1} parent=1 // pred_fallthru
      _
    // Predicated region
    $region34: #{_lambda_.1} parent=1 // pred_check
      _
    $region35: #{_lambda_.1} parent=1 // pred_check_branch
      %32 = sbr.rel (0) target = $region37
    $region36: #{_lambda_.1} parent=1 // pred_region
      _
    $region37: #{_lambda_.1} parent=1 // pred_fallthru
      _
    %v33 = vld [vmem:[%s0] sm:$0xff]
    %v34 = vld [vmem:[%s0 + $0x8] sm:$0xff]
    %v35 = vld [vmem:[%s0 + $0x10] sm:$0xff]
    %v36 = vld [vmem:[%s0 + $0x18] sm:$0xff]
    %v37 = vld [vmem:[%s0 + $0x20] sm:$0xff]
    %v38 = vld [vmem:[%s0 + $0x28] sm:$0xff]
    %v39 = vld [vmem:[%s0 + $0x30] sm:$0xff]
    %v40 = vld [vmem:[%s0 + $0x38] sm:$0xff]
    %v41 = vld [vmem:[%s0 + $0x40] sm:$0xff]
    %v42 = vld [vmem:[%s0 + $0x48] sm:$0xff]
    %v43 = vld [vmem:[%s0 + $0x50] sm:$0xff]
    %v44 = vld [vmem:[%s0 + $0x58] sm:$0xff]
    %v45 = vld [vmem:[%s0 + $0x60] sm:$0xff]
    %v46 = vld [vmem:[%s0 + $0x68] sm:$0xff]
    %v47 = vld [vmem:[%s0 + $0x70] sm:$0xff]
    %v48 = vld [vmem:[%s0 + $0x78] sm:$0xff]
    %v49 = vld [vmem:[%s0 + $0x80] sm:$0xff]
    %v50 = vld [vmem:[%s0 + $0x88] sm:$0xff]
    %v51 = vld [vmem:[%s0 + $0x90] sm:$0xff]
    %v52 = vld [vmem:[%s0 + $0x98] sm:$0xff]
    %v53 = vld [vmem:[%s0 + $0xa0] sm:$0xff]
    %v54 = vld [vmem:[%s0 + $0xa8] sm:$0xff]
    %v55 = vld [vmem:[%s0 + $0xb0] sm:$0xff]
    %v56 = vld [vmem:[%s0 + $0xb8] sm:$0xff]
    %v57 = vld [vmem:[%s0 + $0xc0] sm:$0xff]
    %v58 = vld [vmem:[%s0 + $0xc8] sm:$0xff]
    %v59 = vld [vmem:[%s0 + $0xd0] sm:$0xff]
    %v60 = vld [vmem:[%s0 + $0xd8] sm:$0xff]
    %v61 = vld [vmem:[%s0 + $0xe0] sm:$0xff]
    %v62 = vld [vmem:[%s0 + $0xe8] sm:$0xff]
    %v63 = vld [vmem:[%s0 + $0xf0] sm:$0xff]
    %v64 = vld [vmem:[%s0 + $0xf8] sm:$0xff]
    %v65 = vld [vmem:[%s0 + $0x100] sm:$0xff]
    %v66 = vld [vmem:[%s0 + $0x108] sm:$0xff]
    %v67 = vld [vmem:[%s0 + $0x110] sm:$0xff]
    %v68 = vld [vmem:[%s0 + $0x118] sm:$0xff]
    %v69 = vld [vmem:[%s0 + $0x120] sm:$0xff]
    %v70 = vld [vmem:[%s0 + $0x128] sm:$0xff]
    %v71 = vld [vmem:[%s0 + $0x130] sm:$0xff]
    %v72 = vld [vmem:[%s0 + $0x138] sm:$0xff]
    %v73 = vld [vmem:[%s0 + $0x140] sm:$0xff]
    %v74 = vld [vmem:[%s0 + $0x148] sm:$0xff]
    %v75 = vld [vmem:[%s0 + $0x150] sm:$0xff]
    %v76 = vld [vmem:[%s0 + $0x158] sm:$0xff]
    %v77 = vld [vmem:[%s0 + $0x160] sm:$0xff]
    %v78 = vld [vmem:[%s0 + $0x168] sm:$0xff]
    %v79 = vld [vmem:[%s0 + $0x170] sm:$0xff]
    %v80 = vld [vmem:[%s0 + $0x178] sm:$0xff]
    %v81 = vld [vmem:[%s0 + $0x180] sm:$0xff]
    %v82 = vld [vmem:[%s0 + $0x188] sm:$0xff]
    %v83 = vld [vmem:[%s0 + $0x190] sm:$0xff]
    %v84 = vld [vmem:[%s0 + $0x198] sm:$0xff]
    %v85 = vld [vmem:[%s0 + $0x1a0] sm:$0xff]
    %v86 = vld [vmem:[%s0 + $0x1a8] sm:$0xff]
    %v87 = vld [vmem:[%s0 + $0x1b0] sm:$0xff]
    %v88 = vld [vmem:[%s0 + $0x1b8] sm:$0xff]
    %v89 = vld [vmem:[%s0 + $0x1c0] sm:$0xff]
    %v90 = vld [vmem:[%s0 + $0x1c8] sm:$0xff]
    %v91 = vld [vmem:[%s0 + $0x1d0] sm:$0xff]
    %v92 = vld [vmem:[%s0 + $0x1d8] sm:$0xff]
    %v93 = vld [vmem:[%s0 + $0x1e0] sm:$0xff]
    %v94 = vld [vmem:[%s0 + $0x1e8] sm:$0xff]
    %v95 = vld [vmem:[%s0 + $0x1f0] sm:$0xff]
    %v96 = vld [vmem:[%s0 + $0x1f8] sm:$0xff]
    %v97 = vld [vmem:[%s0 + $0x200] sm:$0xff]
    %v98 = vld [vmem:[%s0 + $0x208] sm:$0xff]
    %v99 = vld [vmem:[%s1] sm:$0xf]
    %v100 = vld [vmem:[%s1 + $0x4] sm:$0xf]
    %v101 = vld [vmem:[%s1 + $0x8] sm:$0xf]
    %v102 = vld [vmem:[%s1 + $0xc] sm:$0xf]
    %v103 = vld [vmem:[%s1 + $0x10] sm:$0xf]
    %v104 = vld [vmem:[%s1 + $0x14] sm:$0xf]
    %v105 = vld [vmem:[%s1 + $0x18] sm:$0xf]
    %v106 = vld [vmem:[%s1 + $0x1c] sm:$0xf]
    %v107 = vld [vmem:[%s1 + $0x20] sm:$0xf]
    %v108 = vld [vmem:[%s1 + $0x24] sm:$0xf]
    %v109 = vld [vmem:[%s1 + $0x28] sm:$0xf]
    %v110 = vld [vmem:[%s1 + $0x2c] sm:$0xf]
    %v111 = vld [vmem:[%s1 + $0x30] sm:$0xf]
    %v112 = vld [vmem:[%s1 + $0x34] sm:$0xf]
    %v113 = vld [vmem:[%s1 + $0x38] sm:$0xf]
    %v114 = vld [vmem:[%s1 + $0x3c] sm:$0xf]
    %v115 = vld [vmem:[%s1 + $0x40] sm:$0xf]
    %v116 = vld [vmem:[%s1 + $0x44] sm:$0xf]
    %v117 = vld [vmem:[%s1 + $0x48] sm:$0xf]
    %v118 = vld [vmem:[%s1 + $0x4c] sm:$0xf]
    %v119 = vld [vmem:[%s1 + $0x50] sm:$0xf]
    %v120 = vld [vmem:[%s1 + $0x54] sm:$0xf]
    %v121 = vld [vmem:[%s1 + $0x58] sm:$0xf]
    %v122 = vld [vmem:[%s1 + $0x5c] sm:$0xf]
    %v123 = vld [vmem:[%s1 + $0x60] sm:$0xf]
    %v124 = vld [vmem:[%s1 + $0x64] sm:$0xf]
    %v125 = vld [vmem:[%s1 + $0x68] sm:$0xf]
    %v126 = vld [vmem:[%s1 + $0x6c] sm:$0xf]
    %v127 = vld [vmem:[%s1 + $0x70] sm:$0xf]
    %v128 = vld [vmem:[%s1 + $0x74] sm:$0xf]
    %v129 = vld [vmem:[%s1 + $0x78] sm:$0xf]
    %v130 = vld [vmem:[%s1 + $0x7c] sm:$0xf]
    %v131 = vld [vmem:[%s1 + $0x80] sm:$0xf]
    %v132 = vld [vmem:[%s1 + $0x84] sm:$0xf]
    %v133 = vld [vmem:[%s1 + $0x88] sm:$0xf]
    %v134 = vld [vmem:[%s1 + $0x8c] sm:$0xf]
    %v135 = vld [vmem:[%s1 + $0x90] sm:$0xf]
    %v136 = vld [vmem:[%s1 + $0x94] sm:$0xf]
    %v137 = vld [vmem:[%s1 + $0x98] sm:$0xf]
    %v138 = vld [vmem:[%s1 + $0x9c] sm:$0xf]
    %v139 = vld [vmem:[%s1 + $0xa0] sm:$0xf]
    %v140 = vld [vmem:[%s1 + $0xa4] sm:$0xf]
    %v141 = vld [vmem:[%s1 + $0xa8] sm:$0xf]
    %v142 = vld [vmem:[%s1 + $0xac] sm:$0xf]
    %v143 = vld [vmem:[%s1 + $0xb0] sm:$0xf]
    %v144 = vld [vmem:[%s1 + $0xb4] sm:$0xf]
    %v145 = vld [vmem:[%s1 + $0xb8] sm:$0xf]
    %v146 = vld [vmem:[%s1 + $0xbc] sm:$0xf]
    %v147 = vld [vmem:[%s1 + $0xc0] sm:$0xf]
    %v148 = vld [vmem:[%s1 + $0xc4] sm:$0xf]
    %v149 = vld [vmem:[%s1 + $0xc8] sm:$0xf]
    %v150 = vld [vmem:[%s1 + $0xcc] sm:$0xf]
    %v151 = vld [vmem:[%s1 + $0xd0] sm:$0xf]
    %v152 = vld [vmem:[%s1 + $0xd4] sm:$0xf]
    %v153 = vld [vmem:[%s1 + $0xd8] sm:$0xf]
    %v154 = vld [vmem:[%s1 + $0xdc] sm:$0xf]
    %v155 = vld [vmem:[%s1 + $0xe0] sm:$0xf]
    %v156 = vld [vmem:[%s1 + $0xe4] sm:$0xf]
    %v157 = vld [vmem:[%s1 + $0xe8] sm:$0xf]
    %v158 = vld [vmem:[%s1 + $0xec] sm:$0xf]
    %v159 = vld [vmem:[%s1 + $0xf0] sm:$0xf]
    %v160 = vld [vmem:[%s1 + $0xf4] sm:$0xf]
    %v161 = vld [vmem:[%s1 + $0xf8] sm:$0xf]
    %v162 = vld [vmem:[%s1 + $0xfc] sm:$0xf]
    %v163 = vld [vmem:[%s1 + $0x100] sm:$0xf]
    %v164 = vld [vmem:[%s1 + $0x104] sm:$0xf]
    %v165 = vld [vmem:[%s1 + $0x108] sm:$0xf]
    %v166 = vld [vmem:[%s1 + $0x10c] sm:$0xf]
    %v167 = vld [vmem:[%s1 + $0x110] sm:$0xf]
    %v168 = vld [vmem:[%s1 + $0x114] sm:$0xf]
    %v169 = vld [vmem:[%s1 + $0x118] sm:$0xf]
    %v170 = vld [vmem:[%s1 + $0x11c] sm:$0xf]
    %v171 = vld [vmem:[%s1 + $0x120] sm:$0xf]
    %v172 = vld [vmem:[%s1 + $0x124] sm:$0xf]
    %v173 = vld [vmem:[%s1 + $0x128] sm:$0xf]
    %v174 = vld [vmem:[%s1 + $0x12c] sm:$0xf]
    %v175 = vld [vmem:[%s1 + $0x130] sm:$0xf]
    %v176 = vld [vmem:[%s1 + $0x134] sm:$0xf]
    %v177 = vld [vmem:[%s1 + $0x138] sm:$0xf]
    %v178 = vld [vmem:[%s1 + $0x13c] sm:$0xf]
    %v179 = vld [vmem:[%s1 + $0x140] sm:$0xf]
    %v180 = vld [vmem:[%s1 + $0x144] sm:$0xf]
    %v181 = vld [vmem:[%s1 + $0x148] sm:$0xf]
    %v182 = vld [vmem:[%s1 + $0x14c] sm:$0xf]
    %v183 = vld [vmem:[%s1 + $0x150] sm:$0xf]
    %v184 = vld [vmem:[%s1 + $0x154] sm:$0xf]
    %v185 = vld [vmem:[%s1 + $0x158] sm:$0xf]
    %v186 = vld [vmem:[%s1 + $0x15c] sm:$0xf]
    %v187 = vld [vmem:[%s1 + $0x160] sm:$0xf]
    %v188 = vld [vmem:[%s1 + $0x164] sm:$0xf]
    %v189 = vld [vmem:[%s1 + $0x168] sm:$0xf]
    %v190 = vld [vmem:[%s1 + $0x16c] sm:$0xf]
    %v191 = vld [vmem:[%s1 + $0x170] sm:$0xf]
    %v192 = vld [vmem:[%s1 + $0x174] sm:$0xf]
    %v193 = vld [vmem:[%s1 + $0x178] sm:$0xf]
    %v194 = vld [vmem:[%s1 + $0x17c] sm:$0xf]
    %v195 = vld [vmem:[%s1 + $0x180] sm:$0xf]
    %v196 = vld [vmem:[%s1 + $0x184] sm:$0xf]
    %v197 = vld [vmem:[%s1 + $0x188] sm:$0xf]
    %v198 = vld [vmem:[%s1 + $0x18c] sm:$0xf]
    %v199 = vld [vmem:[%s1 + $0x190] sm:$0xf]
    %v200 = vld [vmem:[%s1 + $0x194] sm:$0xf]
    %v201 = vld [vmem:[%s1 + $0x198] sm:$0xf]
    %v202 = vld [vmem:[%s1 + $0x19c] sm:$0xf]
    %v203 = vld [vmem:[%s1 + $0x1a0] sm:$0xf]
    %v204 = vld [vmem:[%s1 + $0x1a4] sm:$0xf]
    %v205 = vld [vmem:[%s1 + $0x1a8] sm:$0xf]
    %v206 = vld [vmem:[%s1 + $0x1ac] sm:$0xf]
    %v207 = vld [vmem:[%s1 + $0x1b0] sm:$0xf]
    %v208 = vld [vmem:[%s1 + $0x1b4] sm:$0xf]
    %v209 = vld [vmem:[%s1 + $0x1b8] sm:$0xf]
    %v210 = vld [vmem:[%s1 + $0x1bc] sm:$0xf]
    %v211 = vld [vmem:[%s1 + $0x1c0] sm:$0xf]
    %v212 = vld [vmem:[%s1 + $0x1c4] sm:$0xf]
    %v213 = vld [vmem:[%s1 + $0x1c8] sm:$0xf]
    %v214 = vld [vmem:[%s1 + $0x1cc] sm:$0xf]
    %v215 = vld [vmem:[%s1 + $0x1d0] sm:$0xf]
    %v216 = vld [vmem:[%s1 + $0x1d4] sm:$0xf]
    %v217 = vld [vmem:[%s1 + $0x1d8] sm:$0xf]
    %v218 = vld [vmem:[%s1 + $0x1dc] sm:$0xf]
    %v219 = vld [vmem:[%s1 + $0x1e0] sm:$0xf]
    %v220 = vld [vmem:[%s1 + $0x1e4] sm:$0xf]
    %v221 = vld [vmem:[%s1 + $0x1e8] sm:$0xf]
    %v222 = vld [vmem:[%s1 + $0x1ec] sm:$0xf]
    %v223 = vld [vmem:[%s1 + $0x1f0] sm:$0xf]
    %v224 = vld [vmem:[%s1 + $0x1f4] sm:$0xf]
    %v225 = vld [vmem:[%s1 + $0x1f8] sm:$0xf]
    %v226 = vld [vmem:[%s1 + $0x1fc] sm:$0xf]
    %v227 = vld [vmem:[%s1 + $0x200] sm:$0xf]
    %v228 = vld [vmem:[%s1 + $0x204] sm:$0xf]
    %v229 = vld [vmem:[%s1 + $0x208] sm:$0xf]
    %v230 = vld [vmem:[%s1 + $0x20c] sm:$0xf]
    %v231 = vld [vmem:[%s1 + $0x210] sm:$0xf]
    %v232 = vld [vmem:[%s1 + $0x214] sm:$0xf]
    %v233 = vld [vmem:[%s1 + $0x218] sm:$0xf]
    %v234 = vld [vmem:[%s1 + $0x21c] sm:$0xf]
    %v235 = vld [vmem:[%s1 + $0x220] sm:$0xf]
    %v236 = vld [vmem:[%s1 + $0x224] sm:$0xf]
    %v237 = vld [vmem:[%s1 + $0x228] sm:$0xf]
    %v238 = vld [vmem:[%s1 + $0x22c] sm:$0xf]
    %v239 = vld [vmem:[%s1 + $0x230] sm:$0xf]
    %v240 = vld [vmem:[%s1 + $0x234] sm:$0xf]
    %v241 = vld [vmem:[%s1 + $0x238] sm:$0xf]
    %v242 = vld [vmem:[%s1 + $0x23c] sm:$0xf]
    %v243 = vld [vmem:[%s1 + $0x240] sm:$0xf]
    %v244 = vld [vmem:[%s1 + $0x244] sm:$0xf]
    %v245 = vld [vmem:[%s1 + $0x248] sm:$0xf]
    %v246 = vld [vmem:[%s1 + $0x24c] sm:$0xf]
    %v247 = vld [vmem:[%s1 + $0x250] sm:$0xf]
    %v248 = vld [vmem:[%s1 + $0x254] sm:$0xf]
    %v249 = vld [vmem:[%s1 + $0x258] sm:$0xf]
    %v250 = vld [vmem:[%s1 + $0x25c] sm:$0xf]
    %v251 = vld [vmem:[%s1 + $0x260] sm:$0xf]
    %v252 = vld [vmem:[%s1 + $0x264] sm:$0xf]
    %v253 = vld [vmem:[%s1 + $0x268] sm:$0xf]
    %v254 = vld [vmem:[%s1 + $0x26c] sm:$0xf]
    %v255 = vld [vmem:[%s1 + $0x270] sm:$0xf]
    %v256 = vld [vmem:[%s1 + $0x274] sm:$0xf]
    %v257 = vld [vmem:[%s1 + $0x278] sm:$0xf]
    %v258 = vld [vmem:[%s1 + $0x27c] sm:$0xf]
    %v259 = vld [vmem:[%s1 + $0x280] sm:$0xf]
    %v260 = vld [vmem:[%s1 + $0x284] sm:$0xf]
    %v261 = vld [vmem:[%s1 + $0x288] sm:$0xf]
    %v262 = vld [vmem:[%s1 + $0x28c] sm:$0xf]
    %v263 = vld [vmem:[%s1 + $0x290] sm:$0xf]
    %v264 = vld [vmem:[%s1 + $0x294] sm:$0xf]
    %v265 = vld [vmem:[%s1 + $0x298] sm:$0xf]
    %v266 = vld [vmem:[%s1 + $0x29c] sm:$0xf]
    %v267 = vld [vmem:[%s1 + $0x2a0] sm:$0xf]
    %v268 = vld [vmem:[%s1 + $0x2a4] sm:$0xf]
    %v269 = vld [vmem:[%s1 + $0x2a8] sm:$0xf]
    %v270 = vld [vmem:[%s1 + $0x2ac] sm:$0xf]
    %v271 = vld [vmem:[%s1 + $0x2b0] sm:$0xf]
    %v272 = vld [vmem:[%s1 + $0x2b4] sm:$0xf]
    %v273 = vld [vmem:[%s1 + $0x2b8] sm:$0xf]
    %v274 = vld [vmem:[%s1 + $0x2bc] sm:$0xf]
    %v275 = vld [vmem:[%s1 + $0x2c0] sm:$0xf]
    %v276 = vld [vmem:[%s1 + $0x2c4] sm:$0xf]
    %v277 = vld [vmem:[%s1 + $0x2c8] sm:$0xf]
    %v278 = vld [vmem:[%s1 + $0x2cc] sm:$0xf]
    %v279 = vld [vmem:[%s1 + $0x2d0] sm:$0xf]
    %v280 = vld [vmem:[%s1 + $0x2d4] sm:$0xf]
    %v281 = vld [vmem:[%s1 + $0x2d8] sm:$0xf]
    %v282 = vld [vmem:[%s1 + $0x2dc] sm:$0xf]
    %v283 = vld [vmem:[%s1 + $0x2e0] sm:$0xf]
    %v284 = vld [vmem:[%s1 + $0x2e4] sm:$0xf]
    %v285 = vld [vmem:[%s1 + $0x2e8] sm:$0xf]
    %v286 = vld [vmem:[%s1 + $0x2ec] sm:$0xf]
    %v287 = vld [vmem:[%s1 + $0x2f0] sm:$0xf]
    %v288 = vld [vmem:[%s1 + $0x2f4] sm:$0xf]
    %v289 = vld [vmem:[%s1 + $0x2f8] sm:$0xf]
    %v290 = vld [vmem:[%s1 + $0x2fc] sm:$0xf]
    %v291 = vld [vmem:[%s1 + $0x300] sm:$0xf]
    %v292 = vld [vmem:[%s1 + $0x304] sm:$0xf]
    %v293 = vld [vmem:[%s1 + $0x308] sm:$0xf]
    %v294 = vld [vmem:[%s1 + $0x30c] sm:$0xf]
    %v295 = vld [vmem:[%s1 + $0x310] sm:$0xf]
    %v296 = vld [vmem:[%s1 + $0x314] sm:$0xf]
    %v297 = vld [vmem:[%s1 + $0x318] sm:$0xf]
    %v298 = vld [vmem:[%s1 + $0x31c] sm:$0xf]
    %v299 = vld [vmem:[%s1 + $0x320] sm:$0xf]
    %v300 = vld [vmem:[%s1 + $0x324] sm:$0xf]
    %v301 = vld [vmem:[%s1 + $0x328] sm:$0xf]
    %v302 = vld [vmem:[%s1 + $0x32c] sm:$0xf]
    %v303 = vld [vmem:[%s1 + $0x330] sm:$0xf]
    %v304 = vld [vmem:[%s1 + $0x334] sm:$0xf]
    %v305 = vld [vmem:[%s1 + $0x338] sm:$0xf]
    %v306 = vld [vmem:[%s1 + $0x33c] sm:$0xf]
    %v307 = vld [vmem:[%s1 + $0x340] sm:$0xf]
    %v308 = vld [vmem:[%s1 + $0x344] sm:$0xf]
    %v309 = vld [vmem:[%s1 + $0x348] sm:$0xf]
    %v310 = vld [vmem:[%s1 + $0x34c] sm:$0xf]
    %v311 = vld [vmem:[%s1 + $0x350] sm:$0xf]
    %v312 = vld [vmem:[%s1 + $0x354] sm:$0xf]
    %v313 = vld [vmem:[%s1 + $0x358] sm:$0xf]
    %v314 = vld [vmem:[%s1 + $0x35c] sm:$0xf]
    %v315 = vld [vmem:[%s1 + $0x360] sm:$0xf]
    %v316 = vld [vmem:[%s1 + $0x364] sm:$0xf]
    %v317 = vld [vmem:[%s1 + $0x368] sm:$0xf]
    %v318 = vld [vmem:[%s1 + $0x36c] sm:$0xf]
    %v319 = vld [vmem:[%s1 + $0x370] sm:$0xf]
    %v320 = vld [vmem:[%s1 + $0x374] sm:$0xf]
    %v321 = vld [vmem:[%s1 + $0x378] sm:$0xf]
    %v322 = vld [vmem:[%s1 + $0x37c] sm:$0xf]
    %v323 = vld [vmem:[%s1 + $0x380] sm:$0xf]
    %v324 = vld [vmem:[%s1 + $0x384] sm:$0xf]
    %v325 = vld [vmem:[%s1 + $0x388] sm:$0xf]
    %v326 = vld [vmem:[%s1 + $0x38c] sm:$0xf]
    %v327 = vld [vmem:[%s1 + $0x390] sm:$0xf]
    %v328 = vld [vmem:[%s1 + $0x394] sm:$0xf]
    %v329 = vld [vmem:[%s1 + $0x398] sm:$0xf]
    %v330 = vld [vmem:[%s1 + $0x39c] sm:$0xf]
    %v331 = vld [vmem:[%s1 + $0x3a0] sm:$0xf]
    %v332 = vld [vmem:[%s1 + $0x3a4] sm:$0xf]
    %v333 = vld [vmem:[%s1 + $0x3a8] sm:$0xf]
    %v334 = vld [vmem:[%s1 + $0x3ac] sm:$0xf]
    %v335 = vld [vmem:[%s1 + $0x3b0] sm:$0xf]
    %v336 = vld [vmem:[%s1 + $0x3b4] sm:$0xf]
    %v337 = vld [vmem:[%s1 + $0x3b8] sm:$0xf]
    %v338 = vld [vmem:[%s1 + $0x3bc] sm:$0xf]
    %v339 = vld [vmem:[%s1 + $0x3c0] sm:$0xf]
    %v340 = vld [vmem:[%s1 + $0x3c4] sm:$0xf]
    %v341 = vld [vmem:[%s1 + $0x3c8] sm:$0xf]
    %v342 = vld [vmem:[%s1 + $0x3cc] sm:$0xf]
    %v343 = vld [vmem:[%s1 + $0x3d0] sm:$0xf]
    %v344 = vld [vmem:[%s1 + $0x3d4] sm:$0xf]
    %v345 = vld [vmem:[%s1 + $0x3d8] sm:$0xf]
    %v346 = vld [vmem:[%s1 + $0x3dc] sm:$0xf]
    %v347 = vld [vmem:[%s1 + $0x3e0] sm:$0xf]
    %v348 = vld [vmem:[%s1 + $0x3e4] sm:$0xf]
    %v349 = vld [vmem:[%s1 + $0x3e8] sm:$0xf]
    %v350 = vld [vmem:[%s1 + $0x3ec] sm:$0xf]
    %v351 = vld [vmem:[%s1 + $0x3f0] sm:$0xf]
    %v352 = vld [vmem:[%s1 + $0x3f4] sm:$0xf]
    %v353 = vld [vmem:[%s1 + $0x3f8] sm:$0xf]
    %v354 = vld [vmem:[%s1 + $0x3fc] sm:$0xf]
    %v355 = vld [vmem:[%s1 + $0x400] sm:$0xf]
    %v356 = vld [vmem:[%s1 + $0x404] sm:$0xf]
    %v357 = vld [vmem:[%s1 + $0x408] sm:$0xf]
    %v358 = vld [vmem:[%s1 + $0x40c] sm:$0xf]
    %v359 = vld [vmem:[%s1 + $0x410] sm:$0xf]
    %v360 = vld [vmem:[%s1 + $0x414] sm:$0xf]
    %v361 = vld [vmem:[%s1 + $0x418] sm:$0xf]
    %v362 = vld [vmem:[%s1 + $0x41c] sm:$0xf]
    %v363 = vld [vmem:[%s1 + $0x420] sm:$0xf]
    %v364 = vld [vmem:[%s1 + $0x424] sm:$0xf]
    %v365 = vld [vmem:[%s1 + $0x428] sm:$0xf]
    %v366 = vld [vmem:[%s1 + $0x42c] sm:$0xf]
    %v367 = vld [vmem:[%s1 + $0x430] sm:$0xf]
    %v368 = vld [vmem:[%s1 + $0x434] sm:$0xf]
    %v369 = vld [vmem:[%s1 + $0x438] sm:$0xf]
    %v370 = vld [vmem:[%s1 + $0x43c] sm:$0xf]
    %v371 = vld [vmem:[%s1 + $0x440] sm:$0xf]
    %v372 = vld [vmem:[%s1 + $0x444] sm:$0xf]
    %v373 = vld [vmem:[%s1 + $0x448] sm:$0xf]
    %v374 = vld [vmem:[%s1 + $0x44c] sm:$0xf]
    %v375 = vld [vmem:[%s1 + $0x450] sm:$0xf]
    %v376 = vld [vmem:[%s1 + $0x454] sm:$0xf]
    %v377 = vld [vmem:[%s1 + $0x458] sm:$0xf]
    %v378 = vld [vmem:[%s1 + $0x45c] sm:$0xf]
    %v379 = vld [vmem:[%s1 + $0x460] sm:$0xf]
    %v380 = vld [vmem:[%s1 + $0x464] sm:$0xf]
    %v381 = vld [vmem:[%s1 + $0x468] sm:$0xf]
    %v382 = vld [vmem:[%s1 + $0x46c] sm:$0xf]
    %v383 = vld [vmem:[%s1 + $0x470] sm:$0xf]
    %v384 = vld [vmem:[%s1 + $0x474] sm:$0xf]
    %v385 = vld [vmem:[%s1 + $0x478] sm:$0xf]
    %v386 = vld [vmem:[%s1 + $0x47c] sm:$0xf]
    %v387 = vld [vmem:[%s1 + $0x480] sm:$0xf]
    %v388 = vld [vmem:[%s1 + $0x484] sm:$0xf]
    %v389 = vld [vmem:[%s1 + $0x488] sm:$0xf]
    %v390 = vld [vmem:[%s1 + $0x48c] sm:$0xf]
    %v391 = vld [vmem:[%s1 + $0x490] sm:$0xf]
    %v392 = vld [vmem:[%s1 + $0x494] sm:$0xf]
    %v393 = vld [vmem:[%s1 + $0x498] sm:$0xf]
    %v394 = vld [vmem:[%s1 + $0x49c] sm:$0xf]
    %v395 = vld [vmem:[%s1 + $0x4a0] sm:$0xf]
    %v396 = vld [vmem:[%s1 + $0x4a4] sm:$0xf]
    %v397 = vld [vmem:[%s1 + $0x4a8] sm:$0xf]
    %v398 = vld [vmem:[%s1 + $0x4ac] sm:$0xf]
    %v399 = vld [vmem:[%s1 + $0x4b0] sm:$0xf]
    %v400 = vld [vmem:[%s1 + $0x4b4] sm:$0xf]
    %v401 = vld [vmem:[%s1 + $0x4b8] sm:$0xf]
    %v402 = vld [vmem:[%s1 + $0x4bc] sm:$0xf]
    %v403 = vld [vmem:[%s1 + $0x4c0] sm:$0xf]
    %v404 = vld [vmem:[%s1 + $0x4c4] sm:$0xf]
    %v405 = vld [vmem:[%s1 + $0x4c8] sm:$0xf]
    %v406 = vld [vmem:[%s1 + $0x4cc] sm:$0xf]
    %v407 = vld [vmem:[%s1 + $0x4d0] sm:$0xf]
    %v408 = vld [vmem:[%s1 + $0x4d4] sm:$0xf]
    %v409 = vld [vmem:[%s1 + $0x4d8] sm:$0xf]
    %v410 = vld [vmem:[%s1 + $0x4dc] sm:$0xf]
    %v411 = vld [vmem:[%s1 + $0x4e0] sm:$0xf]
    %v412 = vld [vmem:[%s1 + $0x4e4] sm:$0xf]
    %v413 = vld [vmem:[%s1 + $0x4e8] sm:$0xf]
    %v414 = vld [vmem:[%s1 + $0x4ec] sm:$0xf]
    %v415 = vld [vmem:[%s1 + $0x4f0] sm:$0xf]
    %v416 = vld [vmem:[%s1 + $0x4f4] sm:$0xf]
    %v417 = vld [vmem:[%s1 + $0x4f8] sm:$0xf]
    %v418 = vld [vmem:[%s1 + $0x4fc] sm:$0xf]
    %v419 = vld [vmem:[%s1 + $0x500] sm:$0xf]
    %v420 = vld [vmem:[%s1 + $0x504] sm:$0xf]
    %v421 = vld [vmem:[%s1 + $0x508] sm:$0xf]
    %v422 = vld [vmem:[%s1 + $0x50c] sm:$0xf]
    %v423 = vld [vmem:[%s1 + $0x510] sm:$0xf]
    %v424 = vld [vmem:[%s1 + $0x514] sm:$0xf]
    %v425 = vld [vmem:[%s1 + $0x518] sm:$0xf]
    %v426 = vld [vmem:[%s1 + $0x51c] sm:$0xf]
    %v427 = vld [vmem:[%s1 + $0x520] sm:$0xf]
    %v428 = vld [vmem:[%s1 + $0x524] sm:$0xf]
    %v429 = vld [vmem:[%s1 + $0x528] sm:$0xf]
    %v430 = vld [vmem:[%s1 + $0x52c] sm:$0xf]
    %v431 = vld [vmem:[%s1 + $0x530] sm:$0xf]
    %v432 = vld [vmem:[%s1 + $0x534] sm:$0xf]
    %v433 = vld [vmem:[%s1 + $0x538] sm:$0xf]
    %v434 = vld [vmem:[%s1 + $0x53c] sm:$0xf]
    %v435 = vld [vmem:[%s1 + $0x540] sm:$0xf]
    %v436 = vld [vmem:[%s1 + $0x544] sm:$0xf]
    %v437 = vld [vmem:[%s1 + $0x548] sm:$0xf]
    %v438 = vld [vmem:[%s1 + $0x54c] sm:$0xf]
    %v439 = vld [vmem:[%s1 + $0x550] sm:$0xf]
    %v440 = vld [vmem:[%s1 + $0x554] sm:$0xf]
    %v441 = vld [vmem:[%s1 + $0x558] sm:$0xf]
    %v442 = vld [vmem:[%s1 + $0x55c] sm:$0xf]
    %v443 = vld [vmem:[%s1 + $0x560] sm:$0xf]
    %v444 = vld [vmem:[%s1 + $0x564] sm:$0xf]
    %v445 = vld [vmem:[%s1 + $0x568] sm:$0xf]
    %v446 = vld [vmem:[%s1 + $0x56c] sm:$0xf]
    %v447 = vld [vmem:[%s1 + $0x570] sm:$0xf]
    %v448 = vld [vmem:[%s1 + $0x574] sm:$0xf]
    %v449 = vld [vmem:[%s1 + $0x578] sm:$0xf]
    %v450 = vld [vmem:[%s1 + $0x57c] sm:$0xf]
    %v451 = vld [vmem:[%s1 + $0x580] sm:$0xf]
    %v452 = vld [vmem:[%s1 + $0x584] sm:$0xf]
    %v453 = vld [vmem:[%s1 + $0x588] sm:$0xf]
    %v454 = vld [vmem:[%s1 + $0x58c] sm:$0xf]
    %v455 = vld [vmem:[%s1 + $0x590] sm:$0xf]
    %v456 = vld [vmem:[%s1 + $0x594] sm:$0xf]
    %v457 = vld [vmem:[%s1 + $0x598] sm:$0xf]
    %v458 = vld [vmem:[%s1 + $0x59c] sm:$0xf]
    %v459 = vld [vmem:[%s1 + $0x5a0] sm:$0xf]
    %v460 = vld [vmem:[%s1 + $0x5a4] sm:$0xf]
    %v461 = vld [vmem:[%s1 + $0x5a8] sm:$0xf]
    %v462 = vld [vmem:[%s1 + $0x5ac] sm:$0xf]
    %v463 = vld [vmem:[%s1 + $0x5b0] sm:$0xf]
    %v464 = vld [vmem:[%s1 + $0x5b4] sm:$0xf]
    %v465 = vld [vmem:[%s1 + $0x5b8] sm:$0xf]
    %v466 = vld [vmem:[%s1 + $0x5bc] sm:$0xf]
    %v467 = vld [vmem:[%s1 + $0x5c0] sm:$0xf]
    %v468 = vld [vmem:[%s1 + $0x5c4] sm:$0xf]
    %v469 = vld [vmem:[%s1 + $0x5c8] sm:$0xf]
    %v470 = vld [vmem:[%s1 + $0x5cc] sm:$0xf]
    %v471 = vld [vmem:[%s1 + $0x5d0] sm:$0xf]
    %v472 = vld [vmem:[%s1 + $0x5d4] sm:$0xf]
    %v473 = vld [vmem:[%s1 + $0x5d8] sm:$0xf]
    %v474 = vld [vmem:[%s1 + $0x5dc] sm:$0xf]
    %v475 = vld [vmem:[%s1 + $0x5e0] sm:$0xf]
    %v476 = vld [vmem:[%s1 + $0x5e4] sm:$0xf]
    %v477 = vld [vmem:[%s1 + $0x5e8] sm:$0xf]
    %v478 = vld [vmem:[%s1 + $0x5ec] sm:$0xf]
    %v479 = vld [vmem:[%s1 + $0x5f0] sm:$0xf]
    %v480 = vld [vmem:[%s1 + $0x5f4] sm:$0xf]
    %v481 = vld [vmem:[%s1 + $0x5f8] sm:$0xf]
    %v482 = vld [vmem:[%s1 + $0x5fc] sm:$0xf]
    %v483 = vld [vmem:[%s1 + $0x600] sm:$0xf]
    %v484 = vld [vmem:[%s1 + $0x604] sm:$0xf]
    %v485 = vld [vmem:[%s1 + $0x608] sm:$0xf]
    %v486 = vld [vmem:[%s1 + $0x60c] sm:$0xf]
    %v487 = vld [vmem:[%s1 + $0x610] sm:$0xf]
    %v488 = vld [vmem:[%s1 + $0x614] sm:$0xf]
    %v489 = vld [vmem:[%s1 + $0x618] sm:$0xf]
    %v490 = vld [vmem:[%s1 + $0x61c] sm:$0xf]
    %v491 = vld [vmem:[%s1 + $0x620] sm:$0xf]
    %v492 = vld [vmem:[%s1 + $0x624] sm:$0xf]
    %v493 = vld [vmem:[%s1 + $0x628] sm:$0xf]
    %v494 = vld [vmem:[%s1 + $0x62c] sm:$0xf]
    %v495 = vld [vmem:[%s1 + $0x630] sm:$0xf]
    %v496 = vld [vmem:[%s1 + $0x634] sm:$0xf]
    %v497 = vld [vmem:[%s1 + $0x638] sm:$0xf]
    %v498 = vld [vmem:[%s1 + $0x63c] sm:$0xf]
    %v499 = vld [vmem:[%s1 + $0x640] sm:$0xf]
    %v500 = vld [vmem:[%s1 + $0x644] sm:$0xf]
    %v501 = vld [vmem:[%s1 + $0x648] sm:$0xf]
    %v502 = vld [vmem:[%s1 + $0x64c] sm:$0xf]
    %v503 = vld [vmem:[%s1 + $0x650] sm:$0xf]
    %v504 = vld [vmem:[%s1 + $0x654] sm:$0xf]
    %v505 = vld [vmem:[%s1 + $0x658] sm:$0xf]
    %v506 = vld [vmem:[%s1 + $0x65c] sm:$0xf]
    %v507 = vld [vmem:[%s1 + $0x660] sm:$0xf]
    %v508 = vld [vmem:[%s1 + $0x664] sm:$0xf]
    %v509 = vld [vmem:[%s1 + $0x668] sm:$0xf]
    %v510 = vld [vmem:[%s1 + $0x66c] sm:$0xf]
    %v511 = vld [vmem:[%s1 + $0x670] sm:$0xf]
    %v512 = vld [vmem:[%s1 + $0x674] sm:$0xf]
    %v513 = vld [vmem:[%s1 + $0x678] sm:$0xf]
    %v514 = vld [vmem:[%s1 + $0x67c] sm:$0xf]
    %v515 = vld [vmem:[%s1 + $0x680] sm:$0xf]
    %v516 = vld [vmem:[%s1 + $0x684] sm:$0xf]
    %v517 = vld [vmem:[%s1 + $0x688] sm:$0xf]
    %v518 = vld [vmem:[%s1 + $0x68c] sm:$0xf]
    %v519 = vld [vmem:[%s1 + $0x690] sm:$0xf]
    %v520 = vld [vmem:[%s1 + $0x694] sm:$0xf]
    %v521 = vld [vmem:[%s1 + $0x698] sm:$0xf]
    %v522 = vld [vmem:[%s1 + $0x69c] sm:$0xf]
    %v523 = vld [vmem:[%s1 + $0x6a0] sm:$0xf]
    %v524 = vld [vmem:[%s1 + $0x6a4] sm:$0xf]
    %v525 = vld [vmem:[%s1 + $0x6a8] sm:$0xf]
    %v526 = vld [vmem:[%s1 + $0x6ac] sm:$0xf]
    %v527 = vld [vmem:[%s1 + $0x6b0] sm:$0xf]
    %v528 = vld [vmem:[%s1 + $0x6b4] sm:$0xf]
    %v529 = vld [vmem:[%s1 + $0x6b8] sm:$0xf]
    %v530 = vld [vmem:[%s1 + $0x6bc] sm:$0xf]
    %v531 = vld [vmem:[%s1 + $0x6c0] sm:$0xf]
    %v532 = vld [vmem:[%s1 + $0x6c4] sm:$0xf]
    %v533 = vld [vmem:[%s1 + $0x6c8] sm:$0xf]
    %v534 = vld [vmem:[%s1 + $0x6cc] sm:$0xf]
    %v535 = vld [vmem:[%s1 + $0x6d0] sm:$0xf]
    %v536 = vld [vmem:[%s1 + $0x6d4] sm:$0xf]
    %v537 = vld [vmem:[%s1 + $0x6d8] sm:$0xf]
    %v538 = vld [vmem:[%s1 + $0x6dc] sm:$0xf]
    %v539 = vld [vmem:[%s1 + $0x6e0] sm:$0xf]
    %v540 = vld [vmem:[%s1 + $0x6e4] sm:$0xf]
    %v541 = vld [vmem:[%s1 + $0x6e8] sm:$0xf]
    %v542 = vld [vmem:[%s1 + $0x6ec] sm:$0xf]
    %v543 = vld [vmem:[%s1 + $0x6f0] sm:$0xf]
    %v544 = vld [vmem:[%s1 + $0x6f4] sm:$0xf]
    %v545 = vld [vmem:[%s1 + $0x6f8] sm:$0xf]
    %v546 = vld [vmem:[%s1 + $0x6fc] sm:$0xf]
    %v547 = vld [vmem:[%s1 + $0x700] sm:$0xf]
    %v548 = vld [vmem:[%s1 + $0x704] sm:$0xf]
    %v549 = vld [vmem:[%s1 + $0x708] sm:$0xf]
    %v550 = vld [vmem:[%s1 + $0x70c] sm:$0xf]
    %v551 = vld [vmem:[%s1 + $0x710] sm:$0xf]
    %v552 = vld [vmem:[%s1 + $0x714] sm:$0xf]
    %v553 = vld [vmem:[%s1 + $0x718] sm:$0xf]
    %v554 = vld [vmem:[%s1 + $0x71c] sm:$0xf]
    %v555 = vld [vmem:[%s1 + $0x720] sm:$0xf]
    %v556 = vld [vmem:[%s1 + $0x724] sm:$0xf]
    %v557 = vld [vmem:[%s1 + $0x728] sm:$0xf]
    %v558 = vld [vmem:[%s1 + $0x72c] sm:$0xf]
    %v559 = vld [vmem:[%s1 + $0x730] sm:$0xf]
    %v560 = vld [vmem:[%s1 + $0x734] sm:$0xf]
    %v561 = vld [vmem:[%s1 + $0x738] sm:$0xf]
    %v562 = vld [vmem:[%s1 + $0x73c] sm:$0xf]
    %v563 = vld [vmem:[%s1 + $0x740] sm:$0xf]
    %v564 = vld [vmem:[%s1 + $0x744] sm:$0xf]
    %v565 = vld [vmem:[%s1 + $0x748] sm:$0xf]
    %v566 = vld [vmem:[%s1 + $0x74c] sm:$0xf]
    %v567 = vld [vmem:[%s1 + $0x750] sm:$0xf]
    %v568 = vld [vmem:[%s1 + $0x754] sm:$0xf]
    %v569 = vld [vmem:[%s1 + $0x758] sm:$0xf]
    %v570 = vld [vmem:[%s1 + $0x75c] sm:$0xf]
    %v571 = vld [vmem:[%s1 + $0x760] sm:$0xf]
    %v572 = vld [vmem:[%s1 + $0x764] sm:$0xf]
    %v573 = vld [vmem:[%s1 + $0x768] sm:$0xf]
    %v574 = vld [vmem:[%s1 + $0x76c] sm:$0xf]
    %v575 = vld [vmem:[%s1 + $0x770] sm:$0xf]
    %v576 = vld [vmem:[%s1 + $0x774] sm:$0xf]
    %v577 = vld [vmem:[%s1 + $0x778] sm:$0xf]
    %v578 = vld [vmem:[%s1 + $0x77c] sm:$0xf]
    %v579 = vld [vmem:[%s1 + $0x780] sm:$0xf]
    %v580 = vld [vmem:[%s1 + $0x784] sm:$0xf]
    %v581 = vld [vmem:[%s1 + $0x788] sm:$0xf]
    %v582 = vld [vmem:[%s1 + $0x78c] sm:$0xf]
    %v583 = vld [vmem:[%s1 + $0x790] sm:$0xf]
    %v584 = vld [vmem:[%s1 + $0x794] sm:$0xf]
    %v585 = vld [vmem:[%s1 + $0x798] sm:$0xf]
    %v586 = vld [vmem:[%s1 + $0x79c] sm:$0xf]
    %v587 = vld [vmem:[%s1 + $0x7a0] sm:$0xf]
    %v588 = vld [vmem:[%s1 + $0x7a4] sm:$0xf]
    %v589 = vld [vmem:[%s1 + $0x7a8] sm:$0xf]
    %v590 = vld [vmem:[%s1 + $0x7ac] sm:$0xf]
    %v591 = vld [vmem:[%s1 + $0x7b0] sm:$0xf]
    %v592 = vld [vmem:[%s1 + $0x7b4] sm:$0xf]
    %v593 = vld [vmem:[%s1 + $0x7b8] sm:$0xf]
    %v594 = vld [vmem:[%s1 + $0x7bc] sm:$0xf]
    %v595 = vld [vmem:[%s1 + $0x7c0] sm:$0xf]
    %v596 = vld [vmem:[%s1 + $0x7c4] sm:$0xf]
    %v597 = vld [vmem:[%s1 + $0x7c8] sm:$0xf]
    %v598 = vld [vmem:[%s1 + $0x7cc] sm:$0xf]
    %v599 = vld [vmem:[%s1 + $0x7d0] sm:$0xf]
    %v600 = vld [vmem:[%s1 + $0x7d4] sm:$0xf]
    %v601 = vld [vmem:[%s1 + $0x7d8] sm:$0xf]
    %v602 = vld [vmem:[%s1 + $0x7dc] sm:$0xf]
    %v603 = vld [vmem:[%s1 + $0x7e0] sm:$0xf]
    %v604 = vld [vmem:[%s1 + $0x7e4] sm:$0xf]
    %v605 = vld [vmem:[%s1 + $0x7e8] sm:$0xf]
    %v606 = vld [vmem:[%s1 + $0x7ec] sm:$0xf]
    %v607 = vld [vmem:[%s1 + $0x7f0] sm:$0xf]
    %v608 = vld [vmem:[%s1 + $0x7f4] sm:$0xf]
    %v609 = vld [vmem:[%s1 + $0x7f8] sm:$0xf]
    %v610 = vld [vmem:[%s1 + $0x7fc] sm:$0xf]
    %v611 = vld [vmem:[%s1 + $0x800] sm:$0xf]
    %v612 = vld [vmem:[%s1 + $0x804] sm:$0xf]
    %v613 = vld [vmem:[%s1 + $0x808] sm:$0xf]
    %v614 = vld [vmem:[%s1 + $0x80c] sm:$0xf]
    %v615 = vld [vmem:[%s1 + $0x810] sm:$0xf]
    %v616 = vld [vmem:[%s1 + $0x814] sm:$0xf]
    %v617 = vld [vmem:[%s1 + $0x818] sm:$0xf]
    %v618 = vld [vmem:[%s1 + $0x81c] sm:$0xf]
    %v619 = vld [vmem:[%s1 + $0x820] sm:$0xf]
    %v620 = vld [vmem:[%s1 + $0x824] sm:$0xf]
    %v621 = vld [vmem:[%s1 + $0x828] sm:$0xf]
    %v622 = vld [vmem:[%s1 + $0x82c] sm:$0xf]
    %v623 = vld [vmem:[%s1 + $0x830] sm:$0xf]
    %v624 = vld [vmem:[%s1 + $0x834] sm:$0xf]
    %v625 = vld [vmem:[%s1 + $0x838] sm:$0xf]
    %v626 = vld [vmem:[%s1 + $0x83c] sm:$0xf]
    %v627 = vld [vmem:[%s1 + $0x840] sm:$0xf]
    %v628 = vld [vmem:[%s1 + $0x844] sm:$0xf]
    %v629 = vld [vmem:[%s1 + $0x848] sm:$0xf]
    %v630 = vld [vmem:[%s1 + $0x84c] sm:$0xf]
    %v631 = vld [vmem:[%s1 + $0x850] sm:$0xf]
    %v632 = vld [vmem:[%s1 + $0x854] sm:$0xf]
    %v633 = vld [vmem:[%s1 + $0x858] sm:$0xf]
    %v634 = vld [vmem:[%s1 + $0x85c] sm:$0xf]
    %v635 = vld [vmem:[%s1 + $0x860] sm:$0xf]
    %v636 = vld [vmem:[%s1 + $0x864] sm:$0xf]
    %v637 = vld [vmem:[%s1 + $0x868] sm:$0xf]
    %v638 = vld [vmem:[%s1 + $0x86c] sm:$0xf]
    %v639 = vld [vmem:[%s1 + $0x870] sm:$0xf]
    %v640 = vld [vmem:[%s1 + $0x874] sm:$0xf]
    %v641 = vld [vmem:[%s1 + $0x878] sm:$0xf]
    %v642 = vld [vmem:[%s1 + $0x87c] sm:$0xf]
    %v643 = vld [vmem:[%s1 + $0x880] sm:$0xf]
    %v644 = vld [vmem:[%s1 + $0x884] sm:$0xf]
    %v645 = vld [vmem:[%s1 + $0x888] sm:$0xf]
    %v646 = vld [vmem:[%s1 + $0x88c] sm:$0xf]
    %v647 = vld [vmem:[%s1 + $0x890] sm:$0xf]
    %v648 = vld [vmem:[%s1 + $0x894] sm:$0xf]
    %v649 = vld [vmem:[%s1 + $0x898] sm:$0xf]
    %v650 = vld [vmem:[%s1 + $0x89c] sm:$0xf]
    %v651 = vld [vmem:[%s1 + $0x8a0] sm:$0xf]
    %v652 = vld [vmem:[%s1 + $0x8a4] sm:$0xf]
    %v653 = vld [vmem:[%s1 + $0x8a8] sm:$0xf]
    %v654 = vld [vmem:[%s1 + $0x8ac] sm:$0xf]
    %v655 = vld [vmem:[%s1 + $0x8b0] sm:$0xf]
    %v656 = vld [vmem:[%s1 + $0x8b4] sm:$0xf]
    %v657 = vld [vmem:[%s1 + $0x8b8] sm:$0xf]
    %v658 = vld [vmem:[%s1 + $0x8bc] sm:$0xf]
    %v659 = vld [vmem:[%s1 + $0x8c0] sm:$0xf]
    %v660 = vld [vmem:[%s1 + $0x8c4] sm:$0xf]
    %v661 = vld [vmem:[%s1 + $0x8c8] sm:$0xf]
    %v662 = vld [vmem:[%s1 + $0x8cc] sm:$0xf]
    %v663 = vld [vmem:[%s1 + $0x8d0] sm:$0xf]
    %v664 = vld [vmem:[%s1 + $0x8d4] sm:$0xf]
    %v665 = vld [vmem:[%s1 + $0x8d8] sm:$0xf]
    %v666 = vld [vmem:[%s1 + $0x8dc] sm:$0xf]
    %v667 = vld [vmem:[%s1 + $0x8e0] sm:$0xf]
    %v668 = vld [vmem:[%s1 + $0x8e4] sm:$0xf]
    %v669 = vld [vmem:[%s1 + $0x8e8] sm:$0xf]
    %v670 = vld [vmem:[%s1 + $0x8ec] sm:$0xf]
    %v671 = vld [vmem:[%s1 + $0x8f0] sm:$0xf]
    %v672 = vld [vmem:[%s1 + $0x8f4] sm:$0xf]
    %v673 = vld [vmem:[%s1 + $0x8f8] sm:$0xf]
    %v674 = vld [vmem:[%s1 + $0x8fc] sm:$0xf]
    %v675 = vld [vmem:[%s1 + $0x900] sm:$0xf]
    %v676 = vld [vmem:[%s1 + $0x904] sm:$0xf]
    %v677 = vld [vmem:[%s1 + $0x908] sm:$0xf]
    %v678 = vld [vmem:[%s1 + $0x90c] sm:$0xf]
    %v679 = vld [vmem:[%s1 + $0x910] sm:$0xf]
    %v680 = vld [vmem:[%s1 + $0x914] sm:$0xf]
    %v681 = vld [vmem:[%s1 + $0x918] sm:$0xf]
    %v682 = vld [vmem:[%s1 + $0x91c] sm:$0xf]
    %v683 = vld [vmem:[%s1 + $0x920] sm:$0xf]
    %v684 = vld [vmem:[%s1 + $0x924] sm:$0xf]
    %v685 = vld [vmem:[%s1 + $0x928] sm:$0xf]
    %v686 = vld [vmem:[%s1 + $0x92c] sm:$0xf]
    %v687 = vld [vmem:[%s1 + $0x930] sm:$0xf]
    %v688 = vld [vmem:[%s1 + $0x934] sm:$0xf]
    %v689 = vld [vmem:[%s1 + $0x938] sm:$0xf]
    %v690 = vld [vmem:[%s1 + $0x93c] sm:$0xf]
    %v691 = vld [vmem:[%s1 + $0x940] sm:$0xf]
    %v692 = vld [vmem:[%s1 + $0x944] sm:$0xf]
    %v693 = vld [vmem:[%s1 + $0x948] sm:$0xf]
    %v694 = vld [vmem:[%s1 + $0x94c] sm:$0xf]
    %v695 = vld [vmem:[%s1 + $0x950] sm:$0xf]
    %v696 = vld [vmem:[%s1 + $0x954] sm:$0xf]
    %v697 = vld [vmem:[%s1 + $0x958] sm:$0xf]
    %v698 = vld [vmem:[%s1 + $0x95c] sm:$0xf]
    %v699 = vld [vmem:[%s1 + $0x960] sm:$0xf]
    %v700 = vld [vmem:[%s1 + $0x964] sm:$0xf]
    %v701 = vld [vmem:[%s1 + $0x968] sm:$0xf]
    %v702 = vld [vmem:[%s1 + $0x96c] sm:$0xf]
    %v703 = vld [vmem:[%s1 + $0x970] sm:$0xf]
    %v704 = vld [vmem:[%s1 + $0x974] sm:$0xf]
    %v705 = vld [vmem:[%s1 + $0x978] sm:$0xf]
    %v706 = vld [vmem:[%s1 + $0x97c] sm:$0xf]
    %v707 = vld [vmem:[%s1 + $0x980] sm:$0xf]
    %v708 = vld [vmem:[%s1 + $0x984] sm:$0xf]
    %v709 = vld [vmem:[%s1 + $0x988] sm:$0xf]
    %v710 = vld [vmem:[%s1 + $0x98c] sm:$0xf]
    %v711 = vld [vmem:[%s1 + $0x990] sm:$0xf]
    %v712 = vld [vmem:[%s1 + $0x994] sm:$0xf]
    %v713 = vld [vmem:[%s1 + $0x998] sm:$0xf]
    %v714 = vld [vmem:[%s1 + $0x99c] sm:$0xf]
    %v715 = vld [vmem:[%s1 + $0x9a0] sm:$0xf]
    %v716 = vld [vmem:[%s1 + $0x9a4] sm:$0xf]
    %v717 = vld [vmem:[%s1 + $0x9a8] sm:$0xf]
    %v718 = vld [vmem:[%s1 + $0x9ac] sm:$0xf]
    %v719 = vld [vmem:[%s1 + $0x9b0] sm:$0xf]
    %v720 = vld [vmem:[%s1 + $0x9b4] sm:$0xf]
    %v721 = vld [vmem:[%s1 + $0x9b8] sm:$0xf]
    %v722 = vld [vmem:[%s1 + $0x9bc] sm:$0xf]
    %v723 = vld [vmem:[%s1 + $0x9c0] sm:$0xf]
    %v724 = vld [vmem:[%s1 + $0x9c4] sm:$0xf]
    %v725 = vld [vmem:[%s1 + $0x9c8] sm:$0xf]
    %v726 = vld [vmem:[%s1 + $0x9cc] sm:$0xf]
    %v727 = vld [vmem:[%s1 + $0x9d0] sm:$0xf]
    %v728 = vld [vmem:[%s1 + $0x9d4] sm:$0xf]
    %v729 = vld [vmem:[%s1 + $0x9d8] sm:$0xf]
    %v730 = vld [vmem:[%s1 + $0x9dc] sm:$0xf]
    %v731 = vld [vmem:[%s1 + $0x9e0] sm:$0xf]
    %v732 = vld [vmem:[%s1 + $0x9e4] sm:$0xf]
    %v733 = vld [vmem:[%s1 + $0x9e8] sm:$0xf]
    %v734 = vld [vmem:[%s1 + $0x9ec] sm:$0xf]
    %v735 = vld [vmem:[%s1 + $0x9f0] sm:$0xf]
    %v736 = vld [vmem:[%s1 + $0x9f4] sm:$0xf]
    %v737 = vld [vmem:[%s1 + $0x9f8] sm:$0xf]
    %v738 = vld [vmem:[%s1 + $0x9fc] sm:$0xf]
    %v739 = vld [vmem:[%s1 + $0xa00] sm:$0xf]
    %v740 = vld [vmem:[%s1 + $0xa04] sm:$0xf]
    %v741 = vld [vmem:[%s1 + $0xa08] sm:$0xf]
    %v742 = vld [vmem:[%s1 + $0xa0c] sm:$0xf]
    %v743 = vld [vmem:[%s1 + $0xa10] sm:$0xf]
    %v744 = vld [vmem:[%s1 + $0xa14] sm:$0xf]
    %v745 = vld [vmem:[%s1 + $0xa18] sm:$0xf]
    %v746 = vld [vmem:[%s1 + $0xa1c] sm:$0xf]
    %v747 = vld [vmem:[%s1 + $0xa20] sm:$0xf]
    %v748 = vld [vmem:[%s1 + $0xa24] sm:$0xf]
    %v749 = vld [vmem:[%s1 + $0xa28] sm:$0xf]
    %v750 = vld [vmem:[%s1 + $0xa2c] sm:$0xf]
    %v751 = vld [vmem:[%s1 + $0xa30] sm:$0xf]
    %v752 = vld [vmem:[%s1 + $0xa34] sm:$0xf]
    %v753 = vld [vmem:[%s1 + $0xa38] sm:$0xf]
    %v754 = vld [vmem:[%s1 + $0xa3c] sm:$0xf]
    %v755 = vld [vmem:[%s1 + $0xa40] sm:$0xf]
    %v756 = vld [vmem:[%s1 + $0xa44] sm:$0xf]
    %v757 = vld [vmem:[%s1 + $0xa48] sm:$0xf]
    %v758 = vld [vmem:[%s1 + $0xa4c] sm:$0xf]
    %v759 = vld [vmem:[%s1 + $0xa50] sm:$0xf]
    %v760 = vld [vmem:[%s1 + $0xa54] sm:$0xf]
    %v761 = vld [vmem:[%s1 + $0xa58] sm:$0xf]
    %v762 = vld [vmem:[%s1 + $0xa5c] sm:$0xf]
    %v763 = vld [vmem:[%s1 + $0xa60] sm:$0xf]
    %v764 = vld [vmem:[%s1 + $0xa64] sm:$0xf]
    %v765 = vld [vmem:[%s1 + $0xa68] sm:$0xf]
    %v766 = vld [vmem:[%s1 + $0xa6c] sm:$0xf]
    %v767 = vld [vmem:[%s1 + $0xa70] sm:$0xf]
    %v768 = vld [vmem:[%s1 + $0xa74] sm:$0xf]
    %v769 = vld [vmem:[%s1 + $0xa78] sm:$0xf]
    %v770 = vld [vmem:[%s1 + $0xa7c] sm:$0xf]
    %v771 = vld [vmem:[%s1 + $0xa80] sm:$0xf]
    %v772 = vld [vmem:[%s1 + $0xa84] sm:$0xf]
    %v773 = vld [vmem:[%s1 + $0xa88] sm:$0xf]
    %v774 = vld [vmem:[%s1 + $0xa8c] sm:$0xf]
    %v775 = vld [vmem:[%s1 + $0xa90] sm:$0xf]
    %v776 = vld [vmem:[%s1 + $0xa94] sm:$0xf]
    %v777 = vld [vmem:[%s1 + $0xa98] sm:$0xf]
    %v778 = vld [vmem:[%s1 + $0xa9c] sm:$0xf]
    %v779 = vld [vmem:[%s1 + $0xaa0] sm:$0xf]
    %v780 = vld [vmem:[%s1 + $0xaa4] sm:$0xf]
    %v781 = vld [vmem:[%s1 + $0xaa8] sm:$0xf]
    %v782 = vld [vmem:[%s1 + $0xaac] sm:$0xf]
    %v783 = vld [vmem:[%s1 + $0xab0] sm:$0xf]
    %v784 = vld [vmem:[%s1 + $0xab4] sm:$0xf]
    %v785 = vld [vmem:[%s1 + $0xab8] sm:$0xf]
    %v786 = vld [vmem:[%s1 + $0xabc] sm:$0xf]
    %v787 = vld [vmem:[%s1 + $0xac0] sm:$0xf]
    %v788 = vld [vmem:[%s1 + $0xac4] sm:$0xf]
    %v789 = vld [vmem:[%s1 + $0xac8] sm:$0xf]
    %v790 = vld [vmem:[%s1 + $0xacc] sm:$0xf]
    %v791 = vld [vmem:[%s1 + $0xad0] sm:$0xf]
    %v792 = vld [vmem:[%s1 + $0xad4] sm:$0xf]
    %v793 = vld [vmem:[%s1 + $0xad8] sm:$0xf]
    %v794 = vld [vmem:[%s1 + $0xadc] sm:$0xf]
    %v795 = vld [vmem:[%s1 + $0xae0] sm:$0xf]
    %v796 = vld [vmem:[%s1 + $0xae4] sm:$0xf]
    %v797 = vld [vmem:[%s1 + $0xae8] sm:$0xf]
    %v798 = vld [vmem:[%s1 + $0xaec] sm:$0xf]
    %v799 = vld [vmem:[%s1 + $0xaf0] sm:$0xf]
    %v800 = vld [vmem:[%s1 + $0xaf4] sm:$0xf]
    %v801 = vld [vmem:[%s1 + $0xaf8] sm:$0xf]
    %v802 = vld [vmem:[%s1 + $0xafc] sm:$0xf]
    %v803 = vld [vmem:[%s1 + $0xb00] sm:$0xf]
    %v804 = vld [vmem:[%s1 + $0xb04] sm:$0xf]
    %v805 = vld [vmem:[%s1 + $0xb08] sm:$0xf]
    %v806 = vld [vmem:[%s1 + $0xb0c] sm:$0xf]
    %v807 = vld [vmem:[%s1 + $0xb10] sm:$0xf]
    %v808 = vld [vmem:[%s1 + $0xb14] sm:$0xf]
    %v809 = vld [vmem:[%s1 + $0xb18] sm:$0xf]
    %v810 = vld [vmem:[%s1 + $0xb1c] sm:$0xf]
    %v811 = vld [vmem:[%s1 + $0xb20] sm:$0xf]
    %v812 = vld [vmem:[%s1 + $0xb24] sm:$0xf]
    %v813 = vld [vmem:[%s1 + $0xb28] sm:$0xf]
    %v814 = vld [vmem:[%s1 + $0xb2c] sm:$0xf]
    %v815 = vld [vmem:[%s1 + $0xb30] sm:$0xf]
    %v816 = vld [vmem:[%s1 + $0xb34] sm:$0xf]
    %v817 = vld [vmem:[%s1 + $0xb38] sm:$0xf]
    %v818 = vld [vmem:[%s1 + $0xb3c] sm:$0xf]
    %v819 = vld [vmem:[%s1 + $0xb40] sm:$0xf]
    %v820 = vld [vmem:[%s1 + $0xb44] sm:$0xf]
    %v821 = vld [vmem:[%s1 + $0xb48] sm:$0xf]
    %v822 = vld [vmem:[%s1 + $0xb4c] sm:$0xf]
    %v823 = vld [vmem:[%s1 + $0xb50] sm:$0xf]
    %v824 = vld [vmem:[%s1 + $0xb54] sm:$0xf]
    %v825 = vld [vmem:[%s1 + $0xb58] sm:$0xf]
    %v826 = vld [vmem:[%s1 + $0xb5c] sm:$0xf]
    %v827 = vld [vmem:[%s1 + $0xb60] sm:$0xf]
    %v828 = vld [vmem:[%s1 + $0xb64] sm:$0xf]
    %v829 = vld [vmem:[%s1 + $0xb68] sm:$0xf]
    %v830 = vld [vmem:[%s1 + $0xb6c] sm:$0xf]
    %v831 = vld [vmem:[%s1 + $0xb70] sm:$0xf]
    %v832 = vld [vmem:[%s1 + $0xb74] sm:$0xf]
    %v833 = vld [vmem:[%s1 + $0xb78] sm:$0xf]
    %v834 = vld [vmem:[%s1 + $0xb7c] sm:$0xf]
    %v835 = vld [vmem:[%s1 + $0xb80] sm:$0xf]
    %v836 = vld [vmem:[%s1 + $0xb84] sm:$0xf]
    %v837 = vld [vmem:[%s1 + $0xb88] sm:$0xf]
    %v838 = vld [vmem:[%s1 + $0xb8c] sm:$0xf]
    %v839 = vld [vmem:[%s1 + $0xb90] sm:$0xf]
    %v840 = vld [vmem:[%s1 + $0xb94] sm:$0xf]
    %v841 = vld [vmem:[%s1 + $0xb98] sm:$0xf]
    %v842 = vld [vmem:[%s1 + $0xb9c] sm:$0xf]
    %v843 = vld [vmem:[%s1 + $0xba0] sm:$0xf]
    %v844 = vld [vmem:[%s1 + $0xba4] sm:$0xf]
    %v845 = vld [vmem:[%s1 + $0xba8] sm:$0xf]
    %v846 = vld [vmem:[%s1 + $0xbac] sm:$0xf]
    %v847 = vld [vmem:[%s1 + $0xbb0] sm:$0xf]
    %v848 = vld [vmem:[%s1 + $0xbb4] sm:$0xf]
    %v849 = vld [vmem:[%s1 + $0xbb8] sm:$0xf]
    %v850 = vld [vmem:[%s1 + $0xbbc] sm:$0xf]
    %v851 = vld [vmem:[%s1 + $0xbc0] sm:$0xf]
    %v852 = vld [vmem:[%s1 + $0xbc4] sm:$0xf]
    %v853 = vld [vmem:[%s1 + $0xbc8] sm:$0xf]
    %v854 = vld [vmem:[%s1 + $0xbcc] sm:$0xf]
    %v855 = vld [vmem:[%s1 + $0xbd0] sm:$0xf]
    %v856 = vld [vmem:[%s1 + $0xbd4] sm:$0xf]
    %v857 = vld [vmem:[%s1 + $0xbd8] sm:$0xf]
    %v858 = vld [vmem:[%s1 + $0xbdc] sm:$0xf]
    %v859 = vld [vmem:[%s1 + $0xbe0] sm:$0xf]
    %v860 = vld [vmem:[%s1 + $0xbe4] sm:$0xf]
    %v861 = vld [vmem:[%s1 + $0xbe8] sm:$0xf]
    %v862 = vld [vmem:[%s1 + $0xbec] sm:$0xf]
    %v863 = vld [vmem:[%s1 + $0xbf0] sm:$0xf]
    %v864 = vld [vmem:[%s1 + $0xbf4] sm:$0xf]
    %v865 = vld [vmem:[%s1 + $0xbf8] sm:$0xf]
    %v866 = vld [vmem:[%s1 + $0xbfc] sm:$0xf]
    %v867 = vld [vmem:[%s1 + $0xc00] sm:$0xf]
    %v868 = vld [vmem:[%s1 + $0xc04] sm:$0xf]
    %v869 = vld [vmem:[%s1 + $0xc08] sm:$0xf]
    %v870 = vld [vmem:[%s1 + $0xc0c] sm:$0xf]
    %v871 = vld [vmem:[%s1 + $0xc10] sm:$0xf]
    %v872 = vld [vmem:[%s1 + $0xc14] sm:$0xf]
    %v873 = vld [vmem:[%s1 + $0xc18] sm:$0xf]
    %v874 = vld [vmem:[%s1 + $0xc1c] sm:$0xf]
    %v875 = vld [vmem:[%s1 + $0xc20] sm:$0xf]
    %v876 = vld [vmem:[%s1 + $0xc24] sm:$0xf]
    %v877 = vld [vmem:[%s1 + $0xc28] sm:$0xf]
    %v878 = vld [vmem:[%s1 + $0xc2c] sm:$0xf]
    %v879 = vld [vmem:[%s1 + $0xc30] sm:$0xf]
    %v880 = vld [vmem:[%s1 + $0xc34] sm:$0xf]
    %v881 = vld [vmem:[%s1 + $0xc38] sm:$0xf]
    %v882 = vld [vmem:[%s1 + $0xc3c] sm:$0xf]
    %v883 = vld [vmem:[%s1 + $0xc40] sm:$0xf]
    %v884 = vld [vmem:[%s1 + $0xc44] sm:$0xf]
    %v885 = vld [vmem:[%s1 + $0xc48] sm:$0xf]
    %v886 = vld [vmem:[%s1 + $0xc4c] sm:$0xf]
    %v887 = vld [vmem:[%s1 + $0xc50] sm:$0xf]
    %v888 = vld [vmem:[%s1 + $0xc54] sm:$0xf]
    %v889 = vld [vmem:[%s1 + $0xc58] sm:$0xf]
    %v890 = vld [vmem:[%s1 + $0xc5c] sm:$0xf]
    %v891 = vld [vmem:[%s1 + $0xc60] sm:$0xf]
    %v892 = vld [vmem:[%s1 + $0xc64] sm:$0xf]
    %v893 = vld [vmem:[%s1 + $0xc68] sm:$0xf]
    %v894 = vld [vmem:[%s1 + $0xc6c] sm:$0xf]
    %v895 = vld [vmem:[%s1 + $0xc70] sm:$0xf]
    %v896 = vld [vmem:[%s1 + $0xc74] sm:$0xf]
    %v897 = vld [vmem:[%s1 + $0xc78] sm:$0xf]
    %v898 = vld [vmem:[%s1 + $0xc7c] sm:$0xf]
    %v899 = vld [vmem:[%s1 + $0xc80] sm:$0xf]
    %v900 = vld [vmem:[%s1 + $0xc84] sm:$0xf]
    %v901 = vld [vmem:[%s1 + $0xc88] sm:$0xf]
    %v902 = vld [vmem:[%s1 + $0xc8c] sm:$0xf]
    %v903 = vld [vmem:[%s1 + $0xc90] sm:$0xf]
    %v904 = vld [vmem:[%s1 + $0xc94] sm:$0xf]
    %v905 = vld [vmem:[%s1 + $0xc98] sm:$0xf]
    %v906 = vld [vmem:[%s1 + $0xc9c] sm:$0xf]
    %v907 = vld [vmem:[%s1 + $0xca0] sm:$0xf]
    %v908 = vld [vmem:[%s1 + $0xca4] sm:$0xf]
    %v909 = vld [vmem:[%s1 + $0xca8] sm:$0xf]
    %v910 = vld [vmem:[%s1 + $0xcac] sm:$0xf]
    %v911 = vld [vmem:[%s1 + $0xcb0] sm:$0xf]
    %v912 = vld [vmem:[%s1 + $0xcb4] sm:$0xf]
    %v913 = vld [vmem:[%s1 + $0xcb8] sm:$0xf]
    %v914 = vld [vmem:[%s1 + $0xcbc] sm:$0xf]
    %v915 = vld [vmem:[%s1 + $0xcc0] sm:$0xf]
    %v916 = vld [vmem:[%s1 + $0xcc4] sm:$0xf]
    %v917 = vld [vmem:[%s1 + $0xcc8] sm:$0xf]
    %v918 = vld [vmem:[%s1 + $0xccc] sm:$0xf]
    %v919 = vld [vmem:[%s1 + $0xcd0] sm:$0xf]
    %v920 = vld [vmem:[%s1 + $0xcd4] sm:$0xf]
    %v921 = vld [vmem:[%s1 + $0xcd8] sm:$0xf]
    %v922 = vld [vmem:[%s1 + $0xcdc] sm:$0xf]
    %v923 = vld [vmem:[%s1 + $0xce0] sm:$0xf]
    %v924 = vld [vmem:[%s1 + $0xce4] sm:$0xf]
    %v925 = vld [vmem:[%s1 + $0xce8] sm:$0xf]
    %v926 = vld [vmem:[%s1 + $0xcec] sm:$0xf]
    %v927 = vld [vmem:[%s1 + $0xcf0] sm:$0xf]
    %v928 = vld [vmem:[%s1 + $0xcf4] sm:$0xf]
    %v929 = vld [vmem:[%s1 + $0xcf8] sm:$0xf]
    %v930 = vld [vmem:[%s1 + $0xcfc] sm:$0xf]
    %v931 = vld [vmem:[%s1 + $0xd00] sm:$0xf]
    %v932 = vld [vmem:[%s1 + $0xd04] sm:$0xf]
    %v933 = vld [vmem:[%s1 + $0xd08] sm:$0xf]
    %v934 = vld [vmem:[%s1 + $0xd0c] sm:$0xf]
    %v935 = vld [vmem:[%s1 + $0xd10] sm:$0xf]
    %v936 = vld [vmem:[%s1 + $0xd14] sm:$0xf]
    %v937 = vld [vmem:[%s1 + $0xd18] sm:$0xf]
    %v938 = vld [vmem:[%s1 + $0xd1c] sm:$0xf]
    %v939 = vld [vmem:[%s1 + $0xd20] sm:$0xf]
    %v940 = vld [vmem:[%s1 + $0xd24] sm:$0xf]
    %v941 = vld [vmem:[%s1 + $0xd28] sm:$0xf]
    %v942 = vld [vmem:[%s1 + $0xd2c] sm:$0xf]
    %v943 = vld [vmem:[%s1 + $0xd30] sm:$0xf]
    %v944 = vld [vmem:[%s1 + $0xd34] sm:$0xf]
    %v945 = vld [vmem:[%s1 + $0xd38] sm:$0xf]
    %v946 = vld [vmem:[%s1 + $0xd3c] sm:$0xf]
    %v947 = vld [vmem:[%s1 + $0xd40] sm:$0xf]
    %v948 = vld [vmem:[%s1 + $0xd44] sm:$0xf]
    %v949 = vld [vmem:[%s1 + $0xd48] sm:$0xf]
    %v950 = vld [vmem:[%s1 + $0xd4c] sm:$0xf]
    %v951 = vld [vmem:[%s1 + $0xd50] sm:$0xf]
    %v952 = vld [vmem:[%s1 + $0xd54] sm:$0xf]
    %v953 = vld [vmem:[%s1 + $0xd58] sm:$0xf]
    %v954 = vld [vmem:[%s1 + $0xd5c] sm:$0xf]
    %v955 = vld [vmem:[%s1 + $0xd60] sm:$0xf]
    %v956 = vld [vmem:[%s1 + $0xd64] sm:$0xf]
    %v957 = vld [vmem:[%s1 + $0xd68] sm:$0xf]
    %v958 = vld [vmem:[%s1 + $0xd6c] sm:$0xf]
    %v959 = vld [vmem:[%s1 + $0xd70] sm:$0xf]
    %v960 = vld [vmem:[%s1 + $0xd74] sm:$0xf]
    %v961 = vld [vmem:[%s1 + $0xd78] sm:$0xf]
    %v962 = vld [vmem:[%s1 + $0xd7c] sm:$0xf]
    %v963 = vld [vmem:[%s1 + $0xd80] sm:$0xf]
    %v964 = vld [vmem:[%s1 + $0xd84] sm:$0xf]
    %v965 = vld [vmem:[%s1 + $0xd88] sm:$0xf]
    %v966 = vld [vmem:[%s1 + $0xd8c] sm:$0xf]
    %v967 = vld [vmem:[%s1 + $0xd90] sm:$0xf]
    %v968 = vld [vmem:[%s1 + $0xd94] sm:$0xf]
    %v969 = vld [vmem:[%s1 + $0xd98] sm:$0xf]
    %v970 = vld [vmem:[%s1 + $0xd9c] sm:$0xf]
    %v971 = vld [vmem:[%s1 + $0xda0] sm:$0xf]
    %v972 = vld [vmem:[%s1 + $0xda4] sm:$0xf]
    %v973 = vld [vmem:[%s1 + $0xda8] sm:$0xf]
    %v974 = vld [vmem:[%s1 + $0xdac] sm:$0xf]
    %v975 = vld [vmem:[%s1 + $0xdb0] sm:$0xf]
    %v976 = vld [vmem:[%s1 + $0xdb4] sm:$0xf]
    %v977 = vld [vmem:[%s1 + $0xdb8] sm:$0xf]
    %v978 = vld [vmem:[%s1 + $0xdbc] sm:$0xf]
    %v979 = vld [vmem:[%s1 + $0xdc0] sm:$0xf]
    %v980 = vld [vmem:[%s1 + $0xdc4] sm:$0xf]
    %v981 = vld [vmem:[%s1 + $0xdc8] sm:$0xf]
    %v982 = vld [vmem:[%s1 + $0xdcc] sm:$0xf]
    %v983 = vld [vmem:[%s1 + $0xdd0] sm:$0xf]
    %v984 = vld [vmem:[%s1 + $0xdd4] sm:$0xf]
    %v985 = vld [vmem:[%s1 + $0xdd8] sm:$0xf]
    %v986 = vld [vmem:[%s1 + $0xddc] sm:$0xf]
    %v987 = vld [vmem:[%s1 + $0xde0] sm:$0xf]
    %v988 = vld [vmem:[%s1 + $0xde4] sm:$0xf]
    %v989 = vld [vmem:[%s1 + $0xde8] sm:$0xf]
    %v990 = vld [vmem:[%s1 + $0xdec] sm:$0xf]
    %v991 = vld [vmem:[%s1 + $0xdf0] sm:$0xf]
    %v992 = vld [vmem:[%s1 + $0xdf4] sm:$0xf]
    %v993 = vld [vmem:[%s1 + $0xdf8] sm:$0xf]
    %v994 = vld [vmem:[%s1 + $0xdfc] sm:$0xf]
    %v995 = vld [vmem:[%s1 + $0xe00] sm:$0xf]
    %v996 = vld [vmem:[%s1 + $0xe04] sm:$0xf]
    %v997 = vld [vmem:[%s1 + $0xe08] sm:$0xf]
    %v998 = vld [vmem:[%s1 + $0xe0c] sm:$0xf]
    %v999 = vld [vmem:[%s1 + $0xe10] sm:$0xf]
    %v1000 = vld [vmem:[%s1 + $0xe14] sm:$0xf]
    %v1001 = vld [vmem:[%s1 + $0xe18] sm:$0xf]
    %v1002 = vld [vmem:[%s1 + $0xe1c] sm:$0xf]
    %v1003 = vld [vmem:[%s1 + $0xe20] sm:$0xf]
    %v1004 = vld [vmem:[%s1 + $0xe24] sm:$0xf]
    %v1005 = vld [vmem:[%s1 + $0xe28] sm:$0xf]
    %v1006 = vld [vmem:[%s1 + $0xe2c] sm:$0xf]
    %v1007 = vld [vmem:[%s1 + $0xe30] sm:$0xf]
    %v1008 = vld [vmem:[%s1 + $0xe34] sm:$0xf]
    %v1009 = vld [vmem:[%s1 + $0xe38] sm:$0xf]
    %v1010 = vld [vmem:[%s1 + $0xe3c] sm:$0xf]
    %v1011 = vld [vmem:[%s1 + $0xe40] sm:$0xf]
    %v1012 = vld [vmem:[%s1 + $0xe44] sm:$0xf]
    %v1013 = vld [vmem:[%s1 + $0xe48] sm:$0xf]
    %v1014 = vld [vmem:[%s1 + $0xe4c] sm:$0xf]
    %v1015 = vld [vmem:[%s1 + $0xe50] sm:$0xf]
    %v1016 = vld [vmem:[%s1 + $0xe54] sm:$0xf]
    %v1017 = vld [vmem:[%s1 + $0xe58] sm:$0xf]
    %v1018 = vld [vmem:[%s1 + $0xe5c] sm:$0xf]
    %v1019 = vld [vmem:[%s1 + $0xe60] sm:$0xf]
    %v1020 = vld [vmem:[%s1 + $0xe64] sm:$0xf]
    %v1021 = vld [vmem:[%s1 + $0xe68] sm:$0xf]
    %v1022 = vld [vmem:[%s1 + $0xe6c] sm:$0xf]
    %v1023 = vld [vmem:[%s1 + $0xe70] sm:$0xf]
    %v1024 = vld [vmem:[%s1 + $0xe74] sm:$0xf]
    %v1025 = vld [vmem:[%s1 + $0xe78] sm:$0xf]
    %v1026 = vld [vmem:[%s1 + $0xe7c] sm:$0xf]
    %v1027 = vld [vmem:[%s1 + $0xe80] sm:$0xf]
    %v1028 = vld [vmem:[%s1 + $0xe84] sm:$0xf]
    %v1029 = vld [vmem:[%s1 + $0xe88] sm:$0xf]
    %v1030 = vld [vmem:[%s1 + $0xe8c] sm:$0xf]
    %v1031 = vld [vmem:[%s1 + $0xe90] sm:$0xf]
    %v1032 = vld [vmem:[%s1 + $0xe94] sm:$0xf]
    %v1033 = vld [vmem:[%s1 + $0xe98] sm:$0xf]
    %v1034 = vld [vmem:[%s1 + $0xe9c] sm:$0xf]
    %v1035 = vld [vmem:[%s1 + $0xea0] sm:$0xf]
    %v1036 = vld [vmem:[%s1 + $0xea4] sm:$0xf]
    %v1037 = vld [vmem:[%s1 + $0xea8] sm:$0xf]
    %v1038 = vld [vmem:[%s1 + $0xeac] sm:$0xf]
    %v1039 = vld [vmem:[%s1 + $0xeb0] sm:$0xf]
    %v1040 = vld [vmem:[%s1 + $0xeb4] sm:$0xf]
    %v1041 = vld [vmem:[%s1 + $0xeb8] sm:$0xf]
    %v1042 = vld [vmem:[%s1 + $0xebc] sm:$0xf]
    %v1043 = vld [vmem:[%s1 + $0xec0] sm:$0xf]
    %v1044 = vld [vmem:[%s1 + $0xec4] sm:$0xf]
    %v1045 = vld [vmem:[%s1 + $0xec8] sm:$0xf]
    %v1046 = vld [vmem:[%s1 + $0xecc] sm:$0xf]
    %v1047 = vld [vmem:[%s1 + $0xed0] sm:$0xf]
    %v1048 = vld [vmem:[%s1 + $0xed4] sm:$0xf]
    %v1049 = vld [vmem:[%s1 + $0xed8] sm:$0xf]
    %v1050 = vld [vmem:[%s1 + $0xedc] sm:$0xf]
    %v1051 = vld [vmem:[%s1 + $0xee0] sm:$0xf]
    %v1052 = vld [vmem:[%s1 + $0xee4] sm:$0xf]
    %v1053 = vld [vmem:[%s1 + $0xee8] sm:$0xf]
    %v1054 = vld [vmem:[%s1 + $0xeec] sm:$0xf]
    %v1055 = vld [vmem:[%s1 + $0xef0] sm:$0xf]
    %v1056 = vld [vmem:[%s1 + $0xef4] sm:$0xf]
    %v1057 = vld [vmem:[%s1 + $0xef8] sm:$0xf]
    %v1058 = vld [vmem:[%s1 + $0xefc] sm:$0xf]
    %v1059 = vld [vmem:[%s1 + $0xf00] sm:$0xf]
    %v1060 = vld [vmem:[%s1 + $0xf04] sm:$0xf]
    %v1061 = vld [vmem:[%s1 + $0xf08] sm:$0xf]
    %v1062 = vld [vmem:[%s1 + $0xf0c] sm:$0xf]
    %v1063 = vld [vmem:[%s1 + $0xf10] sm:$0xf]
    %v1064 = vld [vmem:[%s1 + $0xf14] sm:$0xf]
    %v1065 = vld [vmem:[%s1 + $0xf18] sm:$0xf]
    %v1066 = vld [vmem:[%s1 + $0xf1c] sm:$0xf]
    %v1067 = vld [vmem:[%s1 + $0xf20] sm:$0xf]
    %v1068 = vld [vmem:[%s1 + $0xf24] sm:$0xf]
    %v1069 = vld [vmem:[%s1 + $0xf28] sm:$0xf]
    %v1070 = vld [vmem:[%s1 + $0xf2c] sm:$0xf]
    %v1071 = vld [vmem:[%s1 + $0xf30] sm:$0xf]
    %v1072 = vld [vmem:[%s1 + $0xf34] sm:$0xf]
    %v1073 = vld [vmem:[%s1 + $0xf38] sm:$0xf]
    %v1074 = vld [vmem:[%s1 + $0xf3c] sm:$0xf]
    %v1075 = vld [vmem:[%s1 + $0xf40] sm:$0xf]
    %v1076 = vld [vmem:[%s1 + $0xf44] sm:$0xf]
    %v1077 = vld [vmem:[%s1 + $0xf48] sm:$0xf]
    %v1078 = vld [vmem:[%s1 + $0xf4c] sm:$0xf]
    %v1079 = vld [vmem:[%s1 + $0xf50] sm:$0xf]
    %v1080 = vld [vmem:[%s1 + $0xf54] sm:$0xf]
    %v1081 = vld [vmem:[%s1 + $0xf58] sm:$0xf]
    %v1082 = vld [vmem:[%s1 + $0xf5c] sm:$0xf]
    %v1083 = vld [vmem:[%s1 + $0xf60] sm:$0xf]
    %v1084 = vld [vmem:[%s1 + $0xf64] sm:$0xf]
    %v1085 = vld [vmem:[%s1 + $0xf68] sm:$0xf]
    %v1086 = vld [vmem:[%s1 + $0xf6c] sm:$0xf]
    %v1087 = vld [vmem:[%s1 + $0xf70] sm:$0xf]
    %v1088 = vld [vmem:[%s1 + $0xf74] sm:$0xf]
    %v1089 = vld [vmem:[%s1 + $0xf78] sm:$0xf]
    %v1090 = vld [vmem:[%s1 + $0xf7c] sm:$0xf]
    %v1091 = vld [vmem:[%s1 + $0xf80] sm:$0xf]
    %v1092 = vld [vmem:[%s1 + $0xf84] sm:$0xf]
    %v1093 = vld [vmem:[%s1 + $0xf88] sm:$0xf]
    %v1094 = vld [vmem:[%s1 + $0xf8c] sm:$0xf]
    %v1095 = vld [vmem:[%s1 + $0xf90] sm:$0xf]
    %v1096 = vld [vmem:[%s1 + $0xf94] sm:$0xf]
    %v1097 = vld [vmem:[%s1 + $0xf98] sm:$0xf]
    %v1098 = vld [vmem:[%s1 + $0xf9c] sm:$0xf]
    %v1099 = vld [vmem:[%s1 + $0xfa0] sm:$0xf]
    %v1100 = vld [vmem:[%s1 + $0xfa4] sm:$0xf]
    %v1101 = vld [vmem:[%s1 + $0xfa8] sm:$0xf]
    %v1102 = vld [vmem:[%s1 + $0xfac] sm:$0xf]
    %v1103 = vld [vmem:[%s1 + $0xfb0] sm:$0xf]
    %v1104 = vld [vmem:[%s1 + $0xfb4] sm:$0xf]
    %v1105 = vld [vmem:[%s1 + $0xfb8] sm:$0xf]
    %v1106 = vld [vmem:[%s1 + $0xfbc] sm:$0xf]
    %v1107 = vld [vmem:[%s1 + $0xfc0] sm:$0xf]
    %v1108 = vld [vmem:[%s1 + $0xfc4] sm:$0xf]
    %v1109 = vld [vmem:[%s1 + $0xfc8] sm:$0xf]
    %v1110 = vld [vmem:[%s1 + $0xfcc] sm:$0xf]
    %v1111 = vld [vmem:[%s1 + $0xfd0] sm:$0xf]
    %v1112 = vld [vmem:[%s1 + $0xfd4] sm:$0xf]
    %v1113 = vld [vmem:[%s1 + $0xfd8] sm:$0xf]
    %v1114 = vld [vmem:[%s1 + $0xfdc] sm:$0xf]
    %v1115 = vld [vmem:[%s1 + $0xfe0] sm:$0xf]
    %v1116 = vld [vmem:[%s1 + $0xfe4] sm:$0xf]
    %v1117 = vld [vmem:[%s1 + $0xfe8] sm:$0xf]
    %v1118 = vld [vmem:[%s1 + $0xfec] sm:$0xf]
    %v1119 = vld [vmem:[%s1 + $0xff0] sm:$0xf]
    %v1120 = vld [vmem:[%s1 + $0xff4] sm:$0xf]
    %v1121 = vld [vmem:[%s1 + $0xff8] sm:$0xf]
    %v1122 = vld [vmem:[%s1 + $0xffc] sm:$0xf]
    %v1123 = vld [vmem:[%s1 + $0x1000] sm:$0xf]
    %v1124 = vld [vmem:[%s1 + $0x1004] sm:$0xf]
    %v1125 = vld [vmem:[%s1 + $0x1008] sm:$0xf]
    %v1126 = vld [vmem:[%s1 + $0x100c] sm:$0xf]
    %v1127 = vld [vmem:[%s1 + $0x1010] sm:$0xf]
    %v1128 = vld [vmem:[%s1 + $0x1014] sm:$0xf]
    %v1129 = vld [vmem:[%s1 + $0x1018] sm:$0xf]
    %v1130 = vld [vmem:[%s1 + $0x101c] sm:$0xf]
    %v1131 = vld [vmem:[%s1 + $0x1020] sm:$0xf]
    %v1132 = vld [vmem:[%s1 + $0x1024] sm:$0xf]
    %v1133 = vld [vmem:[%s1 + $0x1028] sm:$0xf]
    %v1134 = vld [vmem:[%s1 + $0x102c] sm:$0xf]
    %v1135 = vld [vmem:[%s1 + $0x1030] sm:$0xf]
    %v1136 = vld [vmem:[%s1 + $0x1034] sm:$0xf]
    %v1137 = vld [vmem:[%s1 + $0x1038] sm:$0xf]
    %v1138 = vld [vmem:[%s1 + $0x103c] sm:$0xf]
    %v1139 = vld [vmem:[%s1 + $0x1040] sm:$0xf]
    %v1140 = vld [vmem:[%s1 + $0x1044] sm:$0xf]
    %v1141 = vld [vmem:[%s1 + $0x1048] sm:$0xf]
    %v1142 = vld [vmem:[%s1 + $0x104c] sm:$0xf]
    %v1143 = vld [vmem:[%s1 + $0x1050] sm:$0xf]
    %v1144 = vld [vmem:[%s1 + $0x1054] sm:$0xf]
    %v1145 = vld [vmem:[%s1 + $0x1058] sm:$0xf]
    %v1146 = vld [vmem:[%s1 + $0x105c] sm:$0xf]
    %v1147 = vld [vmem:[%s1 + $0x1060] sm:$0xf]
    %v1148 = vld [vmem:[%s1 + $0x1064] sm:$0xf]
    %v1149 = vld [vmem:[%s1 + $0x1068] sm:$0xf]
    %v1150 = vld [vmem:[%s1 + $0x106c] sm:$0xf]
    %v1151 = vld [vmem:[%s1 + $0x1070] sm:$0xf]
    %v1152 = vld [vmem:[%s1 + $0x1074] sm:$0xf]
    %v1153 = vld [vmem:[%s1 + $0x1078] sm:$0xf]
    %v1154 = vld [vmem:[%s1 + $0x107c] sm:$0xf]
    %v1155 = vld [vmem:[%s2] sm:$0x1]
    %v1157 = vperm.slane %v1155, 0
    %v1225 = vunpack.c.l.b16 %v33
    %v1226 = vunpack.c.h.b16 %v33
    %v1227 = vunpack.c.l.b16 %v34
    %v1228 = vunpack.c.h.b16 %v34
    %v1229 = vunpack.c.l.b16 %v35
    %v1230 = vunpack.c.h.b16 %v35
    %v1231 = vunpack.c.l.b16 %v36
    %v1232 = vunpack.c.h.b16 %v36
    %v1233 = vunpack.c.l.b16 %v37
    %v1234 = vunpack.c.h.b16 %v37
    %v1235 = vunpack.c.l.b16 %v38
    %v1236 = vunpack.c.h.b16 %v38
    %v1237 = vunpack.c.l.b16 %v39
    %v1238 = vunpack.c.h.b16 %v39
    %v1239 = vunpack.c.l.b16 %v40
    %v1240 = vunpack.c.h.b16 %v40
    %v1241 = vunpack.c.l.b16 %v41
    %v1242 = vunpack.c.h.b16 %v41
    %v1243 = vunpack.c.l.b16 %v42
    %v1244 = vunpack.c.h.b16 %v42
    %v1245 = vunpack.c.l.b16 %v43
    %v1246 = vunpack.c.h.b16 %v43
    %v1247 = vunpack.c.l.b16 %v44
    %v1248 = vunpack.c.h.b16 %v44
    %v1249 = vunpack.c.l.b16 %v45
    %v1250 = vunpack.c.h.b16 %v45
    %v1251 = vunpack.c.l.b16 %v46
    %v1252 = vunpack.c.h.b16 %v46
    %v1253 = vunpack.c.l.b16 %v47
    %v1254 = vunpack.c.h.b16 %v47
    %v1255 = vunpack.c.l.b16 %v48
    %v1256 = vunpack.c.h.b16 %v48
    %v1257 = vunpack.c.l.b16 %v49
    %v1258 = vunpack.c.h.b16 %v49
    %v1259 = vunpack.c.l.b16 %v50
    %v1260 = vunpack.c.h.b16 %v50
    %v1261 = vunpack.c.l.b16 %v51
    %v1262 = vunpack.c.h.b16 %v51
    %v1263 = vunpack.c.l.b16 %v52
    %v1264 = vunpack.c.h.b16 %v52
    %v1265 = vunpack.c.l.b16 %v53
    %v1266 = vunpack.c.h.b16 %v53
    %v1267 = vunpack.c.l.b16 %v54
    %v1268 = vunpack.c.h.b16 %v54
    %v1269 = vunpack.c.l.b16 %v55
    %v1270 = vunpack.c.h.b16 %v55
    %v1271 = vunpack.c.l.b16 %v56
    %v1272 = vunpack.c.h.b16 %v56
    %v1273 = vunpack.c.l.b16 %v57
    %v1274 = vunpack.c.h.b16 %v57
    %v1275 = vunpack.c.l.b16 %v58
    %v1276 = vunpack.c.h.b16 %v58
    %v1277 = vunpack.c.l.b16 %v59
    %v1278 = vunpack.c.h.b16 %v59
    %v1279 = vunpack.c.l.b16 %v60
    %v1280 = vunpack.c.h.b16 %v60
    %v1281 = vunpack.c.l.b16 %v61
    %v1282 = vunpack.c.h.b16 %v61
    %v1283 = vunpack.c.l.b16 %v62
    %v1284 = vunpack.c.h.b16 %v62
    %v1285 = vunpack.c.l.b16 %v63
    %v1286 = vunpack.c.h.b16 %v63
    %v1287 = vunpack.c.l.b16 %v64
    %v1288 = vunpack.c.h.b16 %v64
    %v1289 = vunpack.c.l.b16 %v65
    %v1290 = vunpack.c.h.b16 %v65
    %v1291 = vunpack.c.l.b16 %v66
    %v1292 = vunpack.c.h.b16 %v66
    %v1293 = vunpack.c.l.b16 %v67
    %v1294 = vunpack.c.h.b16 %v67
    %v1295 = vunpack.c.l.b16 %v68
    %v1296 = vunpack.c.h.b16 %v68
    %v1297 = vunpack.c.l.b16 %v69
    %v1298 = vunpack.c.h.b16 %v69
    %v1299 = vunpack.c.l.b16 %v70
    %v1300 = vunpack.c.h.b16 %v70
    %v1301 = vunpack.c.l.b16 %v71
    %v1302 = vunpack.c.h.b16 %v71
    %v1303 = vunpack.c.l.b16 %v72
    %v1304 = vunpack.c.h.b16 %v72
    %v1305 = vunpack.c.l.b16 %v73
    %v1306 = vunpack.c.h.b16 %v73
    %v1307 = vunpack.c.l.b16 %v74
    %v1308 = vunpack.c.h.b16 %v74
    %v1309 = vunpack.c.l.b16 %v75
    %v1310 = vunpack.c.h.b16 %v75
    %v1311 = vunpack.c.l.b16 %v76
    %v1312 = vunpack.c.h.b16 %v76
    %v1313 = vunpack.c.l.b16 %v77
    %v1314 = vunpack.c.h.b16 %v77
    %v1315 = vunpack.c.l.b16 %v78
    %v1316 = vunpack.c.h.b16 %v78
    %v1317 = vunpack.c.l.b16 %v79
    %v1318 = vunpack.c.h.b16 %v79
    %v1319 = vunpack.c.l.b16 %v80
    %v1320 = vunpack.c.h.b16 %v80
    %v1321 = vunpack.c.l.b16 %v81
    %v1322 = vunpack.c.h.b16 %v81
    %v1323 = vunpack.c.l.b16 %v82
    %v1324 = vunpack.c.h.b16 %v82
    %v1325 = vunpack.c.l.b16 %v83
    %v1326 = vunpack.c.h.b16 %v83
    %v1327 = vunpack.c.l.b16 %v84
    %v1328 = vunpack.c.h.b16 %v84
    %v1329 = vunpack.c.l.b16 %v85
    %v1330 = vunpack.c.h.b16 %v85
    %v1331 = vunpack.c.l.b16 %v86
    %v1332 = vunpack.c.h.b16 %v86
    %v1333 = vunpack.c.l.b16 %v87
    %v1334 = vunpack.c.h.b16 %v87
    %v1335 = vunpack.c.l.b16 %v88
    %v1336 = vunpack.c.h.b16 %v88
    %v1337 = vunpack.c.l.b16 %v89
    %v1338 = vunpack.c.h.b16 %v89
    %v1339 = vunpack.c.l.b16 %v90
    %v1340 = vunpack.c.h.b16 %v90
    %v1341 = vunpack.c.l.b16 %v91
    %v1342 = vunpack.c.h.b16 %v91
    %v1343 = vunpack.c.l.b16 %v92
    %v1344 = vunpack.c.h.b16 %v92
    %v1345 = vunpack.c.l.b16 %v93
    %v1346 = vunpack.c.h.b16 %v93
    %v1347 = vunpack.c.l.b16 %v94
    %v1348 = vunpack.c.h.b16 %v94
    %v1349 = vunpack.c.l.b16 %v95
    %v1350 = vunpack.c.h.b16 %v95
    %v1351 = vunpack.c.l.b16 %v96
    %v1352 = vunpack.c.h.b16 %v96
    %v1353 = vunpack.c.l.b16 %v97
    %v1354 = vunpack.c.h.b16 %v97
    %v1355 = vunpack.c.l.b16 %v98
    %v1356 = vunpack.c.h.b16 %v98
    %v1357 = vpack.c.b16 %v1291, %v1225
    %v1358 = vpack.c.b16 %v1292, %v1226
    %v1359 = vpack.c.b16 %v1293, %v1227
    %v1360 = vpack.c.b16 %v1294, %v1228
    %v1361 = vpack.c.b16 %v1295, %v1229
    %v1362 = vpack.c.b16 %v1296, %v1230
    %v1363 = vpack.c.b16 %v1297, %v1231
    %v1364 = vpack.c.b16 %v1298, %v1232
    %v1365 = vpack.c.b16 %v1299, %v1233
    %v1366 = vpack.c.b16 %v1300, %v1234
    %v1367 = vpack.c.b16 %v1301, %v1235
    %v1368 = vpack.c.b16 %v1302, %v1236
    %v1369 = vpack.c.b16 %v1303, %v1237
    %v1370 = vpack.c.b16 %v1304, %v1238
    %v1371 = vpack.c.b16 %v1305, %v1239
    %v1372 = vpack.c.b16 %v1306, %v1240
    %v1373 = vpack.c.b16 %v1307, %v1241
    %v1374 = vpack.c.b16 %v1308, %v1242
    %v1375 = vpack.c.b16 %v1309, %v1243
    %v1376 = vpack.c.b16 %v1310, %v1244
    %v1377 = vpack.c.b16 %v1311, %v1245
    %v1378 = vpack.c.b16 %v1312, %v1246
    %v1379 = vpack.c.b16 %v1313, %v1247
    %v1380 = vpack.c.b16 %v1314, %v1248
    %v1381 = vpack.c.b16 %v1315, %v1249
    %v1382 = vpack.c.b16 %v1316, %v1250
    %v1383 = vpack.c.b16 %v1317, %v1251
    %v1384 = vpack.c.b16 %v1318, %v1252
    %v1385 = vpack.c.b16 %v1319, %v1253
    %v1386 = vpack.c.b16 %v1320, %v1254
    %v1387 = vpack.c.b16 %v1321, %v1255
    %v1388 = vpack.c.b16 %v1322, %v1256
    %v1389 = vpack.c.b16 %v1323, %v1257
    %v1390 = vpack.c.b16 %v1324, %v1258
    %v1391 = vpack.c.b16 %v1325, %v1259
    %v1392 = vpack.c.b16 %v1326, %v1260
    %v1393 = vpack.c.b16 %v1327, %v1261
    %v1394 = vpack.c.b16 %v1328, %v1262
    %v1395 = vpack.c.b16 %v1329, %v1263
    %v1396 = vpack.c.b16 %v1330, %v1264
    %v1397 = vpack.c.b16 %v1331, %v1265
    %v1398 = vpack.c.b16 %v1332, %v1266
    %v1399 = vpack.c.b16 %v1333, %v1267
    %v1400 = vpack.c.b16 %v1334, %v1268
    %v1401 = vpack.c.b16 %v1335, %v1269
    %v1402 = vpack.c.b16 %v1336, %v1270
    %v1403 = vpack.c.b16 %v1337, %v1271
    %v1404 = vpack.c.b16 %v1338, %v1272
    %v1405 = vpack.c.b16 %v1339, %v1273
    %v1406 = vpack.c.b16 %v1340, %v1274
    %v1407 = vpack.c.b16 %v1341, %v1275
    %v1408 = vpack.c.b16 %v1342, %v1276
    %v1409 = vpack.c.b16 %v1343, %v1277
    %v1410 = vpack.c.b16 %v1344, %v1278
    %v1411 = vpack.c.b16 %v1345, %v1279
    %v1412 = vpack.c.b16 %v1346, %v1280
    %v1413 = vpack.c.b16 %v1347, %v1281
    %v1414 = vpack.c.b16 %v1348, %v1282
    %v1415 = vpack.c.b16 %v1349, %v1283
    %v1416 = vpack.c.b16 %v1350, %v1284
    %v1417 = vpack.c.b16 %v1351, %v1285
    %v1418 = vpack.c.b16 %v1352, %v1286
    %v1419 = vpack.c.b16 %v1353, %v1287
    %v1420 = vpack.c.b16 %v1354, %v1288
    %v1421 = vpack.c.b16 %v1355, %v1289
    %v1422 = vpack.c.b16 %v1356, %v1290
    %v2545 = vunpack.c.l.b16 %v99
    %v2546 = vunpack.c.l.b16 %v100
    %v2547 = vunpack.c.l.b16 %v101
    %v2548 = vunpack.c.l.b16 %v102
    %v2549 = vunpack.c.l.b16 %v103
    %v2550 = vunpack.c.l.b16 %v104
    %v2551 = vunpack.c.l.b16 %v105
    %v2552 = vunpack.c.l.b16 %v106
    %v2553 = vunpack.c.l.b16 %v107
    %v2554 = vunpack.c.l.b16 %v108
    %v2555 = vunpack.c.l.b16 %v109
    %v2556 = vunpack.c.l.b16 %v110
    %v2557 = vunpack.c.l.b16 %v111
    %v2558 = vunpack.c.l.b16 %v112
    %v2559 = vunpack.c.l.b16 %v113
    %v2560 = vunpack.c.l.b16 %v114
    %v2561 = vunpack.c.l.b16 %v115
    %v2562 = vunpack.c.l.b16 %v116
    %v2563 = vunpack.c.l.b16 %v117
    %v2564 = vunpack.c.l.b16 %v118
    %v2565 = vunpack.c.l.b16 %v119
    %v2566 = vunpack.c.l.b16 %v120
    %v2567 = vunpack.c.l.b16 %v121
    %v2568 = vunpack.c.l.b16 %v122
    %v2569 = vunpack.c.l.b16 %v123
    %v2570 = vunpack.c.l.b16 %v124
    %v2571 = vunpack.c.l.b16 %v125
    %v2572 = vunpack.c.l.b16 %v126
    %v2573 = vunpack.c.l.b16 %v127
    %v2574 = vunpack.c.l.b16 %v128
    %v2575 = vunpack.c.l.b16 %v129
    %v2576 = vunpack.c.l.b16 %v130
    %v2577 = vunpack.c.l.b16 %v131
    %v2578 = vunpack.c.l.b16 %v132
    %v2579 = vunpack.c.l.b16 %v133
    %v2580 = vunpack.c.l.b16 %v134
    %v2581 = vunpack.c.l.b16 %v135
    %v2582 = vunpack.c.l.b16 %v136
    %v2583 = vunpack.c.l.b16 %v137
    %v2584 = vunpack.c.l.b16 %v138
    %v2585 = vunpack.c.l.b16 %v139
    %v2586 = vunpack.c.l.b16 %v140
    %v2587 = vunpack.c.l.b16 %v141
    %v2588 = vunpack.c.l.b16 %v142
    %v2589 = vunpack.c.l.b16 %v143
    %v2590 = vunpack.c.l.b16 %v144
    %v2591 = vunpack.c.l.b16 %v145
    %v2592 = vunpack.c.l.b16 %v146
    %v2593 = vunpack.c.l.b16 %v147
    %v2594 = vunpack.c.l.b16 %v148
    %v2595 = vunpack.c.l.b16 %v149
    %v2596 = vunpack.c.l.b16 %v150
    %v2597 = vunpack.c.l.b16 %v151
    %v2598 = vunpack.c.l.b16 %v152
    %v2599 = vunpack.c.l.b16 %v153
    %v2600 = vunpack.c.l.b16 %v154
    %v2601 = vunpack.c.l.b16 %v155
    %v2602 = vunpack.c.l.b16 %v156
    %v2603 = vunpack.c.l.b16 %v157
    %v2604 = vunpack.c.l.b16 %v158
    %v2605 = vunpack.c.l.b16 %v159
    %v2606 = vunpack.c.l.b16 %v160
    %v2607 = vunpack.c.l.b16 %v161
    %v2608 = vunpack.c.l.b16 %v162
    %v2609 = vunpack.c.l.b16 %v163
    %v2610 = vunpack.c.l.b16 %v164
    %v2611 = vunpack.c.l.b16 %v165
    %v2612 = vunpack.c.l.b16 %v166
    %v2613 = vunpack.c.l.b16 %v167
    %v2614 = vunpack.c.l.b16 %v168
    %v2615 = vunpack.c.l.b16 %v169
    %v2616 = vunpack.c.l.b16 %v170
    %v2617 = vunpack.c.l.b16 %v171
    %v2618 = vunpack.c.l.b16 %v172
    %v2619 = vunpack.c.l.b16 %v173
    %v2620 = vunpack.c.l.b16 %v174
    %v2621 = vunpack.c.l.b16 %v175
    %v2622 = vunpack.c.l.b16 %v176
    %v2623 = vunpack.c.l.b16 %v177
    %v2624 = vunpack.c.l.b16 %v178
    %v2625 = vunpack.c.l.b16 %v179
    %v2626 = vunpack.c.l.b16 %v180
    %v2627 = vunpack.c.l.b16 %v181
    %v2628 = vunpack.c.l.b16 %v182
    %v2629 = vunpack.c.l.b16 %v183
    %v2630 = vunpack.c.l.b16 %v184
    %v2631 = vunpack.c.l.b16 %v185
    %v2632 = vunpack.c.l.b16 %v186
    %v2633 = vunpack.c.l.b16 %v187
    %v2634 = vunpack.c.l.b16 %v188
    %v2635 = vunpack.c.l.b16 %v189
    %v2636 = vunpack.c.l.b16 %v190
    %v2637 = vunpack.c.l.b16 %v191
    %v2638 = vunpack.c.l.b16 %v192
    %v2639 = vunpack.c.l.b16 %v193
    %v2640 = vunpack.c.l.b16 %v194
    %v2641 = vunpack.c.l.b16 %v195
    %v2642 = vunpack.c.l.b16 %v196
    %v2643 = vunpack.c.l.b16 %v197
    %v2644 = vunpack.c.l.b16 %v198
    %v2645 = vunpack.c.l.b16 %v199
    %v2646 = vunpack.c.l.b16 %v200
    %v2647 = vunpack.c.l.b16 %v201
    %v2648 = vunpack.c.l.b16 %v202
    %v2649 = vunpack.c.l.b16 %v203
    %v2650 = vunpack.c.l.b16 %v204
    %v2651 = vunpack.c.l.b16 %v205
    %v2652 = vunpack.c.l.b16 %v206
    %v2653 = vunpack.c.l.b16 %v207
    %v2654 = vunpack.c.l.b16 %v208
    %v2655 = vunpack.c.l.b16 %v209
    %v2656 = vunpack.c.l.b16 %v210
    %v2657 = vunpack.c.l.b16 %v211
    %v2658 = vunpack.c.l.b16 %v212
    %v2659 = vunpack.c.l.b16 %v213
    %v2660 = vunpack.c.l.b16 %v214
    %v2661 = vunpack.c.l.b16 %v215
    %v2662 = vunpack.c.l.b16 %v216
    %v2663 = vunpack.c.l.b16 %v217
    %v2664 = vunpack.c.l.b16 %v218
    %v2665 = vunpack.c.l.b16 %v219
    %v2666 = vunpack.c.l.b16 %v220
    %v2667 = vunpack.c.l.b16 %v221
    %v2668 = vunpack.c.l.b16 %v222
    %v2669 = vunpack.c.l.b16 %v223
    %v2670 = vunpack.c.l.b16 %v224
    %v2671 = vunpack.c.l.b16 %v225
    %v2672 = vunpack.c.l.b16 %v226
    %v2673 = vunpack.c.l.b16 %v227
    %v2674 = vunpack.c.l.b16 %v228
    %v2675 = vunpack.c.l.b16 %v229
    %v2676 = vunpack.c.l.b16 %v230
    %v2677 = vunpack.c.l.b16 %v231
    %v2678 = vunpack.c.l.b16 %v232
    %v2679 = vunpack.c.l.b16 %v233
    %v2680 = vunpack.c.l.b16 %v234
    %v2681 = vunpack.c.l.b16 %v235
    %v2682 = vunpack.c.l.b16 %v236
    %v2683 = vunpack.c.l.b16 %v237
    %v2684 = vunpack.c.l.b16 %v238
    %v2685 = vunpack.c.l.b16 %v239
    %v2686 = vunpack.c.l.b16 %v240
    %v2687 = vunpack.c.l.b16 %v241
    %v2688 = vunpack.c.l.b16 %v242
    %v2689 = vunpack.c.l.b16 %v243
    %v2690 = vunpack.c.l.b16 %v244
    %v2691 = vunpack.c.l.b16 %v245
    %v2692 = vunpack.c.l.b16 %v246
    %v2693 = vunpack.c.l.b16 %v247
    %v2694 = vunpack.c.l.b16 %v248
    %v2695 = vunpack.c.l.b16 %v249
    %v2696 = vunpack.c.l.b16 %v250
    %v2697 = vunpack.c.l.b16 %v251
    %v2698 = vunpack.c.l.b16 %v252
    %v2699 = vunpack.c.l.b16 %v253
    %v2700 = vunpack.c.l.b16 %v254
    %v2701 = vunpack.c.l.b16 %v255
    %v2702 = vunpack.c.l.b16 %v256
    %v2703 = vunpack.c.l.b16 %v257
    %v2704 = vunpack.c.l.b16 %v258
    %v2705 = vunpack.c.l.b16 %v259
    %v2706 = vunpack.c.l.b16 %v260
    %v2707 = vunpack.c.l.b16 %v261
    %v2708 = vunpack.c.l.b16 %v262
    %v2709 = vunpack.c.l.b16 %v263
    %v2710 = vunpack.c.l.b16 %v264
    %v2711 = vunpack.c.l.b16 %v265
    %v2712 = vunpack.c.l.b16 %v266
    %v2713 = vunpack.c.l.b16 %v267
    %v2714 = vunpack.c.l.b16 %v268
    %v2715 = vunpack.c.l.b16 %v269
    %v2716 = vunpack.c.l.b16 %v270
    %v2717 = vunpack.c.l.b16 %v271
    %v2718 = vunpack.c.l.b16 %v272
    %v2719 = vunpack.c.l.b16 %v273
    %v2720 = vunpack.c.l.b16 %v274
    %v2721 = vunpack.c.l.b16 %v275
    %v2722 = vunpack.c.l.b16 %v276
    %v2723 = vunpack.c.l.b16 %v277
    %v2724 = vunpack.c.l.b16 %v278
    %v2725 = vunpack.c.l.b16 %v279
    %v2726 = vunpack.c.l.b16 %v280
    %v2727 = vunpack.c.l.b16 %v281
    %v2728 = vunpack.c.l.b16 %v282
    %v2729 = vunpack.c.l.b16 %v283
    %v2730 = vunpack.c.l.b16 %v284
    %v2731 = vunpack.c.l.b16 %v285
    %v2732 = vunpack.c.l.b16 %v286
    %v2733 = vunpack.c.l.b16 %v287
    %v2734 = vunpack.c.l.b16 %v288
    %v2735 = vunpack.c.l.b16 %v289
    %v2736 = vunpack.c.l.b16 %v290
    %v2737 = vunpack.c.l.b16 %v291
    %v2738 = vunpack.c.l.b16 %v292
    %v2739 = vunpack.c.l.b16 %v293
    %v2740 = vunpack.c.l.b16 %v294
    %v2741 = vunpack.c.l.b16 %v295
    %v2742 = vunpack.c.l.b16 %v296
    %v2743 = vunpack.c.l.b16 %v297
    %v2744 = vunpack.c.l.b16 %v298
    %v2745 = vunpack.c.l.b16 %v299
    %v2746 = vunpack.c.l.b16 %v300
    %v2747 = vunpack.c.l.b16 %v301
    %v2748 = vunpack.c.l.b16 %v302
    %v2749 = vunpack.c.l.b16 %v303
    %v2750 = vunpack.c.l.b16 %v304
    %v2751 = vunpack.c.l.b16 %v305
    %v2752 = vunpack.c.l.b16 %v306
    %v2753 = vunpack.c.l.b16 %v307
    %v2754 = vunpack.c.l.b16 %v308
    %v2755 = vunpack.c.l.b16 %v309
    %v2756 = vunpack.c.l.b16 %v310
    %v2757 = vunpack.c.l.b16 %v311
    %v2758 = vunpack.c.l.b16 %v312
    %v2759 = vunpack.c.l.b16 %v313
    %v2760 = vunpack.c.l.b16 %v314
    %v2761 = vunpack.c.l.b16 %v315
    %v2762 = vunpack.c.l.b16 %v316
    %v2763 = vunpack.c.l.b16 %v317
    %v2764 = vunpack.c.l.b16 %v318
    %v2765 = vunpack.c.l.b16 %v319
    %v2766 = vunpack.c.l.b16 %v320
    %v2767 = vunpack.c.l.b16 %v321
    %v2768 = vunpack.c.l.b16 %v322
    %v2769 = vunpack.c.l.b16 %v323
    %v2770 = vunpack.c.l.b16 %v324
    %v2771 = vunpack.c.l.b16 %v325
    %v2772 = vunpack.c.l.b16 %v326
    %v2773 = vunpack.c.l.b16 %v327
    %v2774 = vunpack.c.l.b16 %v328
    %v2775 = vunpack.c.l.b16 %v329
    %v2776 = vunpack.c.l.b16 %v330
    %v2777 = vunpack.c.l.b16 %v331
    %v2778 = vunpack.c.l.b16 %v332
    %v2779 = vunpack.c.l.b16 %v333
    %v2780 = vunpack.c.l.b16 %v334
    %v2781 = vunpack.c.l.b16 %v335
    %v2782 = vunpack.c.l.b16 %v336
    %v2783 = vunpack.c.l.b16 %v337
    %v2784 = vunpack.c.l.b16 %v338
    %v2785 = vunpack.c.l.b16 %v339
    %v2786 = vunpack.c.l.b16 %v340
    %v2787 = vunpack.c.l.b16 %v341
    %v2788 = vunpack.c.l.b16 %v342
    %v2789 = vunpack.c.l.b16 %v343
    %v2790 = vunpack.c.l.b16 %v344
    %v2791 = vunpack.c.l.b16 %v345
    %v2792 = vunpack.c.l.b16 %v346
    %v2793 = vunpack.c.l.b16 %v347
    %v2794 = vunpack.c.l.b16 %v348
    %v2795 = vunpack.c.l.b16 %v349
    %v2796 = vunpack.c.l.b16 %v350
    %v2797 = vunpack.c.l.b16 %v351
    %v2798 = vunpack.c.l.b16 %v352
    %v2799 = vunpack.c.l.b16 %v353
    %v2800 = vunpack.c.l.b16 %v354
    %v2801 = vunpack.c.l.b16 %v355
    %v2802 = vunpack.c.l.b16 %v356
    %v2803 = vunpack.c.l.b16 %v357
    %v2804 = vunpack.c.l.b16 %v358
    %v2805 = vunpack.c.l.b16 %v359
    %v2806 = vunpack.c.l.b16 %v360
    %v2807 = vunpack.c.l.b16 %v361
    %v2808 = vunpack.c.l.b16 %v362
    %v2809 = vunpack.c.l.b16 %v363
    %v2810 = vunpack.c.l.b16 %v364
    %v2811 = vunpack.c.l.b16 %v365
    %v2812 = vunpack.c.l.b16 %v366
    %v2813 = vunpack.c.l.b16 %v367
    %v2814 = vunpack.c.l.b16 %v368
    %v2815 = vunpack.c.l.b16 %v369
    %v2816 = vunpack.c.l.b16 %v370
    %v2817 = vunpack.c.l.b16 %v371
    %v2818 = vunpack.c.l.b16 %v372
    %v2819 = vunpack.c.l.b16 %v373
    %v2820 = vunpack.c.l.b16 %v374
    %v2821 = vunpack.c.l.b16 %v375
    %v2822 = vunpack.c.l.b16 %v376
    %v2823 = vunpack.c.l.b16 %v377
    %v2824 = vunpack.c.l.b16 %v378
    %v2825 = vunpack.c.l.b16 %v379
    %v2826 = vunpack.c.l.b16 %v380
    %v2827 = vunpack.c.l.b16 %v381
    %v2828 = vunpack.c.l.b16 %v382
    %v2829 = vunpack.c.l.b16 %v383
    %v2830 = vunpack.c.l.b16 %v384
    %v2831 = vunpack.c.l.b16 %v385
    %v2832 = vunpack.c.l.b16 %v386
    %v2833 = vunpack.c.l.b16 %v387
    %v2834 = vunpack.c.l.b16 %v388
    %v2835 = vunpack.c.l.b16 %v389
    %v2836 = vunpack.c.l.b16 %v390
    %v2837 = vunpack.c.l.b16 %v391
    %v2838 = vunpack.c.l.b16 %v392
    %v2839 = vunpack.c.l.b16 %v393
    %v2840 = vunpack.c.l.b16 %v394
    %v2841 = vunpack.c.l.b16 %v395
    %v2842 = vunpack.c.l.b16 %v396
    %v2843 = vunpack.c.l.b16 %v397
    %v2844 = vunpack.c.l.b16 %v398
    %v2845 = vunpack.c.l.b16 %v399
    %v2846 = vunpack.c.l.b16 %v400
    %v2847 = vunpack.c.l.b16 %v401
    %v2848 = vunpack.c.l.b16 %v402
    %v2849 = vunpack.c.l.b16 %v403
    %v2850 = vunpack.c.l.b16 %v404
    %v2851 = vunpack.c.l.b16 %v405
    %v2852 = vunpack.c.l.b16 %v406
    %v2853 = vunpack.c.l.b16 %v407
    %v2854 = vunpack.c.l.b16 %v408
    %v2855 = vunpack.c.l.b16 %v409
    %v2856 = vunpack.c.l.b16 %v410
    %v2857 = vunpack.c.l.b16 %v411
    %v2858 = vunpack.c.l.b16 %v412
    %v2859 = vunpack.c.l.b16 %v413
    %v2860 = vunpack.c.l.b16 %v414
    %v2861 = vunpack.c.l.b16 %v415
    %v2862 = vunpack.c.l.b16 %v416
    %v2863 = vunpack.c.l.b16 %v417
    %v2864 = vunpack.c.l.b16 %v418
    %v2865 = vunpack.c.l.b16 %v419
    %v2866 = vunpack.c.l.b16 %v420
    %v2867 = vunpack.c.l.b16 %v421
    %v2868 = vunpack.c.l.b16 %v422
    %v2869 = vunpack.c.l.b16 %v423
    %v2870 = vunpack.c.l.b16 %v424
    %v2871 = vunpack.c.l.b16 %v425
    %v2872 = vunpack.c.l.b16 %v426
    %v2873 = vunpack.c.l.b16 %v427
    %v2874 = vunpack.c.l.b16 %v428
    %v2875 = vunpack.c.l.b16 %v429
    %v2876 = vunpack.c.l.b16 %v430
    %v2877 = vunpack.c.l.b16 %v431
    %v2878 = vunpack.c.l.b16 %v432
    %v2879 = vunpack.c.l.b16 %v433
    %v2880 = vunpack.c.l.b16 %v434
    %v2881 = vunpack.c.l.b16 %v435
    %v2882 = vunpack.c.l.b16 %v436
    %v2883 = vunpack.c.l.b16 %v437
    %v2884 = vunpack.c.l.b16 %v438
    %v2885 = vunpack.c.l.b16 %v439
    %v2886 = vunpack.c.l.b16 %v440
    %v2887 = vunpack.c.l.b16 %v441
    %v2888 = vunpack.c.l.b16 %v442
    %v2889 = vunpack.c.l.b16 %v443
    %v2890 = vunpack.c.l.b16 %v444
    %v2891 = vunpack.c.l.b16 %v445
    %v2892 = vunpack.c.l.b16 %v446
    %v2893 = vunpack.c.l.b16 %v447
    %v2894 = vunpack.c.l.b16 %v448
    %v2895 = vunpack.c.l.b16 %v449
    %v2896 = vunpack.c.l.b16 %v450
    %v2897 = vunpack.c.l.b16 %v451
    %v2898 = vunpack.c.l.b16 %v452
    %v2899 = vunpack.c.l.b16 %v453
    %v2900 = vunpack.c.l.b16 %v454
    %v2901 = vunpack.c.l.b16 %v455
    %v2902 = vunpack.c.l.b16 %v456
    %v2903 = vunpack.c.l.b16 %v457
    %v2904 = vunpack.c.l.b16 %v458
    %v2905 = vunpack.c.l.b16 %v459
    %v2906 = vunpack.c.l.b16 %v460
    %v2907 = vunpack.c.l.b16 %v461
    %v2908 = vunpack.c.l.b16 %v462
    %v2909 = vunpack.c.l.b16 %v463
    %v2910 = vunpack.c.l.b16 %v464
    %v2911 = vunpack.c.l.b16 %v465
    %v2912 = vunpack.c.l.b16 %v466
    %v2913 = vunpack.c.l.b16 %v467
    %v2914 = vunpack.c.l.b16 %v468
    %v2915 = vunpack.c.l.b16 %v469
    %v2916 = vunpack.c.l.b16 %v470
    %v2917 = vunpack.c.l.b16 %v471
    %v2918 = vunpack.c.l.b16 %v472
    %v2919 = vunpack.c.l.b16 %v473
    %v2920 = vunpack.c.l.b16 %v474
    %v2921 = vunpack.c.l.b16 %v475
    %v2922 = vunpack.c.l.b16 %v476
    %v2923 = vunpack.c.l.b16 %v477
    %v2924 = vunpack.c.l.b16 %v478
    %v2925 = vunpack.c.l.b16 %v479
    %v2926 = vunpack.c.l.b16 %v480
    %v2927 = vunpack.c.l.b16 %v481
    %v2928 = vunpack.c.l.b16 %v482
    %v2929 = vunpack.c.l.b16 %v483
    %v2930 = vunpack.c.l.b16 %v484
    %v2931 = vunpack.c.l.b16 %v485
    %v2932 = vunpack.c.l.b16 %v486
    %v2933 = vunpack.c.l.b16 %v487
    %v2934 = vunpack.c.l.b16 %v488
    %v2935 = vunpack.c.l.b16 %v489
    %v2936 = vunpack.c.l.b16 %v490
    %v2937 = vunpack.c.l.b16 %v491
    %v2938 = vunpack.c.l.b16 %v492
    %v2939 = vunpack.c.l.b16 %v493
    %v2940 = vunpack.c.l.b16 %v494
    %v2941 = vunpack.c.l.b16 %v495
    %v2942 = vunpack.c.l.b16 %v496
    %v2943 = vunpack.c.l.b16 %v497
    %v2944 = vunpack.c.l.b16 %v498
    %v2945 = vunpack.c.l.b16 %v499
    %v2946 = vunpack.c.l.b16 %v500
    %v2947 = vunpack.c.l.b16 %v501
    %v2948 = vunpack.c.l.b16 %v502
    %v2949 = vunpack.c.l.b16 %v503
    %v2950 = vunpack.c.l.b16 %v504
    %v2951 = vunpack.c.l.b16 %v505
    %v2952 = vunpack.c.l.b16 %v506
    %v2953 = vunpack.c.l.b16 %v507
    %v2954 = vunpack.c.l.b16 %v508
    %v2955 = vunpack.c.l.b16 %v509
    %v2956 = vunpack.c.l.b16 %v510
    %v2957 = vunpack.c.l.b16 %v511
    %v2958 = vunpack.c.l.b16 %v512
    %v2959 = vunpack.c.l.b16 %v513
    %v2960 = vunpack.c.l.b16 %v514
    %v2961 = vunpack.c.l.b16 %v515
    %v2962 = vunpack.c.l.b16 %v516
    %v2963 = vunpack.c.l.b16 %v517
    %v2964 = vunpack.c.l.b16 %v518
    %v2965 = vunpack.c.l.b16 %v519
    %v2966 = vunpack.c.l.b16 %v520
    %v2967 = vunpack.c.l.b16 %v521
    %v2968 = vunpack.c.l.b16 %v522
    %v2969 = vunpack.c.l.b16 %v523
    %v2970 = vunpack.c.l.b16 %v524
    %v2971 = vunpack.c.l.b16 %v525
    %v2972 = vunpack.c.l.b16 %v526
    %v2973 = vunpack.c.l.b16 %v527
    %v2974 = vunpack.c.l.b16 %v528
    %v2975 = vunpack.c.l.b16 %v529
    %v2976 = vunpack.c.l.b16 %v530
    %v2977 = vunpack.c.l.b16 %v531
    %v2978 = vunpack.c.l.b16 %v532
    %v2979 = vunpack.c.l.b16 %v533
    %v2980 = vunpack.c.l.b16 %v534
    %v2981 = vunpack.c.l.b16 %v535
    %v2982 = vunpack.c.l.b16 %v536
    %v2983 = vunpack.c.l.b16 %v537
    %v2984 = vunpack.c.l.b16 %v538
    %v2985 = vunpack.c.l.b16 %v539
    %v2986 = vunpack.c.l.b16 %v540
    %v2987 = vunpack.c.l.b16 %v541
    %v2988 = vunpack.c.l.b16 %v542
    %v2989 = vunpack.c.l.b16 %v543
    %v2990 = vunpack.c.l.b16 %v544
    %v2991 = vunpack.c.l.b16 %v545
    %v2992 = vunpack.c.l.b16 %v546
    %v2993 = vunpack.c.l.b16 %v547
    %v2994 = vunpack.c.l.b16 %v548
    %v2995 = vunpack.c.l.b16 %v549
    %v2996 = vunpack.c.l.b16 %v550
    %v2997 = vunpack.c.l.b16 %v551
    %v2998 = vunpack.c.l.b16 %v552
    %v2999 = vunpack.c.l.b16 %v553
    %v3000 = vunpack.c.l.b16 %v554
    %v3001 = vunpack.c.l.b16 %v555
    %v3002 = vunpack.c.l.b16 %v556
    %v3003 = vunpack.c.l.b16 %v557
    %v3004 = vunpack.c.l.b16 %v558
    %v3005 = vunpack.c.l.b16 %v559
    %v3006 = vunpack.c.l.b16 %v560
    %v3007 = vunpack.c.l.b16 %v561
    %v3008 = vunpack.c.l.b16 %v562
    %v3009 = vunpack.c.l.b16 %v563
    %v3010 = vunpack.c.l.b16 %v564
    %v3011 = vunpack.c.l.b16 %v565
    %v3012 = vunpack.c.l.b16 %v566
    %v3013 = vunpack.c.l.b16 %v567
    %v3014 = vunpack.c.l.b16 %v568
    %v3015 = vunpack.c.l.b16 %v569
    %v3016 = vunpack.c.l.b16 %v570
    %v3017 = vunpack.c.l.b16 %v571
    %v3018 = vunpack.c.l.b16 %v572
    %v3019 = vunpack.c.l.b16 %v573
    %v3020 = vunpack.c.l.b16 %v574
    %v3021 = vunpack.c.l.b16 %v575
    %v3022 = vunpack.c.l.b16 %v576
    %v3023 = vunpack.c.l.b16 %v577
    %v3024 = vunpack.c.l.b16 %v578
    %v3025 = vunpack.c.l.b16 %v579
    %v3026 = vunpack.c.l.b16 %v580
    %v3027 = vunpack.c.l.b16 %v581
    %v3028 = vunpack.c.l.b16 %v582
    %v3029 = vunpack.c.l.b16 %v583
    %v3030 = vunpack.c.l.b16 %v584
    %v3031 = vunpack.c.l.b16 %v585
    %v3032 = vunpack.c.l.b16 %v586
    %v3033 = vunpack.c.l.b16 %v587
    %v3034 = vunpack.c.l.b16 %v588
    %v3035 = vunpack.c.l.b16 %v589
    %v3036 = vunpack.c.l.b16 %v590
    %v3037 = vunpack.c.l.b16 %v591
    %v3038 = vunpack.c.l.b16 %v592
    %v3039 = vunpack.c.l.b16 %v593
    %v3040 = vunpack.c.l.b16 %v594
    %v3041 = vunpack.c.l.b16 %v595
    %v3042 = vunpack.c.l.b16 %v596
    %v3043 = vunpack.c.l.b16 %v597
    %v3044 = vunpack.c.l.b16 %v598
    %v3045 = vunpack.c.l.b16 %v599
    %v3046 = vunpack.c.l.b16 %v600
    %v3047 = vunpack.c.l.b16 %v601
    %v3048 = vunpack.c.l.b16 %v602
    %v3049 = vunpack.c.l.b16 %v603
    %v3050 = vunpack.c.l.b16 %v604
    %v3051 = vunpack.c.l.b16 %v605
    %v3052 = vunpack.c.l.b16 %v606
    %v3053 = vunpack.c.l.b16 %v607
    %v3054 = vunpack.c.l.b16 %v608
    %v3055 = vunpack.c.l.b16 %v609
    %v3056 = vunpack.c.l.b16 %v610
    %v3057 = vunpack.c.l.b16 %v611
    %v3058 = vunpack.c.l.b16 %v612
    %v3059 = vunpack.c.l.b16 %v613
    %v3060 = vunpack.c.l.b16 %v614
    %v3061 = vunpack.c.l.b16 %v615
    %v3062 = vunpack.c.l.b16 %v616
    %v3063 = vunpack.c.l.b16 %v617
    %v3064 = vunpack.c.l.b16 %v618
    %v3065 = vunpack.c.l.b16 %v619
    %v3066 = vunpack.c.l.b16 %v620
    %v3067 = vunpack.c.l.b16 %v621
    %v3068 = vunpack.c.l.b16 %v622
    %v3069 = vunpack.c.l.b16 %v623
    %v3070 = vunpack.c.l.b16 %v624
    %v3071 = vunpack.c.l.b16 %v625
    %v3072 = vunpack.c.l.b16 %v626
    %v3073 = vunpack.c.l.b16 %v627
    %v3074 = vunpack.c.l.b16 %v628
    %v3075 = vunpack.c.l.b16 %v629
    %v3076 = vunpack.c.l.b16 %v630
    %v3077 = vunpack.c.l.b16 %v631
    %v3078 = vunpack.c.l.b16 %v632
    %v3079 = vunpack.c.l.b16 %v633
    %v3080 = vunpack.c.l.b16 %v634
    %v3081 = vunpack.c.l.b16 %v635
    %v3082 = vunpack.c.l.b16 %v636
    %v3083 = vunpack.c.l.b16 %v637
    %v3084 = vunpack.c.l.b16 %v638
    %v3085 = vunpack.c.l.b16 %v639
    %v3086 = vunpack.c.l.b16 %v640
    %v3087 = vunpack.c.l.b16 %v641
    %v3088 = vunpack.c.l.b16 %v642
    %v3089 = vunpack.c.l.b16 %v643
    %v3090 = vunpack.c.l.b16 %v644
    %v3091 = vunpack.c.l.b16 %v645
    %v3092 = vunpack.c.l.b16 %v646
    %v3093 = vunpack.c.l.b16 %v647
    %v3094 = vunpack.c.l.b16 %v648
    %v3095 = vunpack.c.l.b16 %v649
    %v3096 = vunpack.c.l.b16 %v650
    %v3097 = vunpack.c.l.b16 %v651
    %v3098 = vunpack.c.l.b16 %v652
    %v3099 = vunpack.c.l.b16 %v653
    %v3100 = vunpack.c.l.b16 %v654
    %v3101 = vunpack.c.l.b16 %v655
    %v3102 = vunpack.c.l.b16 %v656
    %v3103 = vunpack.c.l.b16 %v657
    %v3104 = vunpack.c.l.b16 %v658
    %v3105 = vunpack.c.l.b16 %v659
    %v3106 = vunpack.c.l.b16 %v660
    %v3107 = vunpack.c.l.b16 %v661
    %v3108 = vunpack.c.l.b16 %v662
    %v3109 = vunpack.c.l.b16 %v663
    %v3110 = vunpack.c.l.b16 %v664
    %v3111 = vunpack.c.l.b16 %v665
    %v3112 = vunpack.c.l.b16 %v666
    %v3113 = vunpack.c.l.b16 %v667
    %v3114 = vunpack.c.l.b16 %v668
    %v3115 = vunpack.c.l.b16 %v669
    %v3116 = vunpack.c.l.b16 %v670
    %v3117 = vunpack.c.l.b16 %v671
    %v3118 = vunpack.c.l.b16 %v672
    %v3119 = vunpack.c.l.b16 %v673
    %v3120 = vunpack.c.l.b16 %v674
    %v3121 = vunpack.c.l.b16 %v675
    %v3122 = vunpack.c.l.b16 %v676
    %v3123 = vunpack.c.l.b16 %v677
    %v3124 = vunpack.c.l.b16 %v678
    %v3125 = vunpack.c.l.b16 %v679
    %v3126 = vunpack.c.l.b16 %v680
    %v3127 = vunpack.c.l.b16 %v681
    %v3128 = vunpack.c.l.b16 %v682
    %v3129 = vunpack.c.l.b16 %v683
    %v3130 = vunpack.c.l.b16 %v684
    %v3131 = vunpack.c.l.b16 %v685
    %v3132 = vunpack.c.l.b16 %v686
    %v3133 = vunpack.c.l.b16 %v687
    %v3134 = vunpack.c.l.b16 %v688
    %v3135 = vunpack.c.l.b16 %v689
    %v3136 = vunpack.c.l.b16 %v690
    %v3137 = vunpack.c.l.b16 %v691
    %v3138 = vunpack.c.l.b16 %v692
    %v3139 = vunpack.c.l.b16 %v693
    %v3140 = vunpack.c.l.b16 %v694
    %v3141 = vunpack.c.l.b16 %v695
    %v3142 = vunpack.c.l.b16 %v696
    %v3143 = vunpack.c.l.b16 %v697
    %v3144 = vunpack.c.l.b16 %v698
    %v3145 = vunpack.c.l.b16 %v699
    %v3146 = vunpack.c.l.b16 %v700
    %v3147 = vunpack.c.l.b16 %v701
    %v3148 = vunpack.c.l.b16 %v702
    %v3149 = vunpack.c.l.b16 %v703
    %v3150 = vunpack.c.l.b16 %v704
    %v3151 = vunpack.c.l.b16 %v705
    %v3152 = vunpack.c.l.b16 %v706
    %v3153 = vunpack.c.l.b16 %v707
    %v3154 = vunpack.c.l.b16 %v708
    %v3155 = vunpack.c.l.b16 %v709
    %v3156 = vunpack.c.l.b16 %v710
    %v3157 = vunpack.c.l.b16 %v711
    %v3158 = vunpack.c.l.b16 %v712
    %v3159 = vunpack.c.l.b16 %v713
    %v3160 = vunpack.c.l.b16 %v714
    %v3161 = vunpack.c.l.b16 %v715
    %v3162 = vunpack.c.l.b16 %v716
    %v3163 = vunpack.c.l.b16 %v717
    %v3164 = vunpack.c.l.b16 %v718
    %v3165 = vunpack.c.l.b16 %v719
    %v3166 = vunpack.c.l.b16 %v720
    %v3167 = vunpack.c.l.b16 %v721
    %v3168 = vunpack.c.l.b16 %v722
    %v3169 = vunpack.c.l.b16 %v723
    %v3170 = vunpack.c.l.b16 %v724
    %v3171 = vunpack.c.l.b16 %v725
    %v3172 = vunpack.c.l.b16 %v726
    %v3173 = vunpack.c.l.b16 %v727
    %v3174 = vunpack.c.l.b16 %v728
    %v3175 = vunpack.c.l.b16 %v729
    %v3176 = vunpack.c.l.b16 %v730
    %v3177 = vunpack.c.l.b16 %v731
    %v3178 = vunpack.c.l.b16 %v732
    %v3179 = vunpack.c.l.b16 %v733
    %v3180 = vunpack.c.l.b16 %v734
    %v3181 = vunpack.c.l.b16 %v735
    %v3182 = vunpack.c.l.b16 %v736
    %v3183 = vunpack.c.l.b16 %v737
    %v3184 = vunpack.c.l.b16 %v738
    %v3185 = vunpack.c.l.b16 %v739
    %v3186 = vunpack.c.l.b16 %v740
    %v3187 = vunpack.c.l.b16 %v741
    %v3188 = vunpack.c.l.b16 %v742
    %v3189 = vunpack.c.l.b16 %v743
    %v3190 = vunpack.c.l.b16 %v744
    %v3191 = vunpack.c.l.b16 %v745
    %v3192 = vunpack.c.l.b16 %v746
    %v3193 = vunpack.c.l.b16 %v747
    %v3194 = vunpack.c.l.b16 %v748
    %v3195 = vunpack.c.l.b16 %v749
    %v3196 = vunpack.c.l.b16 %v750
    %v3197 = vunpack.c.l.b16 %v751
    %v3198 = vunpack.c.l.b16 %v752
    %v3199 = vunpack.c.l.b16 %v753
    %v3200 = vunpack.c.l.b16 %v754
    %v3201 = vunpack.c.l.b16 %v755
    %v3202 = vunpack.c.l.b16 %v756
    %v3203 = vunpack.c.l.b16 %v757
    %v3204 = vunpack.c.l.b16 %v758
    %v3205 = vunpack.c.l.b16 %v759
    %v3206 = vunpack.c.l.b16 %v760
    %v3207 = vunpack.c.l.b16 %v761
    %v3208 = vunpack.c.l.b16 %v762
    %v3209 = vunpack.c.l.b16 %v763
    %v3210 = vunpack.c.l.b16 %v764
    %v3211 = vunpack.c.l.b16 %v765
    %v3212 = vunpack.c.l.b16 %v766
    %v3213 = vunpack.c.l.b16 %v767
    %v3214 = vunpack.c.l.b16 %v768
    %v3215 = vunpack.c.l.b16 %v769
    %v3216 = vunpack.c.l.b16 %v770
    %v3217 = vunpack.c.l.b16 %v771
    %v3218 = vunpack.c.l.b16 %v772
    %v3219 = vunpack.c.l.b16 %v773
    %v3220 = vunpack.c.l.b16 %v774
    %v3221 = vunpack.c.l.b16 %v775
    %v3222 = vunpack.c.l.b16 %v776
    %v3223 = vunpack.c.l.b16 %v777
    %v3224 = vunpack.c.l.b16 %v778
    %v3225 = vunpack.c.l.b16 %v779
    %v3226 = vunpack.c.l.b16 %v780
    %v3227 = vunpack.c.l.b16 %v781
    %v3228 = vunpack.c.l.b16 %v782
    %v3229 = vunpack.c.l.b16 %v783
    %v3230 = vunpack.c.l.b16 %v784
    %v3231 = vunpack.c.l.b16 %v785
    %v3232 = vunpack.c.l.b16 %v786
    %v3233 = vunpack.c.l.b16 %v787
    %v3234 = vunpack.c.l.b16 %v788
    %v3235 = vunpack.c.l.b16 %v789
    %v3236 = vunpack.c.l.b16 %v790
    %v3237 = vunpack.c.l.b16 %v791
    %v3238 = vunpack.c.l.b16 %v792
    %v3239 = vunpack.c.l.b16 %v793
    %v3240 = vunpack.c.l.b16 %v794
    %v3241 = vunpack.c.l.b16 %v795
    %v3242 = vunpack.c.l.b16 %v796
    %v3243 = vunpack.c.l.b16 %v797
    %v3244 = vunpack.c.l.b16 %v798
    %v3245 = vunpack.c.l.b16 %v799
    %v3246 = vunpack.c.l.b16 %v800
    %v3247 = vunpack.c.l.b16 %v801
    %v3248 = vunpack.c.l.b16 %v802
    %v3249 = vunpack.c.l.b16 %v803
    %v3250 = vunpack.c.l.b16 %v804
    %v3251 = vunpack.c.l.b16 %v805
    %v3252 = vunpack.c.l.b16 %v806
    %v3253 = vunpack.c.l.b16 %v807
    %v3254 = vunpack.c.l.b16 %v808
    %v3255 = vunpack.c.l.b16 %v809
    %v3256 = vunpack.c.l.b16 %v810
    %v3257 = vunpack.c.l.b16 %v811
    %v3258 = vunpack.c.l.b16 %v812
    %v3259 = vunpack.c.l.b16 %v813
    %v3260 = vunpack.c.l.b16 %v814
    %v3261 = vunpack.c.l.b16 %v815
    %v3262 = vunpack.c.l.b16 %v816
    %v3263 = vunpack.c.l.b16 %v817
    %v3264 = vunpack.c.l.b16 %v818
    %v3265 = vunpack.c.l.b16 %v819
    %v3266 = vunpack.c.l.b16 %v820
    %v3267 = vunpack.c.l.b16 %v821
    %v3268 = vunpack.c.l.b16 %v822
    %v3269 = vunpack.c.l.b16 %v823
    %v3270 = vunpack.c.l.b16 %v824
    %v3271 = vunpack.c.l.b16 %v825
    %v3272 = vunpack.c.l.b16 %v826
    %v3273 = vunpack.c.l.b16 %v827
    %v3274 = vunpack.c.l.b16 %v828
    %v3275 = vunpack.c.l.b16 %v829
    %v3276 = vunpack.c.l.b16 %v830
    %v3277 = vunpack.c.l.b16 %v831
    %v3278 = vunpack.c.l.b16 %v832
    %v3279 = vunpack.c.l.b16 %v833
    %v3280 = vunpack.c.l.b16 %v834
    %v3281 = vunpack.c.l.b16 %v835
    %v3282 = vunpack.c.l.b16 %v836
    %v3283 = vunpack.c.l.b16 %v837
    %v3284 = vunpack.c.l.b16 %v838
    %v3285 = vunpack.c.l.b16 %v839
    %v3286 = vunpack.c.l.b16 %v840
    %v3287 = vunpack.c.l.b16 %v841
    %v3288 = vunpack.c.l.b16 %v842
    %v3289 = vunpack.c.l.b16 %v843
    %v3290 = vunpack.c.l.b16 %v844
    %v3291 = vunpack.c.l.b16 %v845
    %v3292 = vunpack.c.l.b16 %v846
    %v3293 = vunpack.c.l.b16 %v847
    %v3294 = vunpack.c.l.b16 %v848
    %v3295 = vunpack.c.l.b16 %v849
    %v3296 = vunpack.c.l.b16 %v850
    %v3297 = vunpack.c.l.b16 %v851
    %v3298 = vunpack.c.l.b16 %v852
    %v3299 = vunpack.c.l.b16 %v853
    %v3300 = vunpack.c.l.b16 %v854
    %v3301 = vunpack.c.l.b16 %v855
    %v3302 = vunpack.c.l.b16 %v856
    %v3303 = vunpack.c.l.b16 %v857
    %v3304 = vunpack.c.l.b16 %v858
    %v3305 = vunpack.c.l.b16 %v859
    %v3306 = vunpack.c.l.b16 %v860
    %v3307 = vunpack.c.l.b16 %v861
    %v3308 = vunpack.c.l.b16 %v862
    %v3309 = vunpack.c.l.b16 %v863
    %v3310 = vunpack.c.l.b16 %v864
    %v3311 = vunpack.c.l.b16 %v865
    %v3312 = vunpack.c.l.b16 %v866
    %v3313 = vunpack.c.l.b16 %v867
    %v3314 = vunpack.c.l.b16 %v868
    %v3315 = vunpack.c.l.b16 %v869
    %v3316 = vunpack.c.l.b16 %v870
    %v3317 = vunpack.c.l.b16 %v871
    %v3318 = vunpack.c.l.b16 %v872
    %v3319 = vunpack.c.l.b16 %v873
    %v3320 = vunpack.c.l.b16 %v874
    %v3321 = vunpack.c.l.b16 %v875
    %v3322 = vunpack.c.l.b16 %v876
    %v3323 = vunpack.c.l.b16 %v877
    %v3324 = vunpack.c.l.b16 %v878
    %v3325 = vunpack.c.l.b16 %v879
    %v3326 = vunpack.c.l.b16 %v880
    %v3327 = vunpack.c.l.b16 %v881
    %v3328 = vunpack.c.l.b16 %v882
    %v3329 = vunpack.c.l.b16 %v883
    %v3330 = vunpack.c.l.b16 %v884
    %v3331 = vunpack.c.l.b16 %v885
    %v3332 = vunpack.c.l.b16 %v886
    %v3333 = vunpack.c.l.b16 %v887
    %v3334 = vunpack.c.l.b16 %v888
    %v3335 = vunpack.c.l.b16 %v889
    %v3336 = vunpack.c.l.b16 %v890
    %v3337 = vunpack.c.l.b16 %v891
    %v3338 = vunpack.c.l.b16 %v892
    %v3339 = vunpack.c.l.b16 %v893
    %v3340 = vunpack.c.l.b16 %v894
    %v3341 = vunpack.c.l.b16 %v895
    %v3342 = vunpack.c.l.b16 %v896
    %v3343 = vunpack.c.l.b16 %v897
    %v3344 = vunpack.c.l.b16 %v898
    %v3345 = vunpack.c.l.b16 %v899
    %v3346 = vunpack.c.l.b16 %v900
    %v3347 = vunpack.c.l.b16 %v901
    %v3348 = vunpack.c.l.b16 %v902
    %v3349 = vunpack.c.l.b16 %v903
    %v3350 = vunpack.c.l.b16 %v904
    %v3351 = vunpack.c.l.b16 %v905
    %v3352 = vunpack.c.l.b16 %v906
    %v3353 = vunpack.c.l.b16 %v907
    %v3354 = vunpack.c.l.b16 %v908
    %v3355 = vunpack.c.l.b16 %v909
    %v3356 = vunpack.c.l.b16 %v910
    %v3357 = vunpack.c.l.b16 %v911
    %v3358 = vunpack.c.l.b16 %v912
    %v3359 = vunpack.c.l.b16 %v913
    %v3360 = vunpack.c.l.b16 %v914
    %v3361 = vunpack.c.l.b16 %v915
    %v3362 = vunpack.c.l.b16 %v916
    %v3363 = vunpack.c.l.b16 %v917
    %v3364 = vunpack.c.l.b16 %v918
    %v3365 = vunpack.c.l.b16 %v919
    %v3366 = vunpack.c.l.b16 %v920
    %v3367 = vunpack.c.l.b16 %v921
    %v3368 = vunpack.c.l.b16 %v922
    %v3369 = vunpack.c.l.b16 %v923
    %v3370 = vunpack.c.l.b16 %v924
    %v3371 = vunpack.c.l.b16 %v925
    %v3372 = vunpack.c.l.b16 %v926
    %v3373 = vunpack.c.l.b16 %v927
    %v3374 = vunpack.c.l.b16 %v928
    %v3375 = vunpack.c.l.b16 %v929
    %v3376 = vunpack.c.l.b16 %v930
    %v3377 = vunpack.c.l.b16 %v931
    %v3378 = vunpack.c.l.b16 %v932
    %v3379 = vunpack.c.l.b16 %v933
    %v3380 = vunpack.c.l.b16 %v934
    %v3381 = vunpack.c.l.b16 %v935
    %v3382 = vunpack.c.l.b16 %v936
    %v3383 = vunpack.c.l.b16 %v937
    %v3384 = vunpack.c.l.b16 %v938
    %v3385 = vunpack.c.l.b16 %v939
    %v3386 = vunpack.c.l.b16 %v940
    %v3387 = vunpack.c.l.b16 %v941
    %v3388 = vunpack.c.l.b16 %v942
    %v3389 = vunpack.c.l.b16 %v943
    %v3390 = vunpack.c.l.b16 %v944
    %v3391 = vunpack.c.l.b16 %v945
    %v3392 = vunpack.c.l.b16 %v946
    %v3393 = vunpack.c.l.b16 %v947
    %v3394 = vunpack.c.l.b16 %v948
    %v3395 = vunpack.c.l.b16 %v949
    %v3396 = vunpack.c.l.b16 %v950
    %v3397 = vunpack.c.l.b16 %v951
    %v3398 = vunpack.c.l.b16 %v952
    %v3399 = vunpack.c.l.b16 %v953
    %v3400 = vunpack.c.l.b16 %v954
    %v3401 = vunpack.c.l.b16 %v955
    %v3402 = vunpack.c.l.b16 %v956
    %v3403 = vunpack.c.l.b16 %v957
    %v3404 = vunpack.c.l.b16 %v958
    %v3405 = vunpack.c.l.b16 %v959
    %v3406 = vunpack.c.l.b16 %v960
    %v3407 = vunpack.c.l.b16 %v961
    %v3408 = vunpack.c.l.b16 %v962
    %v3409 = vunpack.c.l.b16 %v963
    %v3410 = vunpack.c.l.b16 %v964
    %v3411 = vunpack.c.l.b16 %v965
    %v3412 = vunpack.c.l.b16 %v966
    %v3413 = vunpack.c.l.b16 %v967
    %v3414 = vunpack.c.l.b16 %v968
    %v3415 = vunpack.c.l.b16 %v969
    %v3416 = vunpack.c.l.b16 %v970
    %v3417 = vunpack.c.l.b16 %v971
    %v3418 = vunpack.c.l.b16 %v972
    %v3419 = vunpack.c.l.b16 %v973
    %v3420 = vunpack.c.l.b16 %v974
    %v3421 = vunpack.c.l.b16 %v975
    %v3422 = vunpack.c.l.b16 %v976
    %v3423 = vunpack.c.l.b16 %v977
    %v3424 = vunpack.c.l.b16 %v978
    %v3425 = vunpack.c.l.b16 %v979
    %v3426 = vunpack.c.l.b16 %v980
    %v3427 = vunpack.c.l.b16 %v981
    %v3428 = vunpack.c.l.b16 %v982
    %v3429 = vunpack.c.l.b16 %v983
    %v3430 = vunpack.c.l.b16 %v984
    %v3431 = vunpack.c.l.b16 %v985
    %v3432 = vunpack.c.l.b16 %v986
    %v3433 = vunpack.c.l.b16 %v987
    %v3434 = vunpack.c.l.b16 %v988
    %v3435 = vunpack.c.l.b16 %v989
    %v3436 = vunpack.c.l.b16 %v990
    %v3437 = vunpack.c.l.b16 %v991
    %v3438 = vunpack.c.l.b16 %v992
    %v3439 = vunpack.c.l.b16 %v993
    %v3440 = vunpack.c.l.b16 %v994
    %v3441 = vunpack.c.l.b16 %v995
    %v3442 = vunpack.c.l.b16 %v996
    %v3443 = vunpack.c.l.b16 %v997
    %v3444 = vunpack.c.l.b16 %v998
    %v3445 = vunpack.c.l.b16 %v999
    %v3446 = vunpack.c.l.b16 %v1000
    %v3447 = vunpack.c.l.b16 %v1001
    %v3448 = vunpack.c.l.b16 %v1002
    %v3449 = vunpack.c.l.b16 %v1003
    %v3450 = vunpack.c.l.b16 %v1004
    %v3451 = vunpack.c.l.b16 %v1005
    %v3452 = vunpack.c.l.b16 %v1006
    %v3453 = vunpack.c.l.b16 %v1007
    %v3454 = vunpack.c.l.b16 %v1008
    %v3455 = vunpack.c.l.b16 %v1009
    %v3456 = vunpack.c.l.b16 %v1010
    %v3457 = vunpack.c.l.b16 %v1011
    %v3458 = vunpack.c.l.b16 %v1012
    %v3459 = vunpack.c.l.b16 %v1013
    %v3460 = vunpack.c.l.b16 %v1014
    %v3461 = vunpack.c.l.b16 %v1015
    %v3462 = vunpack.c.l.b16 %v1016
    %v3463 = vunpack.c.l.b16 %v1017
    %v3464 = vunpack.c.l.b16 %v1018
    %v3465 = vunpack.c.l.b16 %v1019
    %v3466 = vunpack.c.l.b16 %v1020
    %v3467 = vunpack.c.l.b16 %v1021
    %v3468 = vunpack.c.l.b16 %v1022
    %v3469 = vunpack.c.l.b16 %v1023
    %v3470 = vunpack.c.l.b16 %v1024
    %v3471 = vunpack.c.l.b16 %v1025
    %v3472 = vunpack.c.l.b16 %v1026
    %v3473 = vunpack.c.l.b16 %v1027
    %v3474 = vunpack.c.l.b16 %v1028
    %v3475 = vunpack.c.l.b16 %v1029
    %v3476 = vunpack.c.l.b16 %v1030
    %v3477 = vunpack.c.l.b16 %v1031
    %v3478 = vunpack.c.l.b16 %v1032
    %v3479 = vunpack.c.l.b16 %v1033
    %v3480 = vunpack.c.l.b16 %v1034
    %v3481 = vunpack.c.l.b16 %v1035
    %v3482 = vunpack.c.l.b16 %v1036
    %v3483 = vunpack.c.l.b16 %v1037
    %v3484 = vunpack.c.l.b16 %v1038
    %v3485 = vunpack.c.l.b16 %v1039
    %v3486 = vunpack.c.l.b16 %v1040
    %v3487 = vunpack.c.l.b16 %v1041
    %v3488 = vunpack.c.l.b16 %v1042
    %v3489 = vunpack.c.l.b16 %v1043
    %v3490 = vunpack.c.l.b16 %v1044
    %v3491 = vunpack.c.l.b16 %v1045
    %v3492 = vunpack.c.l.b16 %v1046
    %v3493 = vunpack.c.l.b16 %v1047
    %v3494 = vunpack.c.l.b16 %v1048
    %v3495 = vunpack.c.l.b16 %v1049
    %v3496 = vunpack.c.l.b16 %v1050
    %v3497 = vunpack.c.l.b16 %v1051
    %v3498 = vunpack.c.l.b16 %v1052
    %v3499 = vunpack.c.l.b16 %v1053
    %v3500 = vunpack.c.l.b16 %v1054
    %v3501 = vunpack.c.l.b16 %v1055
    %v3502 = vunpack.c.l.b16 %v1056
    %v3503 = vunpack.c.l.b16 %v1057
    %v3504 = vunpack.c.l.b16 %v1058
    %v3505 = vunpack.c.l.b16 %v1059
    %v3506 = vunpack.c.l.b16 %v1060
    %v3507 = vunpack.c.l.b16 %v1061
    %v3508 = vunpack.c.l.b16 %v1062
    %v3509 = vunpack.c.l.b16 %v1063
    %v3510 = vunpack.c.l.b16 %v1064
    %v3511 = vunpack.c.l.b16 %v1065
    %v3512 = vunpack.c.l.b16 %v1066
    %v3513 = vunpack.c.l.b16 %v1067
    %v3514 = vunpack.c.l.b16 %v1068
    %v3515 = vunpack.c.l.b16 %v1069
    %v3516 = vunpack.c.l.b16 %v1070
    %v3517 = vunpack.c.l.b16 %v1071
    %v3518 = vunpack.c.l.b16 %v1072
    %v3519 = vunpack.c.l.b16 %v1073
    %v3520 = vunpack.c.l.b16 %v1074
    %v3521 = vunpack.c.l.b16 %v1075
    %v3522 = vunpack.c.l.b16 %v1076
    %v3523 = vunpack.c.l.b16 %v1077
    %v3524 = vunpack.c.l.b16 %v1078
    %v3525 = vunpack.c.l.b16 %v1079
    %v3526 = vunpack.c.l.b16 %v1080
    %v3527 = vunpack.c.l.b16 %v1081
    %v3528 = vunpack.c.l.b16 %v1082
    %v3529 = vunpack.c.l.b16 %v1083
    %v3530 = vunpack.c.l.b16 %v1084
    %v3531 = vunpack.c.l.b16 %v1085
    %v3532 = vunpack.c.l.b16 %v1086
    %v3533 = vunpack.c.l.b16 %v1087
    %v3534 = vunpack.c.l.b16 %v1088
    %v3535 = vunpack.c.l.b16 %v1089
    %v3536 = vunpack.c.l.b16 %v1090
    %v3537 = vunpack.c.l.b16 %v1091
    %v3538 = vunpack.c.l.b16 %v1092
    %v3539 = vunpack.c.l.b16 %v1093
    %v3540 = vunpack.c.l.b16 %v1094
    %v3541 = vunpack.c.l.b16 %v1095
    %v3542 = vunpack.c.l.b16 %v1096
    %v3543 = vunpack.c.l.b16 %v1097
    %v3544 = vunpack.c.l.b16 %v1098
    %v3545 = vunpack.c.l.b16 %v1099
    %v3546 = vunpack.c.l.b16 %v1100
    %v3547 = vunpack.c.l.b16 %v1101
    %v3548 = vunpack.c.l.b16 %v1102
    %v3549 = vunpack.c.l.b16 %v1103
    %v3550 = vunpack.c.l.b16 %v1104
    %v3551 = vunpack.c.l.b16 %v1105
    %v3552 = vunpack.c.l.b16 %v1106
    %v3553 = vunpack.c.l.b16 %v1107
    %v3554 = vunpack.c.l.b16 %v1108
    %v3555 = vunpack.c.l.b16 %v1109
    %v3556 = vunpack.c.l.b16 %v1110
    %v3557 = vunpack.c.l.b16 %v1111
    %v3558 = vunpack.c.l.b16 %v1112
    %v3559 = vunpack.c.l.b16 %v1113
    %v3560 = vunpack.c.l.b16 %v1114
    %v3561 = vunpack.c.l.b16 %v1115
    %v3562 = vunpack.c.l.b16 %v1116
    %v3563 = vunpack.c.l.b16 %v1117
    %v3564 = vunpack.c.l.b16 %v1118
    %v3565 = vunpack.c.l.b16 %v1119
    %v3566 = vunpack.c.l.b16 %v1120
    %v3567 = vunpack.c.l.b16 %v1121
    %v3568 = vunpack.c.l.b16 %v1122
    %v3569 = vunpack.c.l.b16 %v1123
    %v3570 = vunpack.c.l.b16 %v1124
    %v3571 = vunpack.c.l.b16 %v1125
    %v3572 = vunpack.c.l.b16 %v1126
    %v3573 = vunpack.c.l.b16 %v1127
    %v3574 = vunpack.c.l.b16 %v1128
    %v3575 = vunpack.c.l.b16 %v1129
    %v3576 = vunpack.c.l.b16 %v1130
    %v3577 = vunpack.c.l.b16 %v1131
    %v3578 = vunpack.c.l.b16 %v1132
    %v3579 = vunpack.c.l.b16 %v1133
    %v3580 = vunpack.c.l.b16 %v1134
    %v3581 = vunpack.c.l.b16 %v1135
    %v3582 = vunpack.c.l.b16 %v1136
    %v3583 = vunpack.c.l.b16 %v1137
    %v3584 = vunpack.c.l.b16 %v1138
    %v3585 = vunpack.c.l.b16 %v1139
    %v3586 = vunpack.c.l.b16 %v1140
    %v3587 = vunpack.c.l.b16 %v1141
    %v3588 = vunpack.c.l.b16 %v1142
    %v3589 = vunpack.c.l.b16 %v1143
    %v3590 = vunpack.c.l.b16 %v1144
    %v3591 = vunpack.c.l.b16 %v1145
    %v3592 = vunpack.c.l.b16 %v1146
    %v3593 = vunpack.c.l.b16 %v1147
    %v3594 = vunpack.c.l.b16 %v1148
    %v3595 = vunpack.c.l.b16 %v1149
    %v3596 = vunpack.c.l.b16 %v1150
    %v3597 = vunpack.c.l.b16 %v1151
    %v3598 = vunpack.c.l.b16 %v1152
    %v3599 = vunpack.c.l.b16 %v1153
    %v3600 = vunpack.c.l.b16 %v1154
    %v3601 = vpack.c.b16 %v2546, %v2545
    %v3602 = vpack.c.b16 %v2548, %v2547
    %v3603 = vpack.c.b16 %v2550, %v2549
    %v3604 = vpack.c.b16 %v2552, %v2551
    %v3605 = vpack.c.b16 %v2554, %v2553
    %v3606 = vpack.c.b16 %v2556, %v2555
    %v3607 = vpack.c.b16 %v2558, %v2557
    %v3608 = vpack.c.b16 %v2560, %v2559
    %v3609 = vpack.c.b16 %v2562, %v2561
    %v3610 = vpack.c.b16 %v2564, %v2563
    %v3611 = vpack.c.b16 %v2566, %v2565
    %v3612 = vpack.c.b16 %v2568, %v2567
    %v3613 = vpack.c.b16 %v2570, %v2569
    %v3614 = vpack.c.b16 %v2572, %v2571
    %v3615 = vpack.c.b16 %v2574, %v2573
    %v3616 = vpack.c.b16 %v2576, %v2575
    %v3617 = vpack.c.b16 %v2578, %v2577
    %v3618 = vpack.c.b16 %v2580, %v2579
    %v3619 = vpack.c.b16 %v2582, %v2581
    %v3620 = vpack.c.b16 %v2584, %v2583
    %v3621 = vpack.c.b16 %v2586, %v2585
    %v3622 = vpack.c.b16 %v2588, %v2587
    %v3623 = vpack.c.b16 %v2590, %v2589
    %v3624 = vpack.c.b16 %v2592, %v2591
    %v3625 = vpack.c.b16 %v2594, %v2593
    %v3626 = vpack.c.b16 %v2596, %v2595
    %v3627 = vpack.c.b16 %v2598, %v2597
    %v3628 = vpack.c.b16 %v2600, %v2599
    %v3629 = vpack.c.b16 %v2602, %v2601
    %v3630 = vpack.c.b16 %v2604, %v2603
    %v3631 = vpack.c.b16 %v2606, %v2605
    %v3632 = vpack.c.b16 %v2608, %v2607
    %v3633 = vpack.c.b16 %v2610, %v2609
    %v3634 = vpack.c.b16 %v2612, %v2611
    %v3635 = vpack.c.b16 %v2614, %v2613
    %v3636 = vpack.c.b16 %v2616, %v2615
    %v3637 = vpack.c.b16 %v2618, %v2617
    %v3638 = vpack.c.b16 %v2620, %v2619
    %v3639 = vpack.c.b16 %v2622, %v2621
    %v3640 = vpack.c.b16 %v2624, %v2623
    %v3641 = vpack.c.b16 %v2626, %v2625
    %v3642 = vpack.c.b16 %v2628, %v2627
    %v3643 = vpack.c.b16 %v2630, %v2629
    %v3644 = vpack.c.b16 %v2632, %v2631
    %v3645 = vpack.c.b16 %v2634, %v2633
    %v3646 = vpack.c.b16 %v2636, %v2635
    %v3647 = vpack.c.b16 %v2638, %v2637
    %v3648 = vpack.c.b16 %v2640, %v2639
    %v3649 = vpack.c.b16 %v2642, %v2641
    %v3650 = vpack.c.b16 %v2644, %v2643
    %v3651 = vpack.c.b16 %v2646, %v2645
    %v3652 = vpack.c.b16 %v2648, %v2647
    %v3653 = vpack.c.b16 %v2650, %v2649
    %v3654 = vpack.c.b16 %v2652, %v2651
    %v3655 = vpack.c.b16 %v2654, %v2653
    %v3656 = vpack.c.b16 %v2656, %v2655
    %v3657 = vpack.c.b16 %v2658, %v2657
    %v3658 = vpack.c.b16 %v2660, %v2659
    %v3659 = vpack.c.b16 %v2662, %v2661
    %v3660 = vpack.c.b16 %v2664, %v2663
    %v3661 = vpack.c.b16 %v2666, %v2665
    %v3662 = vpack.c.b16 %v2668, %v2667
    %v3663 = vpack.c.b16 %v2670, %v2669
    %v3664 = vpack.c.b16 %v2672, %v2671
    %v3665 = vpack.c.b16 %v2674, %v2673
    %v3666 = vpack.c.b16 %v2676, %v2675
    %v3667 = vpack.c.b16 %v2678, %v2677
    %v3668 = vpack.c.b16 %v2680, %v2679
    %v3669 = vpack.c.b16 %v2682, %v2681
    %v3670 = vpack.c.b16 %v2684, %v2683
    %v3671 = vpack.c.b16 %v2686, %v2685
    %v3672 = vpack.c.b16 %v2688, %v2687
    %v3673 = vpack.c.b16 %v2690, %v2689
    %v3674 = vpack.c.b16 %v2692, %v2691
    %v3675 = vpack.c.b16 %v2694, %v2693
    %v3676 = vpack.c.b16 %v2696, %v2695
    %v3677 = vpack.c.b16 %v2698, %v2697
    %v3678 = vpack.c.b16 %v2700, %v2699
    %v3679 = vpack.c.b16 %v2702, %v2701
    %v3680 = vpack.c.b16 %v2704, %v2703
    %v3681 = vpack.c.b16 %v2706, %v2705
    %v3682 = vpack.c.b16 %v2708, %v2707
    %v3683 = vpack.c.b16 %v2710, %v2709
    %v3684 = vpack.c.b16 %v2712, %v2711
    %v3685 = vpack.c.b16 %v2714, %v2713
    %v3686 = vpack.c.b16 %v2716, %v2715
    %v3687 = vpack.c.b16 %v2718, %v2717
    %v3688 = vpack.c.b16 %v2720, %v2719
    %v3689 = vpack.c.b16 %v2722, %v2721
    %v3690 = vpack.c.b16 %v2724, %v2723
    %v3691 = vpack.c.b16 %v2726, %v2725
    %v3692 = vpack.c.b16 %v2728, %v2727
    %v3693 = vpack.c.b16 %v2730, %v2729
    %v3694 = vpack.c.b16 %v2732, %v2731
    %v3695 = vpack.c.b16 %v2734, %v2733
    %v3696 = vpack.c.b16 %v2736, %v2735
    %v3697 = vpack.c.b16 %v2738, %v2737
    %v3698 = vpack.c.b16 %v2740, %v2739
    %v3699 = vpack.c.b16 %v2742, %v2741
    %v3700 = vpack.c.b16 %v2744, %v2743
    %v3701 = vpack.c.b16 %v2746, %v2745
    %v3702 = vpack.c.b16 %v2748, %v2747
    %v3703 = vpack.c.b16 %v2750, %v2749
    %v3704 = vpack.c.b16 %v2752, %v2751
    %v3705 = vpack.c.b16 %v2754, %v2753
    %v3706 = vpack.c.b16 %v2756, %v2755
    %v3707 = vpack.c.b16 %v2758, %v2757
    %v3708 = vpack.c.b16 %v2760, %v2759
    %v3709 = vpack.c.b16 %v2762, %v2761
    %v3710 = vpack.c.b16 %v2764, %v2763
    %v3711 = vpack.c.b16 %v2766, %v2765
    %v3712 = vpack.c.b16 %v2768, %v2767
    %v3713 = vpack.c.b16 %v2770, %v2769
    %v3714 = vpack.c.b16 %v2772, %v2771
    %v3715 = vpack.c.b16 %v2774, %v2773
    %v3716 = vpack.c.b16 %v2776, %v2775
    %v3717 = vpack.c.b16 %v2778, %v2777
    %v3718 = vpack.c.b16 %v2780, %v2779
    %v3719 = vpack.c.b16 %v2782, %v2781
    %v3720 = vpack.c.b16 %v2784, %v2783
    %v3721 = vpack.c.b16 %v2786, %v2785
    %v3722 = vpack.c.b16 %v2788, %v2787
    %v3723 = vpack.c.b16 %v2790, %v2789
    %v3724 = vpack.c.b16 %v2792, %v2791
    %v3725 = vpack.c.b16 %v2794, %v2793
    %v3726 = vpack.c.b16 %v2796, %v2795
    %v3727 = vpack.c.b16 %v2798, %v2797
    %v3728 = vpack.c.b16 %v2800, %v2799
    %v3729 = vpack.c.b16 %v2802, %v2801
    %v3730 = vpack.c.b16 %v2804, %v2803
    %v3731 = vpack.c.b16 %v2806, %v2805
    %v3732 = vpack.c.b16 %v2808, %v2807
    %v3733 = vpack.c.b16 %v2810, %v2809
    %v3734 = vpack.c.b16 %v2812, %v2811
    %v3735 = vpack.c.b16 %v2814, %v2813
    %v3736 = vpack.c.b16 %v2816, %v2815
    %v3737 = vpack.c.b16 %v2818, %v2817
    %v3738 = vpack.c.b16 %v2820, %v2819
    %v3739 = vpack.c.b16 %v2822, %v2821
    %v3740 = vpack.c.b16 %v2824, %v2823
    %v3741 = vpack.c.b16 %v2826, %v2825
    %v3742 = vpack.c.b16 %v2828, %v2827
    %v3743 = vpack.c.b16 %v2830, %v2829
    %v3744 = vpack.c.b16 %v2832, %v2831
    %v3745 = vpack.c.b16 %v2834, %v2833
    %v3746 = vpack.c.b16 %v2836, %v2835
    %v3747 = vpack.c.b16 %v2838, %v2837
    %v3748 = vpack.c.b16 %v2840, %v2839
    %v3749 = vpack.c.b16 %v2842, %v2841
    %v3750 = vpack.c.b16 %v2844, %v2843
    %v3751 = vpack.c.b16 %v2846, %v2845
    %v3752 = vpack.c.b16 %v2848, %v2847
    %v3753 = vpack.c.b16 %v2850, %v2849
    %v3754 = vpack.c.b16 %v2852, %v2851
    %v3755 = vpack.c.b16 %v2854, %v2853
    %v3756 = vpack.c.b16 %v2856, %v2855
    %v3757 = vpack.c.b16 %v2858, %v2857
    %v3758 = vpack.c.b16 %v2860, %v2859
    %v3759 = vpack.c.b16 %v2862, %v2861
    %v3760 = vpack.c.b16 %v2864, %v2863
    %v3761 = vpack.c.b16 %v2866, %v2865
    %v3762 = vpack.c.b16 %v2868, %v2867
    %v3763 = vpack.c.b16 %v2870, %v2869
    %v3764 = vpack.c.b16 %v2872, %v2871
    %v3765 = vpack.c.b16 %v2874, %v2873
    %v3766 = vpack.c.b16 %v2876, %v2875
    %v3767 = vpack.c.b16 %v2878, %v2877
    %v3768 = vpack.c.b16 %v2880, %v2879
    %v3769 = vpack.c.b16 %v2882, %v2881
    %v3770 = vpack.c.b16 %v2884, %v2883
    %v3771 = vpack.c.b16 %v2886, %v2885
    %v3772 = vpack.c.b16 %v2888, %v2887
    %v3773 = vpack.c.b16 %v2890, %v2889
    %v3774 = vpack.c.b16 %v2892, %v2891
    %v3775 = vpack.c.b16 %v2894, %v2893
    %v3776 = vpack.c.b16 %v2896, %v2895
    %v3777 = vpack.c.b16 %v2898, %v2897
    %v3778 = vpack.c.b16 %v2900, %v2899
    %v3779 = vpack.c.b16 %v2902, %v2901
    %v3780 = vpack.c.b16 %v2904, %v2903
    %v3781 = vpack.c.b16 %v2906, %v2905
    %v3782 = vpack.c.b16 %v2908, %v2907
    %v3783 = vpack.c.b16 %v2910, %v2909
    %v3784 = vpack.c.b16 %v2912, %v2911
    %v3785 = vpack.c.b16 %v2914, %v2913
    %v3786 = vpack.c.b16 %v2916, %v2915
    %v3787 = vpack.c.b16 %v2918, %v2917
    %v3788 = vpack.c.b16 %v2920, %v2919
    %v3789 = vpack.c.b16 %v2922, %v2921
    %v3790 = vpack.c.b16 %v2924, %v2923
    %v3791 = vpack.c.b16 %v2926, %v2925
    %v3792 = vpack.c.b16 %v2928, %v2927
    %v3793 = vpack.c.b16 %v2930, %v2929
    %v3794 = vpack.c.b16 %v2932, %v2931
    %v3795 = vpack.c.b16 %v2934, %v2933
    %v3796 = vpack.c.b16 %v2936, %v2935
    %v3797 = vpack.c.b16 %v2938, %v2937
    %v3798 = vpack.c.b16 %v2940, %v2939
    %v3799 = vpack.c.b16 %v2942, %v2941
    %v3800 = vpack.c.b16 %v2944, %v2943
    %v3801 = vpack.c.b16 %v2946, %v2945
    %v3802 = vpack.c.b16 %v2948, %v2947
    %v3803 = vpack.c.b16 %v2950, %v2949
    %v3804 = vpack.c.b16 %v2952, %v2951
    %v3805 = vpack.c.b16 %v2954, %v2953
    %v3806 = vpack.c.b16 %v2956, %v2955
    %v3807 = vpack.c.b16 %v2958, %v2957
    %v3808 = vpack.c.b16 %v2960, %v2959
    %v3809 = vpack.c.b16 %v2962, %v2961
    %v3810 = vpack.c.b16 %v2964, %v2963
    %v3811 = vpack.c.b16 %v2966, %v2965
    %v3812 = vpack.c.b16 %v2968, %v2967
    %v3813 = vpack.c.b16 %v2970, %v2969
    %v3814 = vpack.c.b16 %v2972, %v2971
    %v3815 = vpack.c.b16 %v2974, %v2973
    %v3816 = vpack.c.b16 %v2976, %v2975
    %v3817 = vpack.c.b16 %v2978, %v2977
    %v3818 = vpack.c.b16 %v2980, %v2979
    %v3819 = vpack.c.b16 %v2982, %v2981
    %v3820 = vpack.c.b16 %v2984, %v2983
    %v3821 = vpack.c.b16 %v2986, %v2985
    %v3822 = vpack.c.b16 %v2988, %v2987
    %v3823 = vpack.c.b16 %v2990, %v2989
    %v3824 = vpack.c.b16 %v2992, %v2991
    %v3825 = vpack.c.b16 %v2994, %v2993
    %v3826 = vpack.c.b16 %v2996, %v2995
    %v3827 = vpack.c.b16 %v2998, %v2997
    %v3828 = vpack.c.b16 %v3000, %v2999
    %v3829 = vpack.c.b16 %v3002, %v3001
    %v3830 = vpack.c.b16 %v3004, %v3003
    %v3831 = vpack.c.b16 %v3006, %v3005
    %v3832 = vpack.c.b16 %v3008, %v3007
    %v3833 = vpack.c.b16 %v3010, %v3009
    %v3834 = vpack.c.b16 %v3012, %v3011
    %v3835 = vpack.c.b16 %v3014, %v3013
    %v3836 = vpack.c.b16 %v3016, %v3015
    %v3837 = vpack.c.b16 %v3018, %v3017
    %v3838 = vpack.c.b16 %v3020, %v3019
    %v3839 = vpack.c.b16 %v3022, %v3021
    %v3840 = vpack.c.b16 %v3024, %v3023
    %v3841 = vpack.c.b16 %v3026, %v3025
    %v3842 = vpack.c.b16 %v3028, %v3027
    %v3843 = vpack.c.b16 %v3030, %v3029
    %v3844 = vpack.c.b16 %v3032, %v3031
    %v3845 = vpack.c.b16 %v3034, %v3033
    %v3846 = vpack.c.b16 %v3036, %v3035
    %v3847 = vpack.c.b16 %v3038, %v3037
    %v3848 = vpack.c.b16 %v3040, %v3039
    %v3849 = vpack.c.b16 %v3042, %v3041
    %v3850 = vpack.c.b16 %v3044, %v3043
    %v3851 = vpack.c.b16 %v3046, %v3045
    %v3852 = vpack.c.b16 %v3048, %v3047
    %v3853 = vpack.c.b16 %v3050, %v3049
    %v3854 = vpack.c.b16 %v3052, %v3051
    %v3855 = vpack.c.b16 %v3054, %v3053
    %v3856 = vpack.c.b16 %v3056, %v3055
    %v3857 = vpack.c.b16 %v3058, %v3057
    %v3858 = vpack.c.b16 %v3060, %v3059
    %v3859 = vpack.c.b16 %v3062, %v3061
    %v3860 = vpack.c.b16 %v3064, %v3063
    %v3861 = vpack.c.b16 %v3066, %v3065
    %v3862 = vpack.c.b16 %v3068, %v3067
    %v3863 = vpack.c.b16 %v3070, %v3069
    %v3864 = vpack.c.b16 %v3072, %v3071
    %v3865 = vpack.c.b16 %v3074, %v3073
    %v3866 = vpack.c.b16 %v3076, %v3075
    %v3867 = vpack.c.b16 %v3078, %v3077
    %v3868 = vpack.c.b16 %v3080, %v3079
    %v3869 = vpack.c.b16 %v3082, %v3081
    %v3870 = vpack.c.b16 %v3084, %v3083
    %v3871 = vpack.c.b16 %v3086, %v3085
    %v3872 = vpack.c.b16 %v3088, %v3087
    %v3873 = vpack.c.b16 %v3090, %v3089
    %v3874 = vpack.c.b16 %v3092, %v3091
    %v3875 = vpack.c.b16 %v3094, %v3093
    %v3876 = vpack.c.b16 %v3096, %v3095
    %v3877 = vpack.c.b16 %v3098, %v3097
    %v3878 = vpack.c.b16 %v3100, %v3099
    %v3879 = vpack.c.b16 %v3102, %v3101
    %v3880 = vpack.c.b16 %v3104, %v3103
    %v3881 = vpack.c.b16 %v3106, %v3105
    %v3882 = vpack.c.b16 %v3108, %v3107
    %v3883 = vpack.c.b16 %v3110, %v3109
    %v3884 = vpack.c.b16 %v3112, %v3111
    %v3885 = vpack.c.b16 %v3114, %v3113
    %v3886 = vpack.c.b16 %v3116, %v3115
    %v3887 = vpack.c.b16 %v3118, %v3117
    %v3888 = vpack.c.b16 %v3120, %v3119
    %v3889 = vpack.c.b16 %v3122, %v3121
    %v3890 = vpack.c.b16 %v3124, %v3123
    %v3891 = vpack.c.b16 %v3126, %v3125
    %v3892 = vpack.c.b16 %v3128, %v3127
    %v3893 = vpack.c.b16 %v3130, %v3129
    %v3894 = vpack.c.b16 %v3132, %v3131
    %v3895 = vpack.c.b16 %v3134, %v3133
    %v3896 = vpack.c.b16 %v3136, %v3135
    %v3897 = vpack.c.b16 %v3138, %v3137
    %v3898 = vpack.c.b16 %v3140, %v3139
    %v3899 = vpack.c.b16 %v3142, %v3141
    %v3900 = vpack.c.b16 %v3144, %v3143
    %v3901 = vpack.c.b16 %v3146, %v3145
    %v3902 = vpack.c.b16 %v3148, %v3147
    %v3903 = vpack.c.b16 %v3150, %v3149
    %v3904 = vpack.c.b16 %v3152, %v3151
    %v3905 = vpack.c.b16 %v3154, %v3153
    %v3906 = vpack.c.b16 %v3156, %v3155
    %v3907 = vpack.c.b16 %v3158, %v3157
    %v3908 = vpack.c.b16 %v3160, %v3159
    %v3909 = vpack.c.b16 %v3162, %v3161
    %v3910 = vpack.c.b16 %v3164, %v3163
    %v3911 = vpack.c.b16 %v3166, %v3165
    %v3912 = vpack.c.b16 %v3168, %v3167
    %v3913 = vpack.c.b16 %v3170, %v3169
    %v3914 = vpack.c.b16 %v3172, %v3171
    %v3915 = vpack.c.b16 %v3174, %v3173
    %v3916 = vpack.c.b16 %v3176, %v3175
    %v3917 = vpack.c.b16 %v3178, %v3177
    %v3918 = vpack.c.b16 %v3180, %v3179
    %v3919 = vpack.c.b16 %v3182, %v3181
    %v3920 = vpack.c.b16 %v3184, %v3183
    %v3921 = vpack.c.b16 %v3186, %v3185
    %v3922 = vpack.c.b16 %v3188, %v3187
    %v3923 = vpack.c.b16 %v3190, %v3189
    %v3924 = vpack.c.b16 %v3192, %v3191
    %v3925 = vpack.c.b16 %v3194, %v3193
    %v3926 = vpack.c.b16 %v3196, %v3195
    %v3927 = vpack.c.b16 %v3198, %v3197
    %v3928 = vpack.c.b16 %v3200, %v3199
    %v3929 = vpack.c.b16 %v3202, %v3201
    %v3930 = vpack.c.b16 %v3204, %v3203
    %v3931 = vpack.c.b16 %v3206, %v3205
    %v3932 = vpack.c.b16 %v3208, %v3207
    %v3933 = vpack.c.b16 %v3210, %v3209
    %v3934 = vpack.c.b16 %v3212, %v3211
    %v3935 = vpack.c.b16 %v3214, %v3213
    %v3936 = vpack.c.b16 %v3216, %v3215
    %v3937 = vpack.c.b16 %v3218, %v3217
    %v3938 = vpack.c.b16 %v3220, %v3219
    %v3939 = vpack.c.b16 %v3222, %v3221
    %v3940 = vpack.c.b16 %v3224, %v3223
    %v3941 = vpack.c.b16 %v3226, %v3225
    %v3942 = vpack.c.b16 %v3228, %v3227
    %v3943 = vpack.c.b16 %v3230, %v3229
    %v3944 = vpack.c.b16 %v3232, %v3231
    %v3945 = vpack.c.b16 %v3234, %v3233
    %v3946 = vpack.c.b16 %v3236, %v3235
    %v3947 = vpack.c.b16 %v3238, %v3237
    %v3948 = vpack.c.b16 %v3240, %v3239
    %v3949 = vpack.c.b16 %v3242, %v3241
    %v3950 = vpack.c.b16 %v3244, %v3243
    %v3951 = vpack.c.b16 %v3246, %v3245
    %v3952 = vpack.c.b16 %v3248, %v3247
    %v3953 = vpack.c.b16 %v3250, %v3249
    %v3954 = vpack.c.b16 %v3252, %v3251
    %v3955 = vpack.c.b16 %v3254, %v3253
    %v3956 = vpack.c.b16 %v3256, %v3255
    %v3957 = vpack.c.b16 %v3258, %v3257
    %v3958 = vpack.c.b16 %v3260, %v3259
    %v3959 = vpack.c.b16 %v3262, %v3261
    %v3960 = vpack.c.b16 %v3264, %v3263
    %v3961 = vpack.c.b16 %v3266, %v3265
    %v3962 = vpack.c.b16 %v3268, %v3267
    %v3963 = vpack.c.b16 %v3270, %v3269
    %v3964 = vpack.c.b16 %v3272, %v3271
    %v3965 = vpack.c.b16 %v3274, %v3273
    %v3966 = vpack.c.b16 %v3276, %v3275
    %v3967 = vpack.c.b16 %v3278, %v3277
    %v3968 = vpack.c.b16 %v3280, %v3279
    %v3969 = vpack.c.b16 %v3282, %v3281
    %v3970 = vpack.c.b16 %v3284, %v3283
    %v3971 = vpack.c.b16 %v3286, %v3285
    %v3972 = vpack.c.b16 %v3288, %v3287
    %v3973 = vpack.c.b16 %v3290, %v3289
    %v3974 = vpack.c.b16 %v3292, %v3291
    %v3975 = vpack.c.b16 %v3294, %v3293
    %v3976 = vpack.c.b16 %v3296, %v3295
    %v3977 = vpack.c.b16 %v3298, %v3297
    %v3978 = vpack.c.b16 %v3300, %v3299
    %v3979 = vpack.c.b16 %v3302, %v3301
    %v3980 = vpack.c.b16 %v3304, %v3303
    %v3981 = vpack.c.b16 %v3306, %v3305
    %v3982 = vpack.c.b16 %v3308, %v3307
    %v3983 = vpack.c.b16 %v3310, %v3309
    %v3984 = vpack.c.b16 %v3312, %v3311
    %v3985 = vpack.c.b16 %v3314, %v3313
    %v3986 = vpack.c.b16 %v3316, %v3315
    %v3987 = vpack.c.b16 %v3318, %v3317
    %v3988 = vpack.c.b16 %v3320, %v3319
    %v3989 = vpack.c.b16 %v3322, %v3321
    %v3990 = vpack.c.b16 %v3324, %v3323
    %v3991 = vpack.c.b16 %v3326, %v3325
    %v3992 = vpack.c.b16 %v3328, %v3327
    %v3993 = vpack.c.b16 %v3330, %v3329
    %v3994 = vpack.c.b16 %v3332, %v3331
    %v3995 = vpack.c.b16 %v3334, %v3333
    %v3996 = vpack.c.b16 %v3336, %v3335
    %v3997 = vpack.c.b16 %v3338, %v3337
    %v3998 = vpack.c.b16 %v3340, %v3339
    %v3999 = vpack.c.b16 %v3342, %v3341
    %v4000 = vpack.c.b16 %v3344, %v3343
    %v4001 = vpack.c.b16 %v3346, %v3345
    %v4002 = vpack.c.b16 %v3348, %v3347
    %v4003 = vpack.c.b16 %v3350, %v3349
    %v4004 = vpack.c.b16 %v3352, %v3351
    %v4005 = vpack.c.b16 %v3354, %v3353
    %v4006 = vpack.c.b16 %v3356, %v3355
    %v4007 = vpack.c.b16 %v3358, %v3357
    %v4008 = vpack.c.b16 %v3360, %v3359
    %v4009 = vpack.c.b16 %v3362, %v3361
    %v4010 = vpack.c.b16 %v3364, %v3363
    %v4011 = vpack.c.b16 %v3366, %v3365
    %v4012 = vpack.c.b16 %v3368, %v3367
    %v4013 = vpack.c.b16 %v3370, %v3369
    %v4014 = vpack.c.b16 %v3372, %v3371
    %v4015 = vpack.c.b16 %v3374, %v3373
    %v4016 = vpack.c.b16 %v3376, %v3375
    %v4017 = vpack.c.b16 %v3378, %v3377
    %v4018 = vpack.c.b16 %v3380, %v3379
    %v4019 = vpack.c.b16 %v3382, %v3381
    %v4020 = vpack.c.b16 %v3384, %v3383
    %v4021 = vpack.c.b16 %v3386, %v3385
    %v4022 = vpack.c.b16 %v3388, %v3387
    %v4023 = vpack.c.b16 %v3390, %v3389
    %v4024 = vpack.c.b16 %v3392, %v3391
    %v4025 = vpack.c.b16 %v3394, %v3393
    %v4026 = vpack.c.b16 %v3396, %v3395
    %v4027 = vpack.c.b16 %v3398, %v3397
    %v4028 = vpack.c.b16 %v3400, %v3399
    %v4029 = vpack.c.b16 %v3402, %v3401
    %v4030 = vpack.c.b16 %v3404, %v3403
    %v4031 = vpack.c.b16 %v3406, %v3405
    %v4032 = vpack.c.b16 %v3408, %v3407
    %v4033 = vpack.c.b16 %v3410, %v3409
    %v4034 = vpack.c.b16 %v3412, %v3411
    %v4035 = vpack.c.b16 %v3414, %v3413
    %v4036 = vpack.c.b16 %v3416, %v3415
    %v4037 = vpack.c.b16 %v3418, %v3417
    %v4038 = vpack.c.b16 %v3420, %v3419
    %v4039 = vpack.c.b16 %v3422, %v3421
    %v4040 = vpack.c.b16 %v3424, %v3423
    %v4041 = vpack.c.b16 %v3426, %v3425
    %v4042 = vpack.c.b16 %v3428, %v3427
    %v4043 = vpack.c.b16 %v3430, %v3429
    %v4044 = vpack.c.b16 %v3432, %v3431
    %v4045 = vpack.c.b16 %v3434, %v3433
    %v4046 = vpack.c.b16 %v3436, %v3435
    %v4047 = vpack.c.b16 %v3438, %v3437
    %v4048 = vpack.c.b16 %v3440, %v3439
    %v4049 = vpack.c.b16 %v3442, %v3441
    %v4050 = vpack.c.b16 %v3444, %v3443
    %v4051 = vpack.c.b16 %v3446, %v3445
    %v4052 = vpack.c.b16 %v3448, %v3447
    %v4053 = vpack.c.b16 %v3450, %v3449
    %v4054 = vpack.c.b16 %v3452, %v3451
    %v4055 = vpack.c.b16 %v3454, %v3453
    %v4056 = vpack.c.b16 %v3456, %v3455
    %v4057 = vpack.c.b16 %v3458, %v3457
    %v4058 = vpack.c.b16 %v3460, %v3459
    %v4059 = vpack.c.b16 %v3462, %v3461
    %v4060 = vpack.c.b16 %v3464, %v3463
    %v4061 = vpack.c.b16 %v3466, %v3465
    %v4062 = vpack.c.b16 %v3468, %v3467
    %v4063 = vpack.c.b16 %v3470, %v3469
    %v4064 = vpack.c.b16 %v3472, %v3471
    %v4065 = vpack.c.b16 %v3474, %v3473
    %v4066 = vpack.c.b16 %v3476, %v3475
    %v4067 = vpack.c.b16 %v3478, %v3477
    %v4068 = vpack.c.b16 %v3480, %v3479
    %v4069 = vpack.c.b16 %v3482, %v3481
    %v4070 = vpack.c.b16 %v3484, %v3483
    %v4071 = vpack.c.b16 %v3486, %v3485
    %v4072 = vpack.c.b16 %v3488, %v3487
    %v4073 = vpack.c.b16 %v3490, %v3489
    %v4074 = vpack.c.b16 %v3492, %v3491
    %v4075 = vpack.c.b16 %v3494, %v3493
    %v4076 = vpack.c.b16 %v3496, %v3495
    %v4077 = vpack.c.b16 %v3498, %v3497
    %v4078 = vpack.c.b16 %v3500, %v3499
    %v4079 = vpack.c.b16 %v3502, %v3501
    %v4080 = vpack.c.b16 %v3504, %v3503
    %v4081 = vpack.c.b16 %v3506, %v3505
    %v4082 = vpack.c.b16 %v3508, %v3507
    %v4083 = vpack.c.b16 %v3510, %v3509
    %v4084 = vpack.c.b16 %v3512, %v3511
    %v4085 = vpack.c.b16 %v3514, %v3513
    %v4086 = vpack.c.b16 %v3516, %v3515
    %v4087 = vpack.c.b16 %v3518, %v3517
    %v4088 = vpack.c.b16 %v3520, %v3519
    %v4089 = vpack.c.b16 %v3522, %v3521
    %v4090 = vpack.c.b16 %v3524, %v3523
    %v4091 = vpack.c.b16 %v3526, %v3525
    %v4092 = vpack.c.b16 %v3528, %v3527
    %v4093 = vpack.c.b16 %v3530, %v3529
    %v4094 = vpack.c.b16 %v3532, %v3531
    %v4095 = vpack.c.b16 %v3534, %v3533
    %v4096 = vpack.c.b16 %v3536, %v3535
    %v4097 = vpack.c.b16 %v3538, %v3537
    %v4098 = vpack.c.b16 %v3540, %v3539
    %v4099 = vpack.c.b16 %v3542, %v3541
    %v4100 = vpack.c.b16 %v3544, %v3543
    %v4101 = vpack.c.b16 %v3546, %v3545
    %v4102 = vpack.c.b16 %v3548, %v3547
    %v4103 = vpack.c.b16 %v3550, %v3549
    %v4104 = vpack.c.b16 %v3552, %v3551
    %v4105 = vpack.c.b16 %v3554, %v3553
    %v4106 = vpack.c.b16 %v3556, %v3555
    %v4107 = vpack.c.b16 %v3558, %v3557
    %v4108 = vpack.c.b16 %v3560, %v3559
    %v4109 = vpack.c.b16 %v3562, %v3561
    %v4110 = vpack.c.b16 %v3564, %v3563
    %v4111 = vpack.c.b16 %v3566, %v3565
    %v4112 = vpack.c.b16 %v3568, %v3567
    %v4113 = vpack.c.b16 %v3570, %v3569
    %v4114 = vpack.c.b16 %v3572, %v3571
    %v4115 = vpack.c.b16 %v3574, %v3573
    %v4116 = vpack.c.b16 %v3576, %v3575
    %v4117 = vpack.c.b16 %v3578, %v3577
    %v4118 = vpack.c.b16 %v3580, %v3579
    %v4119 = vpack.c.b16 %v3582, %v3581
    %v4120 = vpack.c.b16 %v3584, %v3583
    %v4121 = vpack.c.b16 %v3586, %v3585
    %v4122 = vpack.c.b16 %v3588, %v3587
    %v4123 = vpack.c.b16 %v3590, %v3589
    %v4124 = vpack.c.b16 %v3592, %v3591
    %v4125 = vpack.c.b16 %v3594, %v3593
    %v4126 = vpack.c.b16 %v3596, %v3595
    %v4127 = vpack.c.b16 %v3598, %v3597
    %v4128 = vpack.c.b16 %v3600, %v3599
    %4657 = vmatpush.bf16.msra.mxu0 %v3608
    %4658 = vmatpush.bf16.msra.mxu0 %v3607
    %4659 = vmatpush.bf16.msra.mxu0 %v3606
    %4660 = vmatpush.bf16.msra.mxu0 %v3605
    %4661 = vmatpush.bf16.msra.mxu0 %v3604
    %4662 = vmatpush.bf16.msra.mxu0 %v3603
    %4663 = vmatpush.bf16.msra.mxu0 %v3602
    %4664 = vmatpush.bf16.msra.mxu0 %v3601
    %4665 = vmatmul.bf16.gmra.mxu0 %v1357
    %v4666 = vpop.f32.mrf.mxu0
    %v4667 = vadd.f32 %v1157, %v4666
    %v4668 = vpop.f32.mrf.mxu0
    %v4669 = vadd.f32 %v1157, %v4668
    %4670 = vdwg.mxu0
    %4671 = vmatpush.bf16.msra.mxu0 %v3616
    %4672 = vmatpush.bf16.msra.mxu0 %v3615
    %4673 = vmatpush.bf16.msra.mxu0 %v3614
    %4674 = vmatpush.bf16.msra.mxu0 %v3613
    %4675 = vmatpush.bf16.msra.mxu0 %v3612
    %4676 = vmatpush.bf16.msra.mxu0 %v3611
    %4677 = vmatpush.bf16.msra.mxu0 %v3610
    %4678 = vmatpush.bf16.msra.mxu0 %v3609
    %4679 = vmatmul.bf16.gmra.mxu0 %v1358
    %v4680 = vpop.f32.mrf.mxu0
    %v4681 = vadd.f32 %v4667, %v4680
    %v4682 = vpop.f32.mrf.mxu0
    %v4683 = vadd.f32 %v4669, %v4682
    %4684 = vdwg.mxu0
    %4685 = vmatpush.bf16.msra.mxu0 %v3624
    %4686 = vmatpush.bf16.msra.mxu0 %v3623
    %4687 = vmatpush.bf16.msra.mxu0 %v3622
    %4688 = vmatpush.bf16.msra.mxu0 %v3621
    %4689 = vmatpush.bf16.msra.mxu0 %v3620
    %4690 = vmatpush.bf16.msra.mxu0 %v3619
    %4691 = vmatpush.bf16.msra.mxu0 %v3618
    %4692 = vmatpush.bf16.msra.mxu0 %v3617
    %4693 = vmatmul.bf16.gmra.mxu0 %v1359
    %v4694 = vpop.f32.mrf.mxu0
    %v4695 = vadd.f32 %v4681, %v4694
    %v4696 = vpop.f32.mrf.mxu0
    %v4697 = vadd.f32 %v4683, %v4696
    %4698 = vdwg.mxu0
    %4699 = vmatpush.bf16.msra.mxu0 %v3632
    %4700 = vmatpush.bf16.msra.mxu0 %v3631
    %4701 = vmatpush.bf16.msra.mxu0 %v3630
    %4702 = vmatpush.bf16.msra.mxu0 %v3629
    %4703 = vmatpush.bf16.msra.mxu0 %v3628
    %4704 = vmatpush.bf16.msra.mxu0 %v3627
    %4705 = vmatpush.bf16.msra.mxu0 %v3626
    %4706 = vmatpush.bf16.msra.mxu0 %v3625
    %4707 = vmatmul.bf16.gmra.mxu0 %v1360
    %v4708 = vpop.f32.mrf.mxu0
    %v4709 = vadd.f32 %v4695, %v4708
    %v4710 = vpop.f32.mrf.mxu0
    %v4711 = vadd.f32 %v4697, %v4710
    %4712 = vdwg.mxu0
    %4713 = vmatpush.bf16.msra.mxu0 %v3640
    %4714 = vmatpush.bf16.msra.mxu0 %v3639
    %4715 = vmatpush.bf16.msra.mxu0 %v3638
    %4716 = vmatpush.bf16.msra.mxu0 %v3637
    %4717 = vmatpush.bf16.msra.mxu0 %v3636
    %4718 = vmatpush.bf16.msra.mxu0 %v3635
    %4719 = vmatpush.bf16.msra.mxu0 %v3634
    %4720 = vmatpush.bf16.msra.mxu0 %v3633
    %4721 = vmatmul.bf16.gmra.mxu0 %v1361
    %v4722 = vpop.f32.mrf.mxu0
    %v4723 = vadd.f32 %v4709, %v4722
    %v4724 = vpop.f32.mrf.mxu0
    %v4725 = vadd.f32 %v4711, %v4724
    %4726 = vdwg.mxu0
    %4727 = vmatpush.bf16.msra.mxu0 %v3648
    %4728 = vmatpush.bf16.msra.mxu0 %v3647
    %4729 = vmatpush.bf16.msra.mxu0 %v3646
    %4730 = vmatpush.bf16.msra.mxu0 %v3645
    %4731 = vmatpush.bf16.msra.mxu0 %v3644
    %4732 = vmatpush.bf16.msra.mxu0 %v3643
    %4733 = vmatpush.bf16.msra.mxu0 %v3642
    %4734 = vmatpush.bf16.msra.mxu0 %v3641
    %4735 = vmatmul.bf16.gmra.mxu0 %v1362
    %v4736 = vpop.f32.mrf.mxu0
    %v4737 = vadd.f32 %v4723, %v4736
    %v4738 = vpop.f32.mrf.mxu0
    %v4739 = vadd.f32 %v4725, %v4738
    %4740 = vdwg.mxu0
    %4741 = vmatpush.bf16.msra.mxu0 %v3656
    %4742 = vmatpush.bf16.msra.mxu0 %v3655
    %4743 = vmatpush.bf16.msra.mxu0 %v3654
    %4744 = vmatpush.bf16.msra.mxu0 %v3653
    %4745 = vmatpush.bf16.msra.mxu0 %v3652
    %4746 = vmatpush.bf16.msra.mxu0 %v3651
    %4747 = vmatpush.bf16.msra.mxu0 %v3650
    %4748 = vmatpush.bf16.msra.mxu0 %v3649
    %4749 = vmatmul.bf16.gmra.mxu0 %v1363
    %v4750 = vpop.f32.mrf.mxu0
    %v4751 = vadd.f32 %v4737, %v4750
    %v4752 = vpop.f32.mrf.mxu0
    %v4753 = vadd.f32 %v4739, %v4752
    %4754 = vdwg.mxu0
    %4755 = vmatpush.bf16.msra.mxu0 %v3664
    %4756 = vmatpush.bf16.msra.mxu0 %v3663
    %4757 = vmatpush.bf16.msra.mxu0 %v3662
    %4758 = vmatpush.bf16.msra.mxu0 %v3661
    %4759 = vmatpush.bf16.msra.mxu0 %v3660
    %4760 = vmatpush.bf16.msra.mxu0 %v3659
    %4761 = vmatpush.bf16.msra.mxu0 %v3658
    %4762 = vmatpush.bf16.msra.mxu0 %v3657
    %4763 = vmatmul.bf16.gmra.mxu0 %v1364
    %v4764 = vpop.f32.mrf.mxu0
    %v4765 = vadd.f32 %v4751, %v4764
    %v4766 = vpop.f32.mrf.mxu0
    %v4767 = vadd.f32 %v4753, %v4766
    %4768 = vdwg.mxu0
    %4769 = vmatpush.bf16.msra.mxu0 %v3672
    %4770 = vmatpush.bf16.msra.mxu0 %v3671
    %4771 = vmatpush.bf16.msra.mxu0 %v3670
    %4772 = vmatpush.bf16.msra.mxu0 %v3669
    %4773 = vmatpush.bf16.msra.mxu0 %v3668
    %4774 = vmatpush.bf16.msra.mxu0 %v3667
    %4775 = vmatpush.bf16.msra.mxu0 %v3666
    %4776 = vmatpush.bf16.msra.mxu0 %v3665
    %4777 = vmatmul.bf16.gmra.mxu0 %v1365
    %v4778 = vpop.f32.mrf.mxu0
    %v4779 = vadd.f32 %v4765, %v4778
    %v4780 = vpop.f32.mrf.mxu0
    %v4781 = vadd.f32 %v4767, %v4780
    %4782 = vdwg.mxu0
    %4783 = vmatpush.bf16.msra.mxu0 %v3680
    %4784 = vmatpush.bf16.msra.mxu0 %v3679
    %4785 = vmatpush.bf16.msra.mxu0 %v3678
    %4786 = vmatpush.bf16.msra.mxu0 %v3677
    %4787 = vmatpush.bf16.msra.mxu0 %v3676
    %4788 = vmatpush.bf16.msra.mxu0 %v3675
    %4789 = vmatpush.bf16.msra.mxu0 %v3674
    %4790 = vmatpush.bf16.msra.mxu0 %v3673
    %4791 = vmatmul.bf16.gmra.mxu0 %v1366
    %v4792 = vpop.f32.mrf.mxu0
    %v4793 = vadd.f32 %v4779, %v4792
    %v4794 = vpop.f32.mrf.mxu0
    %v4795 = vadd.f32 %v4781, %v4794
    %4796 = vdwg.mxu0
    %4797 = vmatpush.bf16.msra.mxu0 %v3688
    %4798 = vmatpush.bf16.msra.mxu0 %v3687
    %4799 = vmatpush.bf16.msra.mxu0 %v3686
    %4800 = vmatpush.bf16.msra.mxu0 %v3685
    %4801 = vmatpush.bf16.msra.mxu0 %v3684
    %4802 = vmatpush.bf16.msra.mxu0 %v3683
    %4803 = vmatpush.bf16.msra.mxu0 %v3682
    %4804 = vmatpush.bf16.msra.mxu0 %v3681
    %4805 = vmatmul.bf16.gmra.mxu0 %v1367
    %v4806 = vpop.f32.mrf.mxu0
    %v4807 = vadd.f32 %v4793, %v4806
    %v4808 = vpop.f32.mrf.mxu0
    %v4809 = vadd.f32 %v4795, %v4808
    %4810 = vdwg.mxu0
    %4811 = vmatpush.bf16.msra.mxu0 %v3696
    %4812 = vmatpush.bf16.msra.mxu0 %v3695
    %4813 = vmatpush.bf16.msra.mxu0 %v3694
    %4814 = vmatpush.bf16.msra.mxu0 %v3693
    %4815 = vmatpush.bf16.msra.mxu0 %v3692
    %4816 = vmatpush.bf16.msra.mxu0 %v3691
    %4817 = vmatpush.bf16.msra.mxu0 %v3690
    %4818 = vmatpush.bf16.msra.mxu0 %v3689
    %4819 = vmatmul.bf16.gmra.mxu0 %v1368
    %v4820 = vpop.f32.mrf.mxu0
    %v4821 = vadd.f32 %v4807, %v4820
    %v4822 = vpop.f32.mrf.mxu0
    %v4823 = vadd.f32 %v4809, %v4822
    %4824 = vdwg.mxu0
    %4825 = vmatpush.bf16.msra.mxu0 %v3704
    %4826 = vmatpush.bf16.msra.mxu0 %v3703
    %4827 = vmatpush.bf16.msra.mxu0 %v3702
    %4828 = vmatpush.bf16.msra.mxu0 %v3701
    %4829 = vmatpush.bf16.msra.mxu0 %v3700
    %4830 = vmatpush.bf16.msra.mxu0 %v3699
    %4831 = vmatpush.bf16.msra.mxu0 %v3698
    %4832 = vmatpush.bf16.msra.mxu0 %v3697
    %4833 = vmatmul.bf16.gmra.mxu0 %v1369
    %v4834 = vpop.f32.mrf.mxu0
    %v4835 = vadd.f32 %v4821, %v4834
    %v4836 = vpop.f32.mrf.mxu0
    %v4837 = vadd.f32 %v4823, %v4836
    %4838 = vdwg.mxu0
    %4839 = vmatpush.bf16.msra.mxu0 %v3712
    %4840 = vmatpush.bf16.msra.mxu0 %v3711
    %4841 = vmatpush.bf16.msra.mxu0 %v3710
    %4842 = vmatpush.bf16.msra.mxu0 %v3709
    %4843 = vmatpush.bf16.msra.mxu0 %v3708
    %4844 = vmatpush.bf16.msra.mxu0 %v3707
    %4845 = vmatpush.bf16.msra.mxu0 %v3706
    %4846 = vmatpush.bf16.msra.mxu0 %v3705
    %4847 = vmatmul.bf16.gmra.mxu0 %v1370
    %v4848 = vpop.f32.mrf.mxu0
    %v4849 = vadd.f32 %v4835, %v4848
    %v4850 = vpop.f32.mrf.mxu0
    %v4851 = vadd.f32 %v4837, %v4850
    %4852 = vdwg.mxu0
    %4853 = vmatpush.bf16.msra.mxu0 %v3720
    %4854 = vmatpush.bf16.msra.mxu0 %v3719
    %4855 = vmatpush.bf16.msra.mxu0 %v3718
    %4856 = vmatpush.bf16.msra.mxu0 %v3717
    %4857 = vmatpush.bf16.msra.mxu0 %v3716
    %4858 = vmatpush.bf16.msra.mxu0 %v3715
    %4859 = vmatpush.bf16.msra.mxu0 %v3714
    %4860 = vmatpush.bf16.msra.mxu0 %v3713
    %4861 = vmatmul.bf16.gmra.mxu0 %v1371
    %v4862 = vpop.f32.mrf.mxu0
    %v4863 = vadd.f32 %v4849, %v4862
    %v4864 = vpop.f32.mrf.mxu0
    %v4865 = vadd.f32 %v4851, %v4864
    %4866 = vdwg.mxu0
    %4867 = vmatpush.bf16.msra.mxu0 %v3728
    %4868 = vmatpush.bf16.msra.mxu0 %v3727
    %4869 = vmatpush.bf16.msra.mxu0 %v3726
    %4870 = vmatpush.bf16.msra.mxu0 %v3725
    %4871 = vmatpush.bf16.msra.mxu0 %v3724
    %4872 = vmatpush.bf16.msra.mxu0 %v3723
    %4873 = vmatpush.bf16.msra.mxu0 %v3722
    %4874 = vmatpush.bf16.msra.mxu0 %v3721
    %4875 = vmatmul.bf16.gmra.mxu0 %v1372
    %v4876 = vpop.f32.mrf.mxu0
    %v4877 = vadd.f32 %v4863, %v4876
    %v4878 = vpop.f32.mrf.mxu0
    %v4879 = vadd.f32 %v4865, %v4878
    %4880 = vdwg.mxu0
    %4881 = vmatpush.bf16.msra.mxu0 %v3736
    %4882 = vmatpush.bf16.msra.mxu0 %v3735
    %4883 = vmatpush.bf16.msra.mxu0 %v3734
    %4884 = vmatpush.bf16.msra.mxu0 %v3733
    %4885 = vmatpush.bf16.msra.mxu0 %v3732
    %4886 = vmatpush.bf16.msra.mxu0 %v3731
    %4887 = vmatpush.bf16.msra.mxu0 %v3730
    %4888 = vmatpush.bf16.msra.mxu0 %v3729
    %4889 = vmatmul.bf16.gmra.mxu0 %v1373
    %v4890 = vpop.f32.mrf.mxu0
    %v4891 = vadd.f32 %v4877, %v4890
    %v4892 = vpop.f32.mrf.mxu0
    %v4893 = vadd.f32 %v4879, %v4892
    %4894 = vdwg.mxu0
    %4895 = vmatpush.bf16.msra.mxu0 %v3744
    %4896 = vmatpush.bf16.msra.mxu0 %v3743
    %4897 = vmatpush.bf16.msra.mxu0 %v3742
    %4898 = vmatpush.bf16.msra.mxu0 %v3741
    %4899 = vmatpush.bf16.msra.mxu0 %v3740
    %4900 = vmatpush.bf16.msra.mxu0 %v3739
    %4901 = vmatpush.bf16.msra.mxu0 %v3738
    %4902 = vmatpush.bf16.msra.mxu0 %v3737
    %4903 = vmatmul.bf16.gmra.mxu0 %v1374
    %v4904 = vpop.f32.mrf.mxu0
    %v4905 = vadd.f32 %v4891, %v4904
    %v4906 = vpop.f32.mrf.mxu0
    %v4907 = vadd.f32 %v4893, %v4906
    %4908 = vdwg.mxu0
    %4909 = vmatpush.bf16.msra.mxu0 %v3752
    %4910 = vmatpush.bf16.msra.mxu0 %v3751
    %4911 = vmatpush.bf16.msra.mxu0 %v3750
    %4912 = vmatpush.bf16.msra.mxu0 %v3749
    %4913 = vmatpush.bf16.msra.mxu0 %v3748
    %4914 = vmatpush.bf16.msra.mxu0 %v3747
    %4915 = vmatpush.bf16.msra.mxu0 %v3746
    %4916 = vmatpush.bf16.msra.mxu0 %v3745
    %4917 = vmatmul.bf16.gmra.mxu0 %v1375
    %v4918 = vpop.f32.mrf.mxu0
    %v4919 = vadd.f32 %v4905, %v4918
    %v4920 = vpop.f32.mrf.mxu0
    %v4921 = vadd.f32 %v4907, %v4920
    %4922 = vdwg.mxu0
    %4923 = vmatpush.bf16.msra.mxu0 %v3760
    %4924 = vmatpush.bf16.msra.mxu0 %v3759
    %4925 = vmatpush.bf16.msra.mxu0 %v3758
    %4926 = vmatpush.bf16.msra.mxu0 %v3757
    %4927 = vmatpush.bf16.msra.mxu0 %v3756
    %4928 = vmatpush.bf16.msra.mxu0 %v3755
    %4929 = vmatpush.bf16.msra.mxu0 %v3754
    %4930 = vmatpush.bf16.msra.mxu0 %v3753
    %4931 = vmatmul.bf16.gmra.mxu0 %v1376
    %v4932 = vpop.f32.mrf.mxu0
    %v4933 = vadd.f32 %v4919, %v4932
    %v4934 = vpop.f32.mrf.mxu0
    %v4935 = vadd.f32 %v4921, %v4934
    %4936 = vdwg.mxu0
    %4937 = vmatpush.bf16.msra.mxu0 %v3768
    %4938 = vmatpush.bf16.msra.mxu0 %v3767
    %4939 = vmatpush.bf16.msra.mxu0 %v3766
    %4940 = vmatpush.bf16.msra.mxu0 %v3765
    %4941 = vmatpush.bf16.msra.mxu0 %v3764
    %4942 = vmatpush.bf16.msra.mxu0 %v3763
    %4943 = vmatpush.bf16.msra.mxu0 %v3762
    %4944 = vmatpush.bf16.msra.mxu0 %v3761
    %4945 = vmatmul.bf16.gmra.mxu0 %v1377
    %v4946 = vpop.f32.mrf.mxu0
    %v4947 = vadd.f32 %v4933, %v4946
    %v4948 = vpop.f32.mrf.mxu0
    %v4949 = vadd.f32 %v4935, %v4948
    %4950 = vdwg.mxu0
    %4951 = vmatpush.bf16.msra.mxu0 %v3776
    %4952 = vmatpush.bf16.msra.mxu0 %v3775
    %4953 = vmatpush.bf16.msra.mxu0 %v3774
    %4954 = vmatpush.bf16.msra.mxu0 %v3773
    %4955 = vmatpush.bf16.msra.mxu0 %v3772
    %4956 = vmatpush.bf16.msra.mxu0 %v3771
    %4957 = vmatpush.bf16.msra.mxu0 %v3770
    %4958 = vmatpush.bf16.msra.mxu0 %v3769
    %4959 = vmatmul.bf16.gmra.mxu0 %v1378
    %v4960 = vpop.f32.mrf.mxu0
    %v4961 = vadd.f32 %v4947, %v4960
    %v4962 = vpop.f32.mrf.mxu0
    %v4963 = vadd.f32 %v4949, %v4962
    %4964 = vdwg.mxu0
    %4965 = vmatpush.bf16.msra.mxu0 %v3784
    %4966 = vmatpush.bf16.msra.mxu0 %v3783
    %4967 = vmatpush.bf16.msra.mxu0 %v3782
    %4968 = vmatpush.bf16.msra.mxu0 %v3781
    %4969 = vmatpush.bf16.msra.mxu0 %v3780
    %4970 = vmatpush.bf16.msra.mxu0 %v3779
    %4971 = vmatpush.bf16.msra.mxu0 %v3778
    %4972 = vmatpush.bf16.msra.mxu0 %v3777
    %4973 = vmatmul.bf16.gmra.mxu0 %v1379
    %v4974 = vpop.f32.mrf.mxu0
    %v4975 = vadd.f32 %v4961, %v4974
    %v4976 = vpop.f32.mrf.mxu0
    %v4977 = vadd.f32 %v4963, %v4976
    %4978 = vdwg.mxu0
    %4979 = vmatpush.bf16.msra.mxu0 %v3792
    %4980 = vmatpush.bf16.msra.mxu0 %v3791
    %4981 = vmatpush.bf16.msra.mxu0 %v3790
    %4982 = vmatpush.bf16.msra.mxu0 %v3789
    %4983 = vmatpush.bf16.msra.mxu0 %v3788
    %4984 = vmatpush.bf16.msra.mxu0 %v3787
    %4985 = vmatpush.bf16.msra.mxu0 %v3786
    %4986 = vmatpush.bf16.msra.mxu0 %v3785
    %4987 = vmatmul.bf16.gmra.mxu0 %v1380
    %v4988 = vpop.f32.mrf.mxu0
    %v4989 = vadd.f32 %v4975, %v4988
    %v4990 = vpop.f32.mrf.mxu0
    %v4991 = vadd.f32 %v4977, %v4990
    %4992 = vdwg.mxu0
    %4993 = vmatpush.bf16.msra.mxu0 %v3800
    %4994 = vmatpush.bf16.msra.mxu0 %v3799
    %4995 = vmatpush.bf16.msra.mxu0 %v3798
    %4996 = vmatpush.bf16.msra.mxu0 %v3797
    %4997 = vmatpush.bf16.msra.mxu0 %v3796
    %4998 = vmatpush.bf16.msra.mxu0 %v3795
    %4999 = vmatpush.bf16.msra.mxu0 %v3794
    %5000 = vmatpush.bf16.msra.mxu0 %v3793
    %5001 = vmatmul.bf16.gmra.mxu0 %v1381
    %v5002 = vpop.f32.mrf.mxu0
    %v5003 = vadd.f32 %v4989, %v5002
    %v5004 = vpop.f32.mrf.mxu0
    %v5005 = vadd.f32 %v4991, %v5004
    %5006 = vdwg.mxu0
    %5007 = vmatpush.bf16.msra.mxu0 %v3808
    %5008 = vmatpush.bf16.msra.mxu0 %v3807
    %5009 = vmatpush.bf16.msra.mxu0 %v3806
    %5010 = vmatpush.bf16.msra.mxu0 %v3805
    %5011 = vmatpush.bf16.msra.mxu0 %v3804
    %5012 = vmatpush.bf16.msra.mxu0 %v3803
    %5013 = vmatpush.bf16.msra.mxu0 %v3802
    %5014 = vmatpush.bf16.msra.mxu0 %v3801
    %5015 = vmatmul.bf16.gmra.mxu0 %v1382
    %v5016 = vpop.f32.mrf.mxu0
    %v5017 = vadd.f32 %v5003, %v5016
    %v5018 = vpop.f32.mrf.mxu0
    %v5019 = vadd.f32 %v5005, %v5018
    %5020 = vdwg.mxu0
    %5021 = vmatpush.bf16.msra.mxu0 %v3816
    %5022 = vmatpush.bf16.msra.mxu0 %v3815
    %5023 = vmatpush.bf16.msra.mxu0 %v3814
    %5024 = vmatpush.bf16.msra.mxu0 %v3813
    %5025 = vmatpush.bf16.msra.mxu0 %v3812
    %5026 = vmatpush.bf16.msra.mxu0 %v3811
    %5027 = vmatpush.bf16.msra.mxu0 %v3810
    %5028 = vmatpush.bf16.msra.mxu0 %v3809
    %5029 = vmatmul.bf16.gmra.mxu0 %v1383
    %v5030 = vpop.f32.mrf.mxu0
    %v5031 = vadd.f32 %v5017, %v5030
    %v5032 = vpop.f32.mrf.mxu0
    %v5033 = vadd.f32 %v5019, %v5032
    %5034 = vdwg.mxu0
    %5035 = vmatpush.bf16.msra.mxu0 %v3824
    %5036 = vmatpush.bf16.msra.mxu0 %v3823
    %5037 = vmatpush.bf16.msra.mxu0 %v3822
    %5038 = vmatpush.bf16.msra.mxu0 %v3821
    %5039 = vmatpush.bf16.msra.mxu0 %v3820
    %5040 = vmatpush.bf16.msra.mxu0 %v3819
    %5041 = vmatpush.bf16.msra.mxu0 %v3818
    %5042 = vmatpush.bf16.msra.mxu0 %v3817
    %5043 = vmatmul.bf16.gmra.mxu0 %v1384
    %v5044 = vpop.f32.mrf.mxu0
    %v5045 = vadd.f32 %v5031, %v5044
    %v5046 = vpop.f32.mrf.mxu0
    %v5047 = vadd.f32 %v5033, %v5046
    %5048 = vdwg.mxu0
    %5049 = vmatpush.bf16.msra.mxu0 %v3832
    %5050 = vmatpush.bf16.msra.mxu0 %v3831
    %5051 = vmatpush.bf16.msra.mxu0 %v3830
    %5052 = vmatpush.bf16.msra.mxu0 %v3829
    %5053 = vmatpush.bf16.msra.mxu0 %v3828
    %5054 = vmatpush.bf16.msra.mxu0 %v3827
    %5055 = vmatpush.bf16.msra.mxu0 %v3826
    %5056 = vmatpush.bf16.msra.mxu0 %v3825
    %5057 = vmatmul.bf16.gmra.mxu0 %v1385
    %v5058 = vpop.f32.mrf.mxu0
    %v5059 = vadd.f32 %v5045, %v5058
    %v5060 = vpop.f32.mrf.mxu0
    %v5061 = vadd.f32 %v5047, %v5060
    %5062 = vdwg.mxu0
    %5063 = vmatpush.bf16.msra.mxu0 %v3840
    %5064 = vmatpush.bf16.msra.mxu0 %v3839
    %5065 = vmatpush.bf16.msra.mxu0 %v3838
    %5066 = vmatpush.bf16.msra.mxu0 %v3837
    %5067 = vmatpush.bf16.msra.mxu0 %v3836
    %5068 = vmatpush.bf16.msra.mxu0 %v3835
    %5069 = vmatpush.bf16.msra.mxu0 %v3834
    %5070 = vmatpush.bf16.msra.mxu0 %v3833
    %5071 = vmatmul.bf16.gmra.mxu0 %v1386
    %v5072 = vpop.f32.mrf.mxu0
    %v5073 = vadd.f32 %v5059, %v5072
    %v5074 = vpop.f32.mrf.mxu0
    %v5075 = vadd.f32 %v5061, %v5074
    %5076 = vdwg.mxu0
    %5077 = vmatpush.bf16.msra.mxu0 %v3848
    %5078 = vmatpush.bf16.msra.mxu0 %v3847
    %5079 = vmatpush.bf16.msra.mxu0 %v3846
    %5080 = vmatpush.bf16.msra.mxu0 %v3845
    %5081 = vmatpush.bf16.msra.mxu0 %v3844
    %5082 = vmatpush.bf16.msra.mxu0 %v3843
    %5083 = vmatpush.bf16.msra.mxu0 %v3842
    %5084 = vmatpush.bf16.msra.mxu0 %v3841
    %5085 = vmatmul.bf16.gmra.mxu0 %v1387
    %v5086 = vpop.f32.mrf.mxu0
    %v5087 = vadd.f32 %v5073, %v5086
    %v5088 = vpop.f32.mrf.mxu0
    %v5089 = vadd.f32 %v5075, %v5088
    %5090 = vdwg.mxu0
    %5091 = vmatpush.bf16.msra.mxu0 %v3856
    %5092 = vmatpush.bf16.msra.mxu0 %v3855
    %5093 = vmatpush.bf16.msra.mxu0 %v3854
    %5094 = vmatpush.bf16.msra.mxu0 %v3853
    %5095 = vmatpush.bf16.msra.mxu0 %v3852
    %5096 = vmatpush.bf16.msra.mxu0 %v3851
    %5097 = vmatpush.bf16.msra.mxu0 %v3850
    %5098 = vmatpush.bf16.msra.mxu0 %v3849
    %5099 = vmatmul.bf16.gmra.mxu0 %v1388
    %v5100 = vpop.f32.mrf.mxu0
    %v5101 = vadd.f32 %v5087, %v5100
    %v5102 = vpop.f32.mrf.mxu0
    %v5103 = vadd.f32 %v5089, %v5102
    %5104 = vdwg.mxu0
    %5105 = vmatpush.bf16.msra.mxu0 %v3864
    %5106 = vmatpush.bf16.msra.mxu0 %v3863
    %5107 = vmatpush.bf16.msra.mxu0 %v3862
    %5108 = vmatpush.bf16.msra.mxu0 %v3861
    %5109 = vmatpush.bf16.msra.mxu0 %v3860
    %5110 = vmatpush.bf16.msra.mxu0 %v3859
    %5111 = vmatpush.bf16.msra.mxu0 %v3858
    %5112 = vmatpush.bf16.msra.mxu0 %v3857
    %5113 = vmatmul.bf16.gmra.mxu0 %v1389
    %v5114 = vpop.f32.mrf.mxu0
    %v5115 = vadd.f32 %v5101, %v5114
    %v5116 = vpop.f32.mrf.mxu0
    %v5117 = vadd.f32 %v5103, %v5116
    %5118 = vdwg.mxu0
    %5119 = vmatpush.bf16.msra.mxu0 %v3872
    %5120 = vmatpush.bf16.msra.mxu0 %v3871
    %5121 = vmatpush.bf16.msra.mxu0 %v3870
    %5122 = vmatpush.bf16.msra.mxu0 %v3869
    %5123 = vmatpush.bf16.msra.mxu0 %v3868
    %5124 = vmatpush.bf16.msra.mxu0 %v3867
    %5125 = vmatpush.bf16.msra.mxu0 %v3866
    %5126 = vmatpush.bf16.msra.mxu0 %v3865
    %5127 = vmatmul.bf16.gmra.mxu0 %v1390
    %v5128 = vpop.f32.mrf.mxu0
    %v5129 = vadd.f32 %v5115, %v5128
    %v5130 = vpop.f32.mrf.mxu0
    %v5131 = vadd.f32 %v5117, %v5130
    %5132 = vdwg.mxu0
    %5133 = vmatpush.bf16.msra.mxu0 %v3880
    %5134 = vmatpush.bf16.msra.mxu0 %v3879
    %5135 = vmatpush.bf16.msra.mxu0 %v3878
    %5136 = vmatpush.bf16.msra.mxu0 %v3877
    %5137 = vmatpush.bf16.msra.mxu0 %v3876
    %5138 = vmatpush.bf16.msra.mxu0 %v3875
    %5139 = vmatpush.bf16.msra.mxu0 %v3874
    %5140 = vmatpush.bf16.msra.mxu0 %v3873
    %5141 = vmatmul.bf16.gmra.mxu0 %v1391
    %v5142 = vpop.f32.mrf.mxu0
    %v5143 = vadd.f32 %v5129, %v5142
    %v5144 = vpop.f32.mrf.mxu0
    %v5145 = vadd.f32 %v5131, %v5144
    %5146 = vdwg.mxu0
    %5147 = vmatpush.bf16.msra.mxu0 %v3888
    %5148 = vmatpush.bf16.msra.mxu0 %v3887
    %5149 = vmatpush.bf16.msra.mxu0 %v3886
    %5150 = vmatpush.bf16.msra.mxu0 %v3885
    %5151 = vmatpush.bf16.msra.mxu0 %v3884
    %5152 = vmatpush.bf16.msra.mxu0 %v3883
    %5153 = vmatpush.bf16.msra.mxu0 %v3882
    %5154 = vmatpush.bf16.msra.mxu0 %v3881
    %5155 = vmatmul.bf16.gmra.mxu0 %v1392
    %v5156 = vpop.f32.mrf.mxu0
    %v5157 = vadd.f32 %v5143, %v5156
    %v5158 = vpop.f32.mrf.mxu0
    %v5159 = vadd.f32 %v5145, %v5158
    %5160 = vdwg.mxu0
    %5161 = vmatpush.bf16.msra.mxu0 %v3896
    %5162 = vmatpush.bf16.msra.mxu0 %v3895
    %5163 = vmatpush.bf16.msra.mxu0 %v3894
    %5164 = vmatpush.bf16.msra.mxu0 %v3893
    %5165 = vmatpush.bf16.msra.mxu0 %v3892
    %5166 = vmatpush.bf16.msra.mxu0 %v3891
    %5167 = vmatpush.bf16.msra.mxu0 %v3890
    %5168 = vmatpush.bf16.msra.mxu0 %v3889
    %5169 = vmatmul.bf16.gmra.mxu0 %v1393
    %v5170 = vpop.f32.mrf.mxu0
    %v5171 = vadd.f32 %v5157, %v5170
    %v5172 = vpop.f32.mrf.mxu0
    %v5173 = vadd.f32 %v5159, %v5172
    %5174 = vdwg.mxu0
    %5175 = vmatpush.bf16.msra.mxu0 %v3904
    %5176 = vmatpush.bf16.msra.mxu0 %v3903
    %5177 = vmatpush.bf16.msra.mxu0 %v3902
    %5178 = vmatpush.bf16.msra.mxu0 %v3901
    %5179 = vmatpush.bf16.msra.mxu0 %v3900
    %5180 = vmatpush.bf16.msra.mxu0 %v3899
    %5181 = vmatpush.bf16.msra.mxu0 %v3898
    %5182 = vmatpush.bf16.msra.mxu0 %v3897
    %5183 = vmatmul.bf16.gmra.mxu0 %v1394
    %v5184 = vpop.f32.mrf.mxu0
    %v5185 = vadd.f32 %v5171, %v5184
    %v5186 = vpop.f32.mrf.mxu0
    %v5187 = vadd.f32 %v5173, %v5186
    %5188 = vdwg.mxu0
    %5189 = vmatpush.bf16.msra.mxu0 %v3912
    %5190 = vmatpush.bf16.msra.mxu0 %v3911
    %5191 = vmatpush.bf16.msra.mxu0 %v3910
    %5192 = vmatpush.bf16.msra.mxu0 %v3909
    %5193 = vmatpush.bf16.msra.mxu0 %v3908
    %5194 = vmatpush.bf16.msra.mxu0 %v3907
    %5195 = vmatpush.bf16.msra.mxu0 %v3906
    %5196 = vmatpush.bf16.msra.mxu0 %v3905
    %5197 = vmatmul.bf16.gmra.mxu0 %v1395
    %v5198 = vpop.f32.mrf.mxu0
    %v5199 = vadd.f32 %v5185, %v5198
    %v5200 = vpop.f32.mrf.mxu0
    %v5201 = vadd.f32 %v5187, %v5200
    %5202 = vdwg.mxu0
    %5203 = vmatpush.bf16.msra.mxu0 %v3920
    %5204 = vmatpush.bf16.msra.mxu0 %v3919
    %5205 = vmatpush.bf16.msra.mxu0 %v3918
    %5206 = vmatpush.bf16.msra.mxu0 %v3917
    %5207 = vmatpush.bf16.msra.mxu0 %v3916
    %5208 = vmatpush.bf16.msra.mxu0 %v3915
    %5209 = vmatpush.bf16.msra.mxu0 %v3914
    %5210 = vmatpush.bf16.msra.mxu0 %v3913
    %5211 = vmatmul.bf16.gmra.mxu0 %v1396
    %v5212 = vpop.f32.mrf.mxu0
    %v5213 = vadd.f32 %v5199, %v5212
    %v5214 = vpop.f32.mrf.mxu0
    %v5215 = vadd.f32 %v5201, %v5214
    %5216 = vdwg.mxu0
    %5217 = vmatpush.bf16.msra.mxu0 %v3928
    %5218 = vmatpush.bf16.msra.mxu0 %v3927
    %5219 = vmatpush.bf16.msra.mxu0 %v3926
    %5220 = vmatpush.bf16.msra.mxu0 %v3925
    %5221 = vmatpush.bf16.msra.mxu0 %v3924
    %5222 = vmatpush.bf16.msra.mxu0 %v3923
    %5223 = vmatpush.bf16.msra.mxu0 %v3922
    %5224 = vmatpush.bf16.msra.mxu0 %v3921
    %5225 = vmatmul.bf16.gmra.mxu0 %v1397
    %v5226 = vpop.f32.mrf.mxu0
    %v5227 = vadd.f32 %v5213, %v5226
    %v5228 = vpop.f32.mrf.mxu0
    %v5229 = vadd.f32 %v5215, %v5228
    %5230 = vdwg.mxu0
    %5231 = vmatpush.bf16.msra.mxu0 %v3936
    %5232 = vmatpush.bf16.msra.mxu0 %v3935
    %5233 = vmatpush.bf16.msra.mxu0 %v3934
    %5234 = vmatpush.bf16.msra.mxu0 %v3933
    %5235 = vmatpush.bf16.msra.mxu0 %v3932
    %5236 = vmatpush.bf16.msra.mxu0 %v3931
    %5237 = vmatpush.bf16.msra.mxu0 %v3930
    %5238 = vmatpush.bf16.msra.mxu0 %v3929
    %5239 = vmatmul.bf16.gmra.mxu0 %v1398
    %v5240 = vpop.f32.mrf.mxu0
    %v5241 = vadd.f32 %v5227, %v5240
    %v5242 = vpop.f32.mrf.mxu0
    %v5243 = vadd.f32 %v5229, %v5242
    %5244 = vdwg.mxu0
    %5245 = vmatpush.bf16.msra.mxu0 %v3944
    %5246 = vmatpush.bf16.msra.mxu0 %v3943
    %5247 = vmatpush.bf16.msra.mxu0 %v3942
    %5248 = vmatpush.bf16.msra.mxu0 %v3941
    %5249 = vmatpush.bf16.msra.mxu0 %v3940
    %5250 = vmatpush.bf16.msra.mxu0 %v3939
    %5251 = vmatpush.bf16.msra.mxu0 %v3938
    %5252 = vmatpush.bf16.msra.mxu0 %v3937
    %5253 = vmatmul.bf16.gmra.mxu0 %v1399
    %v5254 = vpop.f32.mrf.mxu0
    %v5255 = vadd.f32 %v5241, %v5254
    %v5256 = vpop.f32.mrf.mxu0
    %v5257 = vadd.f32 %v5243, %v5256
    %5258 = vdwg.mxu0
    %5259 = vmatpush.bf16.msra.mxu0 %v3952
    %5260 = vmatpush.bf16.msra.mxu0 %v3951
    %5261 = vmatpush.bf16.msra.mxu0 %v3950
    %5262 = vmatpush.bf16.msra.mxu0 %v3949
    %5263 = vmatpush.bf16.msra.mxu0 %v3948
    %5264 = vmatpush.bf16.msra.mxu0 %v3947
    %5265 = vmatpush.bf16.msra.mxu0 %v3946
    %5266 = vmatpush.bf16.msra.mxu0 %v3945
    %5267 = vmatmul.bf16.gmra.mxu0 %v1400
    %v5268 = vpop.f32.mrf.mxu0
    %v5269 = vadd.f32 %v5255, %v5268
    %v5270 = vpop.f32.mrf.mxu0
    %v5271 = vadd.f32 %v5257, %v5270
    %5272 = vdwg.mxu0
    %5273 = vmatpush.bf16.msra.mxu0 %v3960
    %5274 = vmatpush.bf16.msra.mxu0 %v3959
    %5275 = vmatpush.bf16.msra.mxu0 %v3958
    %5276 = vmatpush.bf16.msra.mxu0 %v3957
    %5277 = vmatpush.bf16.msra.mxu0 %v3956
    %5278 = vmatpush.bf16.msra.mxu0 %v3955
    %5279 = vmatpush.bf16.msra.mxu0 %v3954
    %5280 = vmatpush.bf16.msra.mxu0 %v3953
    %5281 = vmatmul.bf16.gmra.mxu0 %v1401
    %v5282 = vpop.f32.mrf.mxu0
    %v5283 = vadd.f32 %v5269, %v5282
    %v5284 = vpop.f32.mrf.mxu0
    %v5285 = vadd.f32 %v5271, %v5284
    %5286 = vdwg.mxu0
    %5287 = vmatpush.bf16.msra.mxu0 %v3968
    %5288 = vmatpush.bf16.msra.mxu0 %v3967
    %5289 = vmatpush.bf16.msra.mxu0 %v3966
    %5290 = vmatpush.bf16.msra.mxu0 %v3965
    %5291 = vmatpush.bf16.msra.mxu0 %v3964
    %5292 = vmatpush.bf16.msra.mxu0 %v3963
    %5293 = vmatpush.bf16.msra.mxu0 %v3962
    %5294 = vmatpush.bf16.msra.mxu0 %v3961
    %5295 = vmatmul.bf16.gmra.mxu0 %v1402
    %v5296 = vpop.f32.mrf.mxu0
    %v5297 = vadd.f32 %v5283, %v5296
    %v5298 = vpop.f32.mrf.mxu0
    %v5299 = vadd.f32 %v5285, %v5298
    %5300 = vdwg.mxu0
    %5301 = vmatpush.bf16.msra.mxu0 %v3976
    %5302 = vmatpush.bf16.msra.mxu0 %v3975
    %5303 = vmatpush.bf16.msra.mxu0 %v3974
    %5304 = vmatpush.bf16.msra.mxu0 %v3973
    %5305 = vmatpush.bf16.msra.mxu0 %v3972
    %5306 = vmatpush.bf16.msra.mxu0 %v3971
    %5307 = vmatpush.bf16.msra.mxu0 %v3970
    %5308 = vmatpush.bf16.msra.mxu0 %v3969
    %5309 = vmatmul.bf16.gmra.mxu0 %v1403
    %v5310 = vpop.f32.mrf.mxu0
    %v5311 = vadd.f32 %v5297, %v5310
    %v5312 = vpop.f32.mrf.mxu0
    %v5313 = vadd.f32 %v5299, %v5312
    %5314 = vdwg.mxu0
    %5315 = vmatpush.bf16.msra.mxu0 %v3984
    %5316 = vmatpush.bf16.msra.mxu0 %v3983
    %5317 = vmatpush.bf16.msra.mxu0 %v3982
    %5318 = vmatpush.bf16.msra.mxu0 %v3981
    %5319 = vmatpush.bf16.msra.mxu0 %v3980
    %5320 = vmatpush.bf16.msra.mxu0 %v3979
    %5321 = vmatpush.bf16.msra.mxu0 %v3978
    %5322 = vmatpush.bf16.msra.mxu0 %v3977
    %5323 = vmatmul.bf16.gmra.mxu0 %v1404
    %v5324 = vpop.f32.mrf.mxu0
    %v5325 = vadd.f32 %v5311, %v5324
    %v5326 = vpop.f32.mrf.mxu0
    %v5327 = vadd.f32 %v5313, %v5326
    %5328 = vdwg.mxu0
    %5329 = vmatpush.bf16.msra.mxu0 %v3992
    %5330 = vmatpush.bf16.msra.mxu0 %v3991
    %5331 = vmatpush.bf16.msra.mxu0 %v3990
    %5332 = vmatpush.bf16.msra.mxu0 %v3989
    %5333 = vmatpush.bf16.msra.mxu0 %v3988
    %5334 = vmatpush.bf16.msra.mxu0 %v3987
    %5335 = vmatpush.bf16.msra.mxu0 %v3986
    %5336 = vmatpush.bf16.msra.mxu0 %v3985
    %5337 = vmatmul.bf16.gmra.mxu0 %v1405
    %v5338 = vpop.f32.mrf.mxu0
    %v5339 = vadd.f32 %v5325, %v5338
    %v5340 = vpop.f32.mrf.mxu0
    %v5341 = vadd.f32 %v5327, %v5340
    %5342 = vdwg.mxu0
    %5343 = vmatpush.bf16.msra.mxu0 %v4000
    %5344 = vmatpush.bf16.msra.mxu0 %v3999
    %5345 = vmatpush.bf16.msra.mxu0 %v3998
    %5346 = vmatpush.bf16.msra.mxu0 %v3997
    %5347 = vmatpush.bf16.msra.mxu0 %v3996
    %5348 = vmatpush.bf16.msra.mxu0 %v3995
    %5349 = vmatpush.bf16.msra.mxu0 %v3994
    %5350 = vmatpush.bf16.msra.mxu0 %v3993
    %5351 = vmatmul.bf16.gmra.mxu0 %v1406
    %v5352 = vpop.f32.mrf.mxu0
    %v5353 = vadd.f32 %v5339, %v5352
    %v5354 = vpop.f32.mrf.mxu0
    %v5355 = vadd.f32 %v5341, %v5354
    %5356 = vdwg.mxu0
    %5357 = vmatpush.bf16.msra.mxu0 %v4008
    %5358 = vmatpush.bf16.msra.mxu0 %v4007
    %5359 = vmatpush.bf16.msra.mxu0 %v4006
    %5360 = vmatpush.bf16.msra.mxu0 %v4005
    %5361 = vmatpush.bf16.msra.mxu0 %v4004
    %5362 = vmatpush.bf16.msra.mxu0 %v4003
    %5363 = vmatpush.bf16.msra.mxu0 %v4002
    %5364 = vmatpush.bf16.msra.mxu0 %v4001
    %5365 = vmatmul.bf16.gmra.mxu0 %v1407
    %v5366 = vpop.f32.mrf.mxu0
    %v5367 = vadd.f32 %v5353, %v5366
    %v5368 = vpop.f32.mrf.mxu0
    %v5369 = vadd.f32 %v5355, %v5368
    %5370 = vdwg.mxu0
    %5371 = vmatpush.bf16.msra.mxu0 %v4016
    %5372 = vmatpush.bf16.msra.mxu0 %v4015
    %5373 = vmatpush.bf16.msra.mxu0 %v4014
    %5374 = vmatpush.bf16.msra.mxu0 %v4013
    %5375 = vmatpush.bf16.msra.mxu0 %v4012
    %5376 = vmatpush.bf16.msra.mxu0 %v4011
    %5377 = vmatpush.bf16.msra.mxu0 %v4010
    %5378 = vmatpush.bf16.msra.mxu0 %v4009
    %5379 = vmatmul.bf16.gmra.mxu0 %v1408
    %v5380 = vpop.f32.mrf.mxu0
    %v5381 = vadd.f32 %v5367, %v5380
    %v5382 = vpop.f32.mrf.mxu0
    %v5383 = vadd.f32 %v5369, %v5382
    %5384 = vdwg.mxu0
    %5385 = vmatpush.bf16.msra.mxu0 %v4024
    %5386 = vmatpush.bf16.msra.mxu0 %v4023
    %5387 = vmatpush.bf16.msra.mxu0 %v4022
    %5388 = vmatpush.bf16.msra.mxu0 %v4021
    %5389 = vmatpush.bf16.msra.mxu0 %v4020
    %5390 = vmatpush.bf16.msra.mxu0 %v4019
    %5391 = vmatpush.bf16.msra.mxu0 %v4018
    %5392 = vmatpush.bf16.msra.mxu0 %v4017
    %5393 = vmatmul.bf16.gmra.mxu0 %v1409
    %v5394 = vpop.f32.mrf.mxu0
    %v5395 = vadd.f32 %v5381, %v5394
    %v5396 = vpop.f32.mrf.mxu0
    %v5397 = vadd.f32 %v5383, %v5396
    %5398 = vdwg.mxu0
    %5399 = vmatpush.bf16.msra.mxu0 %v4032
    %5400 = vmatpush.bf16.msra.mxu0 %v4031
    %5401 = vmatpush.bf16.msra.mxu0 %v4030
    %5402 = vmatpush.bf16.msra.mxu0 %v4029
    %5403 = vmatpush.bf16.msra.mxu0 %v4028
    %5404 = vmatpush.bf16.msra.mxu0 %v4027
    %5405 = vmatpush.bf16.msra.mxu0 %v4026
    %5406 = vmatpush.bf16.msra.mxu0 %v4025
    %5407 = vmatmul.bf16.gmra.mxu0 %v1410
    %v5408 = vpop.f32.mrf.mxu0
    %v5409 = vadd.f32 %v5395, %v5408
    %v5410 = vpop.f32.mrf.mxu0
    %v5411 = vadd.f32 %v5397, %v5410
    %5412 = vdwg.mxu0
    %5413 = vmatpush.bf16.msra.mxu0 %v4040
    %5414 = vmatpush.bf16.msra.mxu0 %v4039
    %5415 = vmatpush.bf16.msra.mxu0 %v4038
    %5416 = vmatpush.bf16.msra.mxu0 %v4037
    %5417 = vmatpush.bf16.msra.mxu0 %v4036
    %5418 = vmatpush.bf16.msra.mxu0 %v4035
    %5419 = vmatpush.bf16.msra.mxu0 %v4034
    %5420 = vmatpush.bf16.msra.mxu0 %v4033
    %5421 = vmatmul.bf16.gmra.mxu0 %v1411
    %v5422 = vpop.f32.mrf.mxu0
    %v5423 = vadd.f32 %v5409, %v5422
    %v5424 = vpop.f32.mrf.mxu0
    %v5425 = vadd.f32 %v5411, %v5424
    %5426 = vdwg.mxu0
    %5427 = vmatpush.bf16.msra.mxu0 %v4048
    %5428 = vmatpush.bf16.msra.mxu0 %v4047
    %5429 = vmatpush.bf16.msra.mxu0 %v4046
    %5430 = vmatpush.bf16.msra.mxu0 %v4045
    %5431 = vmatpush.bf16.msra.mxu0 %v4044
    %5432 = vmatpush.bf16.msra.mxu0 %v4043
    %5433 = vmatpush.bf16.msra.mxu0 %v4042
    %5434 = vmatpush.bf16.msra.mxu0 %v4041
    %5435 = vmatmul.bf16.gmra.mxu0 %v1412
    %v5436 = vpop.f32.mrf.mxu0
    %v5437 = vadd.f32 %v5423, %v5436
    %v5438 = vpop.f32.mrf.mxu0
    %v5439 = vadd.f32 %v5425, %v5438
    %5440 = vdwg.mxu0
    %5441 = vmatpush.bf16.msra.mxu0 %v4056
    %5442 = vmatpush.bf16.msra.mxu0 %v4055
    %5443 = vmatpush.bf16.msra.mxu0 %v4054
    %5444 = vmatpush.bf16.msra.mxu0 %v4053
    %5445 = vmatpush.bf16.msra.mxu0 %v4052
    %5446 = vmatpush.bf16.msra.mxu0 %v4051
    %5447 = vmatpush.bf16.msra.mxu0 %v4050
    %5448 = vmatpush.bf16.msra.mxu0 %v4049
    %5449 = vmatmul.bf16.gmra.mxu0 %v1413
    %v5450 = vpop.f32.mrf.mxu0
    %v5451 = vadd.f32 %v5437, %v5450
    %v5452 = vpop.f32.mrf.mxu0
    %v5453 = vadd.f32 %v5439, %v5452
    %5454 = vdwg.mxu0
    %5455 = vmatpush.bf16.msra.mxu0 %v4064
    %5456 = vmatpush.bf16.msra.mxu0 %v4063
    %5457 = vmatpush.bf16.msra.mxu0 %v4062
    %5458 = vmatpush.bf16.msra.mxu0 %v4061
    %5459 = vmatpush.bf16.msra.mxu0 %v4060
    %5460 = vmatpush.bf16.msra.mxu0 %v4059
    %5461 = vmatpush.bf16.msra.mxu0 %v4058
    %5462 = vmatpush.bf16.msra.mxu0 %v4057
    %5463 = vmatmul.bf16.gmra.mxu0 %v1414
    %v5464 = vpop.f32.mrf.mxu0
    %v5465 = vadd.f32 %v5451, %v5464
    %v5466 = vpop.f32.mrf.mxu0
    %v5467 = vadd.f32 %v5453, %v5466
    %5468 = vdwg.mxu0
    %5469 = vmatpush.bf16.msra.mxu0 %v4072
    %5470 = vmatpush.bf16.msra.mxu0 %v4071
    %5471 = vmatpush.bf16.msra.mxu0 %v4070
    %5472 = vmatpush.bf16.msra.mxu0 %v4069
    %5473 = vmatpush.bf16.msra.mxu0 %v4068
    %5474 = vmatpush.bf16.msra.mxu0 %v4067
    %5475 = vmatpush.bf16.msra.mxu0 %v4066
    %5476 = vmatpush.bf16.msra.mxu0 %v4065
    %5477 = vmatmul.bf16.gmra.mxu0 %v1415
    %v5478 = vpop.f32.mrf.mxu0
    %v5479 = vadd.f32 %v5465, %v5478
    %v5480 = vpop.f32.mrf.mxu0
    %v5481 = vadd.f32 %v5467, %v5480
    %5482 = vdwg.mxu0
    %5483 = vmatpush.bf16.msra.mxu0 %v4080
    %5484 = vmatpush.bf16.msra.mxu0 %v4079
    %5485 = vmatpush.bf16.msra.mxu0 %v4078
    %5486 = vmatpush.bf16.msra.mxu0 %v4077
    %5487 = vmatpush.bf16.msra.mxu0 %v4076
    %5488 = vmatpush.bf16.msra.mxu0 %v4075
    %5489 = vmatpush.bf16.msra.mxu0 %v4074
    %5490 = vmatpush.bf16.msra.mxu0 %v4073
    %5491 = vmatmul.bf16.gmra.mxu0 %v1416
    %v5492 = vpop.f32.mrf.mxu0
    %v5493 = vadd.f32 %v5479, %v5492
    %v5494 = vpop.f32.mrf.mxu0
    %v5495 = vadd.f32 %v5481, %v5494
    %5496 = vdwg.mxu0
    %5497 = vmatpush.bf16.msra.mxu0 %v4088
    %5498 = vmatpush.bf16.msra.mxu0 %v4087
    %5499 = vmatpush.bf16.msra.mxu0 %v4086
    %5500 = vmatpush.bf16.msra.mxu0 %v4085
    %5501 = vmatpush.bf16.msra.mxu0 %v4084
    %5502 = vmatpush.bf16.msra.mxu0 %v4083
    %5503 = vmatpush.bf16.msra.mxu0 %v4082
    %5504 = vmatpush.bf16.msra.mxu0 %v4081
    %5505 = vmatmul.bf16.gmra.mxu0 %v1417
    %v5506 = vpop.f32.mrf.mxu0
    %v5507 = vadd.f32 %v5493, %v5506
    %v5508 = vpop.f32.mrf.mxu0
    %v5509 = vadd.f32 %v5495, %v5508
    %5510 = vdwg.mxu0
    %5511 = vmatpush.bf16.msra.mxu0 %v4096
    %5512 = vmatpush.bf16.msra.mxu0 %v4095
    %5513 = vmatpush.bf16.msra.mxu0 %v4094
    %5514 = vmatpush.bf16.msra.mxu0 %v4093
    %5515 = vmatpush.bf16.msra.mxu0 %v4092
    %5516 = vmatpush.bf16.msra.mxu0 %v4091
    %5517 = vmatpush.bf16.msra.mxu0 %v4090
    %5518 = vmatpush.bf16.msra.mxu0 %v4089
    %5519 = vmatmul.bf16.gmra.mxu0 %v1418
    %v5520 = vpop.f32.mrf.mxu0
    %v5521 = vadd.f32 %v5507, %v5520
    %v5522 = vpop.f32.mrf.mxu0
    %v5523 = vadd.f32 %v5509, %v5522
    %5524 = vdwg.mxu0
    %5525 = vmatpush.bf16.msra.mxu0 %v4104
    %5526 = vmatpush.bf16.msra.mxu0 %v4103
    %5527 = vmatpush.bf16.msra.mxu0 %v4102
    %5528 = vmatpush.bf16.msra.mxu0 %v4101
    %5529 = vmatpush.bf16.msra.mxu0 %v4100
    %5530 = vmatpush.bf16.msra.mxu0 %v4099
    %5531 = vmatpush.bf16.msra.mxu0 %v4098
    %5532 = vmatpush.bf16.msra.mxu0 %v4097
    %5533 = vmatmul.bf16.gmra.mxu0 %v1419
    %v5534 = vpop.f32.mrf.mxu0
    %v5535 = vadd.f32 %v5521, %v5534
    %v5536 = vpop.f32.mrf.mxu0
    %v5537 = vadd.f32 %v5523, %v5536
    %5538 = vdwg.mxu0
    %5539 = vmatpush.bf16.msra.mxu0 %v4112
    %5540 = vmatpush.bf16.msra.mxu0 %v4111
    %5541 = vmatpush.bf16.msra.mxu0 %v4110
    %5542 = vmatpush.bf16.msra.mxu0 %v4109
    %5543 = vmatpush.bf16.msra.mxu0 %v4108
    %5544 = vmatpush.bf16.msra.mxu0 %v4107
    %5545 = vmatpush.bf16.msra.mxu0 %v4106
    %5546 = vmatpush.bf16.msra.mxu0 %v4105
    %5547 = vmatmul.bf16.gmra.mxu0 %v1420
    %v5548 = vpop.f32.mrf.mxu0
    %v5549 = vadd.f32 %v5535, %v5548
    %v5550 = vpop.f32.mrf.mxu0
    %v5551 = vadd.f32 %v5537, %v5550
    %5552 = vdwg.mxu0
    %5553 = vmatpush.bf16.msra.mxu0 %v4120
    %5554 = vmatpush.bf16.msra.mxu0 %v4119
    %5555 = vmatpush.bf16.msra.mxu0 %v4118
    %5556 = vmatpush.bf16.msra.mxu0 %v4117
    %5557 = vmatpush.bf16.msra.mxu0 %v4116
    %5558 = vmatpush.bf16.msra.mxu0 %v4115
    %5559 = vmatpush.bf16.msra.mxu0 %v4114
    %5560 = vmatpush.bf16.msra.mxu0 %v4113
    %5561 = vmatmul.bf16.gmra.mxu0 %v1421
    %v5562 = vpop.f32.mrf.mxu0
    %v5563 = vadd.f32 %v5549, %v5562
    %v5564 = vpop.f32.mrf.mxu0
    %v5565 = vadd.f32 %v5551, %v5564
    %5566 = vdwg.mxu0
    %5567 = vmatpush.bf16.msra.mxu0 %v4128
    %5568 = vmatpush.bf16.msra.mxu0 %v4127
    %5569 = vmatpush.bf16.msra.mxu0 %v4126
    %5570 = vmatpush.bf16.msra.mxu0 %v4125
    %5571 = vmatpush.bf16.msra.mxu0 %v4124
    %5572 = vmatpush.bf16.msra.mxu0 %v4123
    %5573 = vmatpush.bf16.msra.mxu0 %v4122
    %5574 = vmatpush.bf16.msra.mxu0 %v4121
    %5575 = vmatmul.bf16.gmra.mxu0 %v1422
    %v5576 = vpop.f32.mrf.mxu0
    %v5577 = vadd.f32 %v5563, %v5576
    %v5578 = vpop.f32.mrf.mxu0
    %v5579 = vadd.f32 %v5565, %v5578
    %5580 = vdwg.mxu0
    %v5581 = vmax.f32 %v5577, 0.0
    %v5582 = vmax.f32 %v5579, 0.0
    %v5583 = vld [vmem:[%s3] sm:$0xff]
    %v5584 = vld [vmem:[%s3 + $0x8] sm:$0xff]
    %v5585 = vld [vmem:[%s3 + $0x10] sm:$0xff]
    %v5586 = vld [vmem:[%s3 + $0x18] sm:$0xff]
    %v5587 = vld [vmem:[%s4] sm:$0x1]
    %v5589 = vperm.slane %v5587, 0
    %vm5591 = vcmask 261120
    %v5593 = vsel %vm5591, %v5581, 0
    %v5596 = vsel %vm5591, %v5582, 0
    %5598 = vmatpush.msra.mxu0 0.0
    %5599 = vmatpush.msra.mxu0 0.0
    %5600 = vmatpush.msra.mxu0 0.0
    %5601 = vmatpush.msra.mxu0 0.0
    %5602 = vmatpush.msra.mxu0 0.0
    %5603 = vmatpush.msra.mxu0 0.0
    %5604 = vmatpush.msra.mxu0 0.0
    %5605 = vmatpush.msra.mxu0 0.0
    %5606 = vmatpush.msra.mxu0 0.0
    %5607 = vmatpush.msra.mxu0 0.0
    %5608 = vmatpush.msra.mxu0 0.0
    %5609 = vmatpush.msra.mxu0 0.0
    %5610 = vmatpush.msra.mxu0 %v5586
    %5611 = vmatpush.msra.mxu0 %v5585
    %5612 = vmatpush.msra.mxu0 %v5584
    %5613 = vmatpush.msra.mxu0 %v5583
    %5614 = vmatmul.f32.gmra.mxu0 %v5593
    %v5615 = vpop.f32.mrf.mxu0
    %v5616 = vadd.f32 %v5589, %v5615
    %5617 = vmatmul.f32.gmra.mxu0 %v5596
    %v5618 = vpop.f32.mrf.mxu0
    %v5619 = vadd.f32 %v5589, %v5618
    %5620 = vdwg.mxu0
    %v5622 = vrot.slane %v5616, 1
    %v5624 = vmin.f32 %v5616, %v5622
    %v5625 = vmax.f32 %v5616, %v5622
    %v5627 = vrot.slane %v5624, 2
    %v5629 = vmin.f32 %v5625, %v5627
    %v5630 = vmax.f32 %v5625, %v5627
    %v5631 = vmin.f32 %v5624, %v5629
    %v5632 = vmax.f32 %v5624, %v5629
    %v5634 = vrot.slane %v5629, 2
    %v5636 = vmin.f32 %v5630, %v5634
    %v5637 = vmax.f32 %v5630, %v5634
    %v5639 = vrot.slane %v5625, 2
    %v5641 = vmin.f32 %v5630, %v5639
    %v5642 = vmax.f32 %v5630, %v5639
    %v5643 = vmin.f32 %v5632, %v5636
    %v5644 = vmax.f32 %v5632, %v5636
    %v5646 = vrot.slane %v5636, 2
    %v5648 = vmin.f32 %v5637, %v5646
    %v5649 = vmax.f32 %v5637, %v5646
    %v5651 = vrot.slane %v5641, 2
    %v5653 = vmin.f32 %v5637, %v5651
    %v5654 = vmax.f32 %v5637, %v5651
    %v5655 = vmin.f32 %v5631, %v5643
    %v5656 = vmax.f32 %v5631, %v5643
    %v5657 = vmin.f32 %v5644, %v5648
    %v5658 = vmax.f32 %v5644, %v5648
    %v5660 = vrot.slane %v5653, 2
    %v5662 = vmin.f32 %v5649, %v5660
    %v5663 = vmax.f32 %v5649, %v5660
    %v5665 = vrot.slane %v5642, 2
    %v5667 = vmin.f32 %v5654, %v5665
    %v5668 = vmax.f32 %v5654, %v5665
    %v5669 = vmin.f32 %v5656, %v5657
    %v5670 = vmax.f32 %v5656, %v5657
    %v5671 = vmin.f32 %v5658, %v5662
    %v5672 = vmax.f32 %v5658, %v5662
    %v5674 = vrot.slane %v5667, 2
    %v5676 = vmin.f32 %v5663, %v5674
    %v5677 = vmax.f32 %v5663, %v5674
    %v5678 = vmin.f32 %v5655, %v5669
    %v5679 = vmax.f32 %v5655, %v5669
    %v5680 = vmin.f32 %v5670, %v5671
    %v5681 = vmax.f32 %v5670, %v5671
    %v5682 = vmin.f32 %v5672, %v5676
    %v5683 = vmax.f32 %v5672, %v5676
    %v5685 = vrot.slane %v5668, 2
    %v5687 = vmin.f32 %v5677, %v5685
    %v5688 = vmax.f32 %v5677, %v5685
    %v5689 = vmin.f32 %v5679, %v5680
    %v5690 = vmax.f32 %v5679, %v5680
    %v5691 = vmin.f32 %v5681, %v5682
    %v5692 = vmax.f32 %v5681, %v5682
    %v5693 = vmin.f32 %v5683, %v5687
    %v5694 = vmax.f32 %v5683, %v5687
    %v5695 = vmul.f32 %v5689, 0.25
    %v5696 = vmul.f32 %v5690, 0.75
    %v5697 = vadd.f32 %v5695, %v5696
    %v5698 = vmul.f32 %v5691, 0.5
    %v5699 = vmul.f32 %v5692, 0.5
    %v5700 = vadd.f32 %v5698, %v5699
    %v5701 = vmul.f32 %v5693, 0.75
    %v5702 = vmul.f32 %v5694, 0.25
    %v5703 = vadd.f32 %v5701, %v5702
    %5705 = vrot.lane.b32.xlu0 %v5697, 32
    %v5706 = vpop.permute.xlu0 %5705
    %5709 = vrot.lane.b32.xlu0 %v5700, 64
    %v5710 = vpop.permute.xlu0 %5709
    %5713 = vrot.lane.b32.xlu0 %v5703, 96
    %v5714 = vpop.permute.xlu0 %5713
    %v5716 = vsel %vm5591, %v5678, %v5706
    %vm5717 = vcmask 523264
    %v5718 = vsel %vm5717, %v5716, %v5710
    %vm5719 = vcmask 785408
    %v5720 = vsel %vm5719, %v5718, %v5714
    %v5722 = vrot.slane %v5619, 1
    %v5724 = vmin.f32 %v5619, %v5722
    %v5725 = vmax.f32 %v5619, %v5722
    %v5727 = vrot.slane %v5724, 2
    %v5729 = vmin.f32 %v5725, %v5727
    %v5730 = vmax.f32 %v5725, %v5727
    %v5731 = vmin.f32 %v5724, %v5729
    %v5732 = vmax.f32 %v5724, %v5729
    %v5734 = vrot.slane %v5729, 2
    %v5736 = vmin.f32 %v5730, %v5734
    %v5737 = vmax.f32 %v5730, %v5734
    %v5739 = vrot.slane %v5725, 2
    %v5741 = vmin.f32 %v5730, %v5739
    %v5742 = vmax.f32 %v5730, %v5739
    %v5743 = vmin.f32 %v5732, %v5736
    %v5744 = vmax.f32 %v5732, %v5736
    %v5746 = vrot.slane %v5736, 2
    %v5748 = vmin.f32 %v5737, %v5746
    %v5749 = vmax.f32 %v5737, %v5746
    %v5751 = vrot.slane %v5741, 2
    %v5753 = vmin.f32 %v5737, %v5751
    %v5754 = vmax.f32 %v5737, %v5751
    %v5755 = vmin.f32 %v5731, %v5743
    %v5756 = vmax.f32 %v5731, %v5743
    %v5757 = vmin.f32 %v5744, %v5748
    %v5758 = vmax.f32 %v5744, %v5748
    %v5760 = vrot.slane %v5753, 2
    %v5762 = vmin.f32 %v5749, %v5760
    %v5763 = vmax.f32 %v5749, %v5760
    %v5765 = vrot.slane %v5742, 2
    %v5767 = vmin.f32 %v5754, %v5765
    %v5768 = vmax.f32 %v5754, %v5765
    %v5769 = vmin.f32 %v5756, %v5757
    %v5770 = vmax.f32 %v5756, %v5757
    %v5771 = vmin.f32 %v5758, %v5762
    %v5772 = vmax.f32 %v5758, %v5762
    %v5774 = vrot.slane %v5767, 2
    %v5776 = vmin.f32 %v5763, %v5774
    %v5777 = vmax.f32 %v5763, %v5774
    %v5778 = vmin.f32 %v5755, %v5769
    %v5779 = vmax.f32 %v5755, %v5769
    %v5780 = vmin.f32 %v5770, %v5771
    %v5781 = vmax.f32 %v5770, %v5771
    %v5782 = vmin.f32 %v5772, %v5776
    %v5783 = vmax.f32 %v5772, %v5776
    %v5785 = vrot.slane %v5768, 2
    %v5787 = vmin.f32 %v5777, %v5785
    %v5788 = vmax.f32 %v5777, %v5785
    %v5789 = vmin.f32 %v5779, %v5780
    %v5790 = vmax.f32 %v5779, %v5780
    %v5791 = vmin.f32 %v5781, %v5782
    %v5792 = vmax.f32 %v5781, %v5782
    %v5793 = vmin.f32 %v5783, %v5787
    %v5794 = vmax.f32 %v5783, %v5787
    %v5795 = vmul.f32 %v5789, 0.25
    %v5796 = vmul.f32 %v5790, 0.75
    %v5797 = vadd.f32 %v5795, %v5796
    %v5798 = vmul.f32 %v5791, 0.5
    %v5799 = vmul.f32 %v5792, 0.5
    %v5800 = vadd.f32 %v5798, %v5799
    %v5801 = vmul.f32 %v5793, 0.75
    %v5802 = vmul.f32 %v5794, 0.25
    %v5803 = vadd.f32 %v5801, %v5802
    %5805 = vrot.lane.b32.xlu0 %v5797, 32
    %v5806 = vpop.permute.xlu0 %5805
    %5809 = vrot.lane.b32.xlu0 %v5800, 64
    %v5810 = vpop.permute.xlu0 %5809
    %5813 = vrot.lane.b32.xlu0 %v5803, 96
    %v5814 = vpop.permute.xlu0 %5813
    %v5816 = vsel %vm5591, %v5778, %v5806
    %v5817 = vsel %vm5717, %v5816, %v5810
    %v5818 = vsel %vm5719, %v5817, %v5814
    %v5821 = vrot.slane %v5818, 7
    %v5822 = vrot.slane %v5788, 7
    %vm5825 = vcmask 1040384
    %v5826 = vsel %vm5825, %v5720, %v5821
    %v5827 = vsel %vm5825, %v5688, %v5822
    %v5828 = vld [vmem:[%s5] sm:$0xff]
    %v5829 = vld [vmem:[%s5 + $0x8] sm:$0xff]
    %v5830 = vld [vmem:[%s5 + $0x10] sm:$0xff]
    %v5831 = vld [vmem:[%s5 + $0x18] sm:$0xff]
    %v5832 = vld [vmem:[%s5 + $0x20] sm:$0xff]
    %v5833 = vld [vmem:[%s5 + $0x28] sm:$0xff]
    %v5834 = vld [vmem:[%s5 + $0x30] sm:$0xff]
    %v5835 = vld [vmem:[%s5 + $0x38] sm:$0xff]
    %v5836 = vld [vmem:[%s5 + $0x40] sm:$0xff]
    %v5837 = vld [vmem:[%s5 + $0x48] sm:$0xff]
    %v5838 = vld [vmem:[%s5 + $0x50] sm:$0xff]
    %v5839 = vld [vmem:[%s5 + $0x58] sm:$0xff]
    %v5840 = vld [vmem:[%s5 + $0x60] sm:$0xff]
    %v5841 = vld [vmem:[%s5 + $0x68] sm:$0xff]
    %v5842 = vld [vmem:[%s5 + $0x70] sm:$0xff]
    %v5843 = vld [vmem:[%s5 + $0x78] sm:$0xff]
    %v5844 = vld [vmem:[%s5 + $0x80] sm:$0xff]
    %v5845 = vld [vmem:[%s5 + $0x88] sm:$0xff]
    %v5846 = vld [vmem:[%s5 + $0x90] sm:$0xff]
    %v5847 = vld [vmem:[%s5 + $0x98] sm:$0xff]
    %v5848 = vld [vmem:[%s6] sm:$0x1]
    %v5850 = vperm.slane %v5848, 0
    %v5853 = vsel %vm5591, %v5827, 0
    %5855 = vmatpush.msra.mxu0 %v5843
    %5856 = vmatpush.msra.mxu0 %v5842
    %5857 = vmatpush.msra.mxu0 %v5841
    %5858 = vmatpush.msra.mxu0 %v5840
    %5859 = vmatpush.msra.mxu0 %v5839
    %5860 = vmatpush.msra.mxu0 %v5838
    %5861 = vmatpush.msra.mxu0 %v5837
    %5862 = vmatpush.msra.mxu0 %v5836
    %5863 = vmatpush.msra.mxu0 %v5835
    %5864 = vmatpush.msra.mxu0 %v5834
    %5865 = vmatpush.msra.mxu0 %v5833
    %5866 = vmatpush.msra.mxu0 %v5832
    %5867 = vmatpush.msra.mxu0 %v5831
    %5868 = vmatpush.msra.mxu0 %v5830
    %5869 = vmatpush.msra.mxu0 %v5829
    %5870 = vmatpush.msra.mxu0 %v5828
    %5871 = vmatmul.f32.gmra.mxu0 %v5826
    %v5872 = vpop.f32.mrf.mxu0
    %v5873 = vadd.f32 %v5850, %v5872
    %5874 = vdwg.mxu0
    %5875 = vmatpush.msra.mxu0 0.0
    %5876 = vmatpush.msra.mxu0 0.0
    %5877 = vmatpush.msra.mxu0 0.0
    %5878 = vmatpush.msra.mxu0 0.0
    %5879 = vmatpush.msra.mxu0 0.0
    %5880 = vmatpush.msra.mxu0 0.0
    %5881 = vmatpush.msra.mxu0 0.0
    %5882 = vmatpush.msra.mxu0 0.0
    %5883 = vmatpush.msra.mxu0 0.0
    %5884 = vmatpush.msra.mxu0 0.0
    %5885 = vmatpush.msra.mxu0 0.0
    %5886 = vmatpush.msra.mxu0 0.0
    %5887 = vmatpush.msra.mxu0 %v5847
    %5888 = vmatpush.msra.mxu0 %v5846
    %5889 = vmatpush.msra.mxu0 %v5845
    %5890 = vmatpush.msra.mxu0 %v5844
    %5891 = vmatmul.f32.gmra.mxu0 %v5853
    %v5892 = vpop.f32.mrf.mxu0
    %v5893 = vadd.f32 %v5873, %v5892
    %5894 = vdwg.mxu0
    %v5895 = vmax.f32 %v5893, 0.0
    %v5896 = vld [vmem:[%s7] sm:$0xff]
    %v5897 = vld [vmem:[%s7 + $0x8] sm:$0xff]
    %v5898 = vld [vmem:[%s7 + $0x10] sm:$0xff]
    %v5899 = vld [vmem:[%s7 + $0x18] sm:$0xff]
    %v5900 = vld [vmem:[%s8] sm:$0x1]
    %v5902 = vperm.slane %v5900, 0
    %v5905 = vsel %vm5591, %v5895, 0
    %5907 = vmatpush.msra.mxu0 0.0
    %5908 = vmatpush.msra.mxu0 0.0
    %5909 = vmatpush.msra.mxu0 0.0
    %5910 = vmatpush.msra.mxu0 0.0
    %5911 = vmatpush.msra.mxu0 0.0
    %5912 = vmatpush.msra.mxu0 0.0
    %5913 = vmatpush.msra.mxu0 0.0
    %5914 = vmatpush.msra.mxu0 0.0
    %5915 = vmatpush.msra.mxu0 0.0
    %5916 = vmatpush.msra.mxu0 0.0
    %5917 = vmatpush.msra.mxu0 0.0
    %5918 = vmatpush.msra.mxu0 0.0
    %5919 = vmatpush.msra.mxu0 %v5899
    %5920 = vmatpush.msra.mxu0 %v5898
    %5921 = vmatpush.msra.mxu0 %v5897
    %5922 = vmatpush.msra.mxu0 %v5896
    %5923 = vmatmul.f32.gmra.mxu0 %v5905
    %v5924 = vpop.f32.mrf.mxu0
    %v5925 = vadd.f32 %v5902, %v5924
    %5926 = vdwg.mxu0
    %v5927 = vtanh.pop %v5925
    %v5928 = vmul.f32 %v5927, 8.0
    %vm5929 = vcmask 9216
    %5930 = vst.msk [vmem:[#allocation2] sm:$0x3] %vm5929, %v5928
    // Predicated region
    $region38: #{_lambda_.1} parent=1 // pred_check
      _
    $region39: #{_lambda_.1} parent=1 // pred_check_branch
      %5932 = sbr.rel (0) target = $region41
    $region40: #{_lambda_.1} parent=1 // pred_region
      %5934 = vsyncadd [#allocation3], 0
      %s5936 = sshll.u32 [#allocation2], 4
      %s5937 = int_to_ptr.vmem [resolvable:$true] %s5936
      %s5938 = sshll.u32 %s9, 4
      %s5939 = int_to_ptr.hbm [resolvable:$true] %s5938
      %5941 = dma.vmem_to_hbm [thread:$0]  %s5937, 32, %s5939, [#allocation3]
    $region41: #{_lambda_.1} parent=1 // pred_fallthru
      _
    // Predicated region
    $region42: #{_lambda_.1} parent=1 // pred_check
      _
    $region43: #{_lambda_.1} parent=1 // pred_check_branch
      %5943 = sbr.rel (0) target = $region45
    $region44: #{_lambda_.1} parent=1 // pred_region
      %5945 = dma.done [#allocation3], 32
    $region45: #{_lambda_.1} parent=1 // pred_fallthru
      _
    %5946 = vsyncpa [#allocation3], 1

</llo_original>
